<compile_context>
chip_gen: v5e
topology: v5e:2x2
jax: 0.10.0
libtpu: 0.0.40
codegen_flags: <defaults>
</compile_context>

<pallas_src>
import numpy as np
import jax
import jax.numpy as jnp
from jax.experimental import pallas as pl
from jax.experimental.pallas import tpu as pltpu

LANE = 128
SUBLANE = 8


def _round_up(n, m):
    return ((n + m - 1) // m) * m


# ----------------------------- Kernel A: LSTM recurrence ---------------------

def make_lstm_kernel(num_layers: int, T1: int, Hp: int):
    """Whole-sequence multi-layer LSTM; emits top-layer hidden states (bf16)."""

    def kernel(len_ref, x_ref, *refs):
        # refs = [w_ih_0..L-1, w_hh_0..L-1, b_0..L-1, h_out_ref]
        L = num_layers
        w_ih_refs = refs[0:L]
        w_hh_refs = refs[L:2 * L]
        b_refs = refs[2 * L:3 * L]
        h_out_ref = refs[3 * L]

        # Hoist all loop-invariant loads out of the time loop.
        w_ih = [w_ih_refs[l][...] for l in range(L)]   # bf16 [in_p, 4*Hp]
        w_hh = [w_hh_refs[l][...] for l in range(L)]   # bf16 [Hp, 4*Hp]
        bias = [b_refs[l][...] for l in range(L)]      # f32  [1, 4*Hp]
        lens = len_ref[...]                            # i32  [Bp, 1]

        Bp = lens.shape[0]
        Ep = x_ref.shape[-1]

        # Layer-0 input projection for ALL timesteps in one big MXU matmul
        # (independent of the recurrence). [T1*Bp, Ep] x [Ep, 4Hp] -> f32.
        x_all = x_ref[...]                             # bf16 [T1, Bp, Ep]
        x_proj = jnp.dot(x_all.reshape(T1 * Bp, Ep), w_ih[0],
                         preferred_element_type=jnp.float32)
        x_proj = x_proj.reshape(T1, Bp, 4 * Hp) + bias[0]   # f32

        h = [jnp.zeros((Bp, Hp), jnp.float32) for _ in range(L)]
        c = [jnp.zeros((Bp, Hp), jnp.float32) for _ in range(L)]

        def cell(gates, c_prev, mask):
            # Hp is a multiple of 128 -> lane-aligned gate slices.
            i_g = jax.nn.sigmoid(gates[:, 0 * Hp:1 * Hp])
            f_g = jax.nn.sigmoid(gates[:, 1 * Hp:2 * Hp])
            g_g = jnp.tanh(gates[:, 2 * Hp:3 * Hp])
            o_g = jax.nn.sigmoid(gates[:, 3 * Hp:4 * Hp])
            c_new = f_g * c_prev + i_g * g_g
            h_new = o_g * jnp.tanh(c_new)
            return h_new, c_new

        # T1 is small and static -> fully unrolled time loop.
        for t in range(T1):
            mask = lens > t                            # [Bp, 1] bool
            # ---- layer 0: recurrent matmul only (input part precomputed) ----
            gates0 = x_proj[t] + jnp.dot(h[0].astype(jnp.bfloat16), w_hh[0],
                                         preferred_element_type=jnp.float32)
            h_new, c_new = cell(gates0, c[0], mask)
            c[0] = jnp.where(mask, c_new, c[0])
            h[0] = jnp.where(mask, h_new, h[0])
            inp = h[0].astype(jnp.bfloat16)
            # ---- layers 1..L-1 ----
            for l in range(1, L):
                gates = (jnp.dot(inp, w_ih[l],
                                 preferred_element_type=jnp.float32)
                         + jnp.dot(h[l].astype(jnp.bfloat16), w_hh[l],
                                   preferred_element_type=jnp.float32)
                         + bias[l])                    # f32 [Bp, 4*Hp]
                h_new, c_new = cell(gates, c[l], mask)
                c[l] = jnp.where(mask, c_new, c[l])
                h[l] = jnp.where(mask, h_new, h[l])
                inp = h[l].astype(jnp.bfloat16)
            h_out_ref[t] = h[L - 1].astype(jnp.bfloat16)   # bf16 [Bp, Hp]

    return kernel


# ----------------------------- Kernel B: packed vocab projection -------------

def proj_kernel(x_ref, w_ref, b_ref, o_ref):
    o_ref[...] = (jnp.dot(x_ref[...], w_ref[...],
                          preferred_element_type=jnp.float32)
                  + b_ref[...])


# ----------------------------- wrapper ---------------------------------------

def _pad_gate_matrix(w, in_p, H, Hp):
    """[in, 4H] (gate order i,f,g,o) -> [in_p, 4*Hp] with per-gate padding."""
    in_dim = w.shape[0]
    w4 = w.reshape(in_dim, 4, H)
    w4 = jnp.pad(w4, ((0, in_p - in_dim), (0, 0), (0, Hp - H)))
    return w4.reshape(in_p, 4 * Hp)


def _pad_gate_bias(b, H, Hp):
    b4 = b.reshape(1, 4, H)
    b4 = jnp.pad(b4, ((0, 0), (0, 0), (0, Hp - H)))
    return b4.reshape(1, 4 * Hp)


def nic_decoder_forward(features, captions, lengths, params):
    """Full NIC_RNNDecoder.forward. Returns packed logits [sum(lengths), V]."""
    num_layers = len(params["w_hh"])
    B, T = captions.shape
    E = params["embed"].shape[1]
    H = params["w_hh"][0].shape[0]
    V = params["w_out"].shape[1]
    T1 = T + 1

    Bp = _round_up(B, SUBLANE)
    Ep = _round_up(E, LANE)
    Hp = _round_up(H, LANE)
    Vp = _round_up(V, LANE)

    # ---- glue: embedding gather, concat feature, time-major, pad, bf16 ----
    emb = jnp.take(params["embed"], captions, axis=0)            # [B, T, E]
    x = jnp.concatenate([features[:, None, :], emb], axis=1)     # [B, T1, E]
    x_tm = jnp.transpose(x, (1, 0, 2))                           # [T1, B, E]
    x_tm = jnp.pad(x_tm, ((0, 0), (0, Bp - B), (0, Ep - E)))
    x_tm = x_tm.astype(jnp.bfloat16)                             # [T1, Bp, Ep]

    len_np = np.asarray(lengths, dtype=np.int32)
    len_arr = jnp.asarray(
        np.pad(len_np, (0, Bp - B)), dtype=jnp.int32)[:, None]   # [Bp, 1]

    # ---- padded / bf16 weights (zero-padding preserves exact semantics) ----
    w_ih_p, w_hh_p, b_p = [], [], []
    for l in range(num_layers):
        in_p = Ep if l == 0 else Hp
        w_ih_p.append(_pad_gate_matrix(params["w_ih"][l], in_p, H, Hp)
                      .astype(jnp.bfloat16))
        w_hh_p.append(_pad_gate_matrix(params["w_hh"][l], Hp, H, Hp)
                      .astype(jnp.bfloat16))
        b_p.append(_pad_gate_bias(params["b"][l], H, Hp).astype(jnp.float32))
    w_out_p = jnp.pad(params["w_out"], ((0, Hp - H), (0, Vp - V))
                      ).astype(jnp.bfloat16)                     # [Hp, Vp]
    b_out_p = jnp.pad(params["b_out"], ((0, 0), (0, Vp - V))
                      ).astype(jnp.float32)                      # [1, Vp]

    # ---- Kernel A: single-invocation recurrence (no grid) ----
    vmem = pl.BlockSpec(memory_space=pltpu.MemorySpace.VMEM)
    n_in = 2 + 3 * num_layers
    h_top = pl.pallas_call(
        make_lstm_kernel(num_layers, T1, Hp),
        out_shape=jax.ShapeDtypeStruct((T1, Bp, Hp), jnp.bfloat16),
        in_specs=[vmem] * n_in,
        out_specs=vmem,
    )(len_arr, x_tm, *w_ih_p, *w_hh_p, *b_p)

    # ---- glue: pack_padded_sequence ordering (lengths are static ints) ----
    t_idx, b_idx = [], []
    for t in range(T1):
        for b in range(B):
            if len_np[b] > t:
                t_idx.append(t)
                b_idx.append(b)
    N = len(t_idx)
    t_idx = jnp.asarray(t_idx, jnp.int32)
    b_idx = jnp.asarray(b_idx, jnp.int32)
    h_packed = h_top[t_idx, b_idx]                               # bf16 [N, Hp]

    # ---- Kernel B: one batched projection over packed rows ----
    TM = 128 if N >= 128 else _round_up(N, SUBLANE)
    Np = _round_up(N, TM)
    # Lane-dense output tile: largest of 512/256/128 dividing Vp.
    TN = next(tn for tn in (512, 256, 128) if Vp % tn == 0)
    h_packed = jnp.pad(h_packed, ((0, Np - N), (0, 0)))

    logits = pl.pallas_call(
        proj_kernel,
        out_shape=jax.ShapeDtypeStruct((Np, Vp), jnp.float32),
        grid=(Np // TM, Vp // TN),
        in_specs=[
            pl.BlockSpec((TM, Hp), lambda i, j: (i, 0)),
            pl.BlockSpec((Hp, TN), lambda i, j: (0, j)),
            pl.BlockSpec((1, TN), lambda i, j: (0, j)),
        ],
        out_specs=pl.BlockSpec((TM, TN), lambda i, j: (i, j)),
        compiler_params=pltpu.CompilerParams(
            dimension_semantics=("parallel", "parallel")),
    )(h_packed, w_out_p, b_out_p)

    return logits[:N, :V]                                        # [sum(len), V]


# ----------------------------- pure-JAX reference (f32) ----------------------

def reference_forward(features, captions, lengths, params):
    num_layers = len(params["w_hh"])
    B, T = captions.shape
    H = params["w_hh"][0].shape[0]
    emb = jnp.take(params["embed"], captions, axis=0)
    x = jnp.concatenate([features[:, None, :], emb], axis=1)     # [B, T+1, E]
    T1 = T + 1
    lengths_np = np.asarray(lengths)
    len_arr = jnp.asarray(lengths, dtype=jnp.int32)[:, None]

    h = [jnp.zeros((B, H), jnp.float32) for _ in range(num_layers)]
    c = [jnp.zeros((B, H), jnp.float32) for _ in range(num_layers)]
    outs = []
    for t in range(T1):
        inp = x[:, t, :]
        mask = len_arr > t
        for l in range(num_layers):
            gates = (inp @ params["w_ih"][l] + h[l] @ params["w_hh"][l]
                     + params["b"][l])
            i_g = jax.nn.sigmoid(gates[:, 0 * H:1 * H])
            f_g = jax.nn.sigmoid(gates[:, 1 * H:2 * H])
            g_g = jnp.tanh(gates[:, 2 * H:3 * H])
            o_g = jax.nn.sigmoid(gates[:, 3 * H:4 * H])
            c_new = f_g * c[l] + i_g * g_g
            h_new = o_g * jnp.tanh(c_new)
            c[l] = jnp.where(mask, c_new, c[l])
            h[l] = jnp.where(mask, h_new, h[l])
            inp = h[l]
        outs.append(inp @ params["w_out"] + params["b_out"])
    packed = []
    for t in range(T1):
        for b in range(B):
            if lengths_np[b] > t:
                packed.append(outs[t][b])
    return jnp.stack(packed)


# ----------------------------- main ------------------------------------------

if __name__ == "__main__":
    B = 4            # batch size
    T = 7            # caption length           (sequence becomes T+1 = 8)
    E = 32           # dim_embedding
    H = 32           # dim_hidden
    V = 64           # vocab_size
    NUM_LAYERS = 2

    key = jax.random.PRNGKey(0)
    keys = jax.random.split(key, 4 + 4 * NUM_LAYERS)

    # Deterministic parameter init (same shapes as the PyTorch module).
    params = {"embed": 0.1 * jax.random.normal(keys[0], (V, E), jnp.float32),
              "w_ih": [], "w_hh": [], "b": []}
    kidx = 1
    for l in range(NUM_LAYERS):
        in_dim = E if l == 0 else H
        # Stored pre-transposed as [in_dim, 4H] (PyTorch keeps [4H, in_dim]).
        params["w_ih"].append(
            0.1 * jax.random.normal(keys[kidx], (in_dim, 4 * H), jnp.float32)); kidx += 1
        params["w_hh"].append(
            0.1 * jax.random.normal(keys[kidx], (H, 4 * H), jnp.float32)); kidx += 1
        b_ih = 0.1 * jax.random.normal(keys[kidx], (1, 4 * H), jnp.float32); kidx += 1
        b_hh = 0.1 * jax.random.normal(keys[kidx], (1, 4 * H), jnp.float32); kidx += 1
        params["b"].append(b_ih + b_hh)
    params["w_out"] = 0.1 * jax.random.normal(keys[kidx], (H, V), jnp.float32); kidx += 1
    params["b_out"] = 0.1 * jax.random.normal(keys[kidx], (1, V), jnp.float32); kidx += 1

    # Deterministic inputs.
    features = jax.random.normal(keys[kidx], (B, E), jnp.float32)
    captions = jax.random.randint(jax.random.PRNGKey(42), (B, T), 0, V, jnp.int32)
    lengths = [8, 6, 5, 3]   # sorted descending, as pack_padded_sequence requires

    out = nic_decoder_forward(features, captions, lengths, params)
    out = jax.block_until_ready(out)

    ref = reference_forward(features, captions, lengths, params)
    ref = jax.block_until_ready(ref)

    assert out.shape == (sum(lengths), V), out.shape
    # Matmul inputs are bf16 (f32 accumulation), so compare with a tolerance
    # appropriate for bf16 rounding propagated through the recurrence.
    np.testing.assert_allclose(np.asarray(out), np.asarray(ref),
                               rtol=5e-2, atol=5e-2)
    print("KERNEL_OK")
</pallas_src>

<mosaic_0001>
module attributes {stable_mosaic.version = 11 : i64} {
  func.func @kernel(%arg0: memref<8x1xi32, #tpu.memory_space<vmem>>, %arg1: memref<8x8x128xbf16, #tpu.memory_space<vmem>>, %arg2: memref<128x512xbf16, #tpu.memory_space<vmem>>, %arg3: memref<128x512xbf16, #tpu.memory_space<vmem>>, %arg4: memref<128x512xbf16, #tpu.memory_space<vmem>>, %arg5: memref<128x512xbf16, #tpu.memory_space<vmem>>, %arg6: memref<1x512xf32, #tpu.memory_space<vmem>>, %arg7: memref<1x512xf32, #tpu.memory_space<vmem>>, %arg8: memref<8x8x128xbf16, #tpu.memory_space<vmem>>) attributes {dimension_semantics = [], scalar_prefetch = 0 : i64, scratch_operands = 0 : i64, tpu.core_type = #tpu.core_type<tc>} {
    %c0 = arith.constant 0 : index
    %c0_0 = arith.constant 0 : index
    %0 = vector.load %arg2[%c0, %c0_0] : memref<128x512xbf16, #tpu.memory_space<vmem>>, vector<128x512xbf16>
    %c0_1 = arith.constant 0 : index
    %c0_2 = arith.constant 0 : index
    %1 = vector.load %arg3[%c0_1, %c0_2] : memref<128x512xbf16, #tpu.memory_space<vmem>>, vector<128x512xbf16>
    %c0_3 = arith.constant 0 : index
    %c0_4 = arith.constant 0 : index
    %2 = vector.load %arg4[%c0_3, %c0_4] : memref<128x512xbf16, #tpu.memory_space<vmem>>, vector<128x512xbf16>
    %c0_5 = arith.constant 0 : index
    %c0_6 = arith.constant 0 : index
    %3 = vector.load %arg5[%c0_5, %c0_6] : memref<128x512xbf16, #tpu.memory_space<vmem>>, vector<128x512xbf16>
    %c0_7 = arith.constant 0 : index
    %c0_8 = arith.constant 0 : index
    %4 = vector.load %arg6[%c0_7, %c0_8] : memref<1x512xf32, #tpu.memory_space<vmem>>, vector<1x512xf32>
    %c0_9 = arith.constant 0 : index
    %c0_10 = arith.constant 0 : index
    %5 = vector.load %arg7[%c0_9, %c0_10] : memref<1x512xf32, #tpu.memory_space<vmem>>, vector<1x512xf32>
    %c0_11 = arith.constant 0 : index
    %c0_12 = arith.constant 0 : index
    %6 = vector.load %arg0[%c0_11, %c0_12] : memref<8x1xi32, #tpu.memory_space<vmem>>, vector<8x1xi32>
    %c0_13 = arith.constant 0 : index
    %c0_14 = arith.constant 0 : index
    %c0_15 = arith.constant 0 : index
    %7 = vector.load %arg1[%c0_13, %c0_14, %c0_15] : memref<8x8x128xbf16, #tpu.memory_space<vmem>>, vector<8x8x128xbf16>
    %8 = vector.shape_cast %7 : vector<8x8x128xbf16> to vector<64x128xbf16>
    %cst = arith.constant dense<0.000000e+00> : vector<64x512xf32>
    %9 = tpu.matmul %8, %0, %cst {dimension_numbers = #tpu.dot_dimension_numbers<[1], [0], [0], [1], [0, 0, 1, 1], [], []>} : vector<64x128xbf16>, vector<128x512xbf16>, vector<64x512xf32> -> vector<64x512xf32>
    %10 = vector.shape_cast %9 : vector<64x512xf32> to vector<8x8x512xf32>
    %11 = vector.shape_cast %4 : vector<1x512xf32> to vector<1x1x512xf32>
    %12 = vector.broadcast %11 : vector<1x1x512xf32> to vector<8x8x512xf32>
    %13 = arith.addf %10, %12 : vector<8x8x512xf32>
    %cst_16 = arith.constant 0.000000e+00 : f32
    %14 = vector.broadcast %cst_16 : f32 to vector<8x128xf32>
    %cst_17 = arith.constant 0.000000e+00 : f32
    %15 = vector.broadcast %cst_17 : f32 to vector<8x128xf32>
    %cst_18 = arith.constant 0.000000e+00 : f32
    %16 = vector.broadcast %cst_18 : f32 to vector<8x128xf32>
    %cst_19 = arith.constant 0.000000e+00 : f32
    %17 = vector.broadcast %cst_19 : f32 to vector<8x128xf32>
    %c0_i32 = arith.constant 0 : i32
    %18 = vector.broadcast %c0_i32 : i32 to vector<8x1xi32>
    %19 = arith.cmpi sgt, %6, %18 : vector<8x1xi32>
    %20 = vector.extract_strided_slice %13 {offsets = [0, 0, 0], sizes = [1, 8, 512], strides = [1, 1, 1]} : vector<8x8x512xf32> to vector<1x8x512xf32>
    %21 = vector.shape_cast %20 : vector<1x8x512xf32> to vector<8x512xf32>
    %22 = arith.truncf %14 : vector<8x128xf32> to vector<8x128xbf16>
    %cst_20 = arith.constant dense<0.000000e+00> : vector<8x512xf32>
    %23 = tpu.matmul %22, %2, %cst_20 {dimension_numbers = #tpu.dot_dimension_numbers<[1], [0], [0], [1], [0, 0, 1, 1], [], []>} : vector<8x128xbf16>, vector<128x512xbf16>, vector<8x512xf32> -> vector<8x512xf32>
    %24 = arith.addf %21, %23 : vector<8x512xf32>
    %25 = vector.extract_strided_slice %24 {offsets = [0, 0], sizes = [8, 128], strides = [1, 1]} : vector<8x512xf32> to vector<8x128xf32>
    %26 = arith.negf %25 : vector<8x128xf32>
    %27 = math.exp %26 : vector<8x128xf32>
    %cst_21 = arith.constant 1.000000e+00 : f32
    %28 = vector.broadcast %cst_21 : f32 to vector<8x128xf32>
    %29 = arith.addf %28, %27 : vector<8x128xf32>
    %30 = arith.divf %28, %29 : vector<8x128xf32>
    %31 = vector.extract_strided_slice %24 {offsets = [0, 128], sizes = [8, 128], strides = [1, 1]} : vector<8x512xf32> to vector<8x128xf32>
    %32 = arith.negf %31 : vector<8x128xf32>
    %33 = math.exp %32 : vector<8x128xf32>
    %cst_22 = arith.constant 1.000000e+00 : f32
    %34 = vector.broadcast %cst_22 : f32 to vector<8x128xf32>
    %35 = arith.addf %34, %33 : vector<8x128xf32>
    %36 = arith.divf %34, %35 : vector<8x128xf32>
    %37 = vector.extract_strided_slice %24 {offsets = [0, 256], sizes = [8, 128], strides = [1, 1]} : vector<8x512xf32> to vector<8x128xf32>
    %38 = math.tanh %37 : vector<8x128xf32>
    %39 = vector.extract_strided_slice %24 {offsets = [0, 384], sizes = [8, 128], strides = [1, 1]} : vector<8x512xf32> to vector<8x128xf32>
    %40 = arith.negf %39 : vector<8x128xf32>
    %41 = math.exp %40 : vector<8x128xf32>
    %cst_23 = arith.constant 1.000000e+00 : f32
    %42 = vector.broadcast %cst_23 : f32 to vector<8x128xf32>
    %43 = arith.addf %42, %41 : vector<8x128xf32>
    %44 = arith.divf %42, %43 : vector<8x128xf32>
    %45 = arith.mulf %36, %16 : vector<8x128xf32>
    %46 = arith.mulf %30, %38 : vector<8x128xf32>
    %47 = arith.addf %45, %46 : vector<8x128xf32>
    %48 = math.tanh %47 : vector<8x128xf32>
    %49 = arith.mulf %44, %48 : vector<8x128xf32>
    %50 = vector.shape_cast %19 : vector<8x1xi1> to vector<8x1xi1>
    %51 = vector.broadcast %50 : vector<8x1xi1> to vector<8x128xi1>
    %52 = arith.select %51, %47, %16 : vector<8x128xi1>, vector<8x128xf32>
    %53 = vector.shape_cast %19 : vector<8x1xi1> to vector<8x1xi1>
    %54 = vector.broadcast %53 : vector<8x1xi1> to vector<8x128xi1>
    %55 = arith.select %54, %49, %14 : vector<8x128xi1>, vector<8x128xf32>
    %56 = arith.truncf %55 : vector<8x128xf32> to vector<8x128xbf16>
    %cst_24 = arith.constant dense<0.000000e+00> : vector<8x512xf32>
    %57 = tpu.matmul %56, %1, %cst_24 {dimension_numbers = #tpu.dot_dimension_numbers<[1], [0], [0], [1], [0, 0, 1, 1], [], []>} : vector<8x128xbf16>, vector<128x512xbf16>, vector<8x512xf32> -> vector<8x512xf32>
    %58 = arith.truncf %15 : vector<8x128xf32> to vector<8x128xbf16>
    %cst_25 = arith.constant dense<0.000000e+00> : vector<8x512xf32>
    %59 = tpu.matmul %58, %3, %cst_25 {dimension_numbers = #tpu.dot_dimension_numbers<[1], [0], [0], [1], [0, 0, 1, 1], [], []>} : vector<8x128xbf16>, vector<128x512xbf16>, vector<8x512xf32> -> vector<8x512xf32>
    %60 = arith.addf %57, %59 : vector<8x512xf32>
    %61 = vector.broadcast %5 : vector<1x512xf32> to vector<8x512xf32>
    %62 = arith.addf %60, %61 : vector<8x512xf32>
    %63 = vector.extract_strided_slice %62 {offsets = [0, 0], sizes = [8, 128], strides = [1, 1]} : vector<8x512xf32> to vector<8x128xf32>
    %64 = arith.negf %63 : vector<8x128xf32>
    %65 = math.exp %64 : vector<8x128xf32>
    %cst_26 = arith.constant 1.000000e+00 : f32
    %66 = vector.broadcast %cst_26 : f32 to vector<8x128xf32>
    %67 = arith.addf %66, %65 : vector<8x128xf32>
    %68 = arith.divf %66, %67 : vector<8x128xf32>
    %69 = vector.extract_strided_slice %62 {offsets = [0, 128], sizes = [8, 128], strides = [1, 1]} : vector<8x512xf32> to vector<8x128xf32>
    %70 = arith.negf %69 : vector<8x128xf32>
    %71 = math.exp %70 : vector<8x128xf32>
    %cst_27 = arith.constant 1.000000e+00 : f32
    %72 = vector.broadcast %cst_27 : f32 to vector<8x128xf32>
    %73 = arith.addf %72, %71 : vector<8x128xf32>
    %74 = arith.divf %72, %73 : vector<8x128xf32>
    %75 = vector.extract_strided_slice %62 {offsets = [0, 256], sizes = [8, 128], strides = [1, 1]} : vector<8x512xf32> to vector<8x128xf32>
    %76 = math.tanh %75 : vector<8x128xf32>
    %77 = vector.extract_strided_slice %62 {offsets = [0, 384], sizes = [8, 128], strides = [1, 1]} : vector<8x512xf32> to vector<8x128xf32>
    %78 = arith.negf %77 : vector<8x128xf32>
    %79 = math.exp %78 : vector<8x128xf32>
    %cst_28 = arith.constant 1.000000e+00 : f32
    %80 = vector.broadcast %cst_28 : f32 to vector<8x128xf32>
    %81 = arith.addf %80, %79 : vector<8x128xf32>
    %82 = arith.divf %80, %81 : vector<8x128xf32>
    %83 = arith.mulf %74, %17 : vector<8x128xf32>
    %84 = arith.mulf %68, %76 : vector<8x128xf32>
    %85 = arith.addf %83, %84 : vector<8x128xf32>
    %86 = math.tanh %85 : vector<8x128xf32>
    %87 = arith.mulf %82, %86 : vector<8x128xf32>
    %88 = vector.shape_cast %19 : vector<8x1xi1> to vector<8x1xi1>
    %89 = vector.broadcast %88 : vector<8x1xi1> to vector<8x128xi1>
    %90 = arith.select %89, %85, %17 : vector<8x128xi1>, vector<8x128xf32>
    %91 = vector.shape_cast %19 : vector<8x1xi1> to vector<8x1xi1>
    %92 = vector.broadcast %91 : vector<8x1xi1> to vector<8x128xi1>
    %93 = arith.select %92, %87, %15 : vector<8x128xi1>, vector<8x128xf32>
    %94 = arith.truncf %93 : vector<8x128xf32> to vector<8x128xbf16>
    %c0_29 = arith.constant 0 : index
    %c0_30 = arith.constant 0 : index
    %c0_31 = arith.constant 0 : index
    %95 = vector.load %arg8[%c0_29, %c0_30, %c0_31] : memref<8x8x128xbf16, #tpu.memory_space<vmem>>, vector<1x8x128xbf16>
    %96 = vector.shape_cast %95 : vector<1x8x128xbf16> to vector<8x128xbf16>
    %97 = vector.shape_cast %94 : vector<8x128xbf16> to vector<1x8x128xbf16>
    tpu.vector_store %arg8[%c0_29, %c0_30, %c0_31], %97 {strides = array<i32>} : memref<8x8x128xbf16, #tpu.memory_space<vmem>>, vector<1x8x128xbf16>,
    %c1_i32 = arith.constant 1 : i32
    %98 = vector.broadcast %c1_i32 : i32 to vector<8x1xi32>
    %99 = arith.cmpi sgt, %6, %98 : vector<8x1xi32>
    %100 = vector.extract_strided_slice %13 {offsets = [1, 0, 0], sizes = [1, 8, 512], strides = [1, 1, 1]} : vector<8x8x512xf32> to vector<1x8x512xf32>
    %101 = vector.shape_cast %100 : vector<1x8x512xf32> to vector<8x512xf32>
    %102 = arith.truncf %55 : vector<8x128xf32> to vector<8x128xbf16>
    %cst_32 = arith.constant dense<0.000000e+00> : vector<8x512xf32>
    %103 = tpu.matmul %102, %2, %cst_32 {dimension_numbers = #tpu.dot_dimension_numbers<[1], [0], [0], [1], [0, 0, 1, 1], [], []>} : vector<8x128xbf16>, vector<128x512xbf16>, vector<8x512xf32> -> vector<8x512xf32>
    %104 = arith.addf %101, %103 : vector<8x512xf32>
    %105 = vector.extract_strided_slice %104 {offsets = [0, 0], sizes = [8, 128], strides = [1, 1]} : vector<8x512xf32> to vector<8x128xf32>
    %106 = arith.negf %105 : vector<8x128xf32>
    %107 = math.exp %106 : vector<8x128xf32>
    %cst_33 = arith.constant 1.000000e+00 : f32
    %108 = vector.broadcast %cst_33 : f32 to vector<8x128xf32>
    %109 = arith.addf %108, %107 : vector<8x128xf32>
    %110 = arith.divf %108, %109 : vector<8x128xf32>
    %111 = vector.extract_strided_slice %104 {offsets = [0, 128], sizes = [8, 128], strides = [1, 1]} : vector<8x512xf32> to vector<8x128xf32>
    %112 = arith.negf %111 : vector<8x128xf32>
    %113 = math.exp %112 : vector<8x128xf32>
    %cst_34 = arith.constant 1.000000e+00 : f32
    %114 = vector.broadcast %cst_34 : f32 to vector<8x128xf32>
    %115 = arith.addf %114, %113 : vector<8x128xf32>
    %116 = arith.divf %114, %115 : vector<8x128xf32>
    %117 = vector.extract_strided_slice %104 {offsets = [0, 256], sizes = [8, 128], strides = [1, 1]} : vector<8x512xf32> to vector<8x128xf32>
    %118 = math.tanh %117 : vector<8x128xf32>
    %119 = vector.extract_strided_slice %104 {offsets = [0, 384], sizes = [8, 128], strides = [1, 1]} : vector<8x512xf32> to vector<8x128xf32>
    %120 = arith.negf %119 : vector<8x128xf32>
    %121 = math.exp %120 : vector<8x128xf32>
    %cst_35 = arith.constant 1.000000e+00 : f32
    %122 = vector.broadcast %cst_35 : f32 to vector<8x128xf32>
    %123 = arith.addf %122, %121 : vector<8x128xf32>
    %124 = arith.divf %122, %123 : vector<8x128xf32>
    %125 = arith.mulf %116, %52 : vector<8x128xf32>
    %126 = arith.mulf %110, %118 : vector<8x128xf32>
    %127 = arith.addf %125, %126 : vector<8x128xf32>
    %128 = math.tanh %127 : vector<8x128xf32>
    %129 = arith.mulf %124, %128 : vector<8x128xf32>
    %130 = vector.shape_cast %99 : vector<8x1xi1> to vector<8x1xi1>
    %131 = vector.broadcast %130 : vector<8x1xi1> to vector<8x128xi1>
    %132 = arith.select %131, %127, %52 : vector<8x128xi1>, vector<8x128xf32>
    %133 = vector.shape_cast %99 : vector<8x1xi1> to vector<8x1xi1>
    %134 = vector.broadcast %133 : vector<8x1xi1> to vector<8x128xi1>
    %135 = arith.select %134, %129, %55 : vector<8x128xi1>, vector<8x128xf32>
    %136 = arith.truncf %135 : vector<8x128xf32> to vector<8x128xbf16>
    %cst_36 = arith.constant dense<0.000000e+00> : vector<8x512xf32>
    %137 = tpu.matmul %136, %1, %cst_36 {dimension_numbers = #tpu.dot_dimension_numbers<[1], [0], [0], [1], [0, 0, 1, 1], [], []>} : vector<8x128xbf16>, vector<128x512xbf16>, vector<8x512xf32> -> vector<8x512xf32>
    %138 = arith.truncf %93 : vector<8x128xf32> to vector<8x128xbf16>
    %cst_37 = arith.constant dense<0.000000e+00> : vector<8x512xf32>
    %139 = tpu.matmul %138, %3, %cst_37 {dimension_numbers = #tpu.dot_dimension_numbers<[1], [0], [0], [1], [0, 0, 1, 1], [], []>} : vector<8x128xbf16>, vector<128x512xbf16>, vector<8x512xf32> -> vector<8x512xf32>
    %140 = arith.addf %137, %139 : vector<8x512xf32>
    %141 = vector.broadcast %5 : vector<1x512xf32> to vector<8x512xf32>
    %142 = arith.addf %140, %141 : vector<8x512xf32>
    %143 = vector.extract_strided_slice %142 {offsets = [0, 0], sizes = [8, 128], strides = [1, 1]} : vector<8x512xf32> to vector<8x128xf32>
    %144 = arith.negf %143 : vector<8x128xf32>
    %145 = math.exp %144 : vector<8x128xf32>
    %cst_38 = arith.constant 1.000000e+00 : f32
    %146 = vector.broadcast %cst_38 : f32 to vector<8x128xf32>
    %147 = arith.addf %146, %145 : vector<8x128xf32>
    %148 = arith.divf %146, %147 : vector<8x128xf32>
    %149 = vector.extract_strided_slice %142 {offsets = [0, 128], sizes = [8, 128], strides = [1, 1]} : vector<8x512xf32> to vector<8x128xf32>
    %150 = arith.negf %149 : vector<8x128xf32>
    %151 = math.exp %150 : vector<8x128xf32>
    %cst_39 = arith.constant 1.000000e+00 : f32
    %152 = vector.broadcast %cst_39 : f32 to vector<8x128xf32>
    %153 = arith.addf %152, %151 : vector<8x128xf32>
    %154 = arith.divf %152, %153 : vector<8x128xf32>
    %155 = vector.extract_strided_slice %142 {offsets = [0, 256], sizes = [8, 128], strides = [1, 1]} : vector<8x512xf32> to vector<8x128xf32>
    %156 = math.tanh %155 : vector<8x128xf32>
    %157 = vector.extract_strided_slice %142 {offsets = [0, 384], sizes = [8, 128], strides = [1, 1]} : vector<8x512xf32> to vector<8x128xf32>
    %158 = arith.negf %157 : vector<8x128xf32>
    %159 = math.exp %158 : vector<8x128xf32>
    %cst_40 = arith.constant 1.000000e+00 : f32
    %160 = vector.broadcast %cst_40 : f32 to vector<8x128xf32>
    %161 = arith.addf %160, %159 : vector<8x128xf32>
    %162 = arith.divf %160, %161 : vector<8x128xf32>
    %163 = arith.mulf %154, %90 : vector<8x128xf32>
    %164 = arith.mulf %148, %156 : vector<8x128xf32>
    %165 = arith.addf %163, %164 : vector<8x128xf32>
    %166 = math.tanh %165 : vector<8x128xf32>
    %167 = arith.mulf %162, %166 : vector<8x128xf32>
    %168 = vector.shape_cast %99 : vector<8x1xi1> to vector<8x1xi1>
    %169 = vector.broadcast %168 : vector<8x1xi1> to vector<8x128xi1>
    %170 = arith.select %169, %165, %90 : vector<8x128xi1>, vector<8x128xf32>
    %171 = vector.shape_cast %99 : vector<8x1xi1> to vector<8x1xi1>
    %172 = vector.broadcast %171 : vector<8x1xi1> to vector<8x128xi1>
    %173 = arith.select %172, %167, %93 : vector<8x128xi1>, vector<8x128xf32>
    %174 = arith.truncf %173 : vector<8x128xf32> to vector<8x128xbf16>
    %c1 = arith.constant 1 : index
    %c0_41 = arith.constant 0 : index
    %c0_42 = arith.constant 0 : index
    %175 = vector.load %arg8[%c1, %c0_41, %c0_42] : memref<8x8x128xbf16, #tpu.memory_space<vmem>>, vector<1x8x128xbf16>
    %176 = vector.shape_cast %175 : vector<1x8x128xbf16> to vector<8x128xbf16>
    %177 = vector.shape_cast %174 : vector<8x128xbf16> to vector<1x8x128xbf16>
    tpu.vector_store %arg8[%c1, %c0_41, %c0_42], %177 {strides = array<i32>} : memref<8x8x128xbf16, #tpu.memory_space<vmem>>, vector<1x8x128xbf16>,
    %c2_i32 = arith.constant 2 : i32
    %178 = vector.broadcast %c2_i32 : i32 to vector<8x1xi32>
    %179 = arith.cmpi sgt, %6, %178 : vector<8x1xi32>
    %180 = vector.extract_strided_slice %13 {offsets = [2, 0, 0], sizes = [1, 8, 512], strides = [1, 1, 1]} : vector<8x8x512xf32> to vector<1x8x512xf32>
    %181 = vector.shape_cast %180 : vector<1x8x512xf32> to vector<8x512xf32>
    %182 = arith.truncf %135 : vector<8x128xf32> to vector<8x128xbf16>
    %cst_43 = arith.constant dense<0.000000e+00> : vector<8x512xf32>
    %183 = tpu.matmul %182, %2, %cst_43 {dimension_numbers = #tpu.dot_dimension_numbers<[1], [0], [0], [1], [0, 0, 1, 1], [], []>} : vector<8x128xbf16>, vector<128x512xbf16>, vector<8x512xf32> -> vector<8x512xf32>
    %184 = arith.addf %181, %183 : vector<8x512xf32>
    %185 = vector.extract_strided_slice %184 {offsets = [0, 0], sizes = [8, 128], strides = [1, 1]} : vector<8x512xf32> to vector<8x128xf32>
    %186 = arith.negf %185 : vector<8x128xf32>
    %187 = math.exp %186 : vector<8x128xf32>
    %cst_44 = arith.constant 1.000000e+00 : f32
    %188 = vector.broadcast %cst_44 : f32 to vector<8x128xf32>
    %189 = arith.addf %188, %187 : vector<8x128xf32>
    %190 = arith.divf %188, %189 : vector<8x128xf32>
    %191 = vector.extract_strided_slice %184 {offsets = [0, 128], sizes = [8, 128], strides = [1, 1]} : vector<8x512xf32> to vector<8x128xf32>
    %192 = arith.negf %191 : vector<8x128xf32>
    %193 = math.exp %192 : vector<8x128xf32>
    %cst_45 = arith.constant 1.000000e+00 : f32
    %194 = vector.broadcast %cst_45 : f32 to vector<8x128xf32>
    %195 = arith.addf %194, %193 : vector<8x128xf32>
    %196 = arith.divf %194, %195 : vector<8x128xf32>
    %197 = vector.extract_strided_slice %184 {offsets = [0, 256], sizes = [8, 128], strides = [1, 1]} : vector<8x512xf32> to vector<8x128xf32>
    %198 = math.tanh %197 : vector<8x128xf32>
    %199 = vector.extract_strided_slice %184 {offsets = [0, 384], sizes = [8, 128], strides = [1, 1]} : vector<8x512xf32> to vector<8x128xf32>
    %200 = arith.negf %199 : vector<8x128xf32>
    %201 = math.exp %200 : vector<8x128xf32>
    %cst_46 = arith.constant 1.000000e+00 : f32
    %202 = vector.broadcast %cst_46 : f32 to vector<8x128xf32>
    %203 = arith.addf %202, %201 : vector<8x128xf32>
    %204 = arith.divf %202, %203 : vector<8x128xf32>
    %205 = arith.mulf %196, %132 : vector<8x128xf32>
    %206 = arith.mulf %190, %198 : vector<8x128xf32>
    %207 = arith.addf %205, %206 : vector<8x128xf32>
    %208 = math.tanh %207 : vector<8x128xf32>
    %209 = arith.mulf %204, %208 : vector<8x128xf32>
    %210 = vector.shape_cast %179 : vector<8x1xi1> to vector<8x1xi1>
    %211 = vector.broadcast %210 : vector<8x1xi1> to vector<8x128xi1>
    %212 = arith.select %211, %207, %132 : vector<8x128xi1>, vector<8x128xf32>
    %213 = vector.shape_cast %179 : vector<8x1xi1> to vector<8x1xi1>
    %214 = vector.broadcast %213 : vector<8x1xi1> to vector<8x128xi1>
    %215 = arith.select %214, %209, %135 : vector<8x128xi1>, vector<8x128xf32>
    %216 = arith.truncf %215 : vector<8x128xf32> to vector<8x128xbf16>
    %cst_47 = arith.constant dense<0.000000e+00> : vector<8x512xf32>
    %217 = tpu.matmul %216, %1, %cst_47 {dimension_numbers = #tpu.dot_dimension_numbers<[1], [0], [0], [1], [0, 0, 1, 1], [], []>} : vector<8x128xbf16>, vector<128x512xbf16>, vector<8x512xf32> -> vector<8x512xf32>
    %218 = arith.truncf %173 : vector<8x128xf32> to vector<8x128xbf16>
    %cst_48 = arith.constant dense<0.000000e+00> : vector<8x512xf32>
    %219 = tpu.matmul %218, %3, %cst_48 {dimension_numbers = #tpu.dot_dimension_numbers<[1], [0], [0], [1], [0, 0, 1, 1], [], []>} : vector<8x128xbf16>, vector<128x512xbf16>, vector<8x512xf32> -> vector<8x512xf32>
    %220 = arith.addf %217, %219 : vector<8x512xf32>
    %221 = vector.broadcast %5 : vector<1x512xf32> to vector<8x512xf32>
    %222 = arith.addf %220, %221 : vector<8x512xf32>
    %223 = vector.extract_strided_slice %222 {offsets = [0, 0], sizes = [8, 128], strides = [1, 1]} : vector<8x512xf32> to vector<8x128xf32>
    %224 = arith.negf %223 : vector<8x128xf32>
    %225 = math.exp %224 : vector<8x128xf32>
    %cst_49 = arith.constant 1.000000e+00 : f32
    %226 = vector.broadcast %cst_49 : f32 to vector<8x128xf32>
    %227 = arith.addf %226, %225 : vector<8x128xf32>
    %228 = arith.divf %226, %227 : vector<8x128xf32>
    %229 = vector.extract_strided_slice %222 {offsets = [0, 128], sizes = [8, 128], strides = [1, 1]} : vector<8x512xf32> to vector<8x128xf32>
    %230 = arith.negf %229 : vector<8x128xf32>
    %231 = math.exp %230 : vector<8x128xf32>
    %cst_50 = arith.constant 1.000000e+00 : f32
    %232 = vector.broadcast %cst_50 : f32 to vector<8x128xf32>
    %233 = arith.addf %232, %231 : vector<8x128xf32>
    %234 = arith.divf %232, %233 : vector<8x128xf32>
    %235 = vector.extract_strided_slice %222 {offsets = [0, 256], sizes = [8, 128], strides = [1, 1]} : vector<8x512xf32> to vector<8x128xf32>
    %236 = math.tanh %235 : vector<8x128xf32>
    %237 = vector.extract_strided_slice %222 {offsets = [0, 384], sizes = [8, 128], strides = [1, 1]} : vector<8x512xf32> to vector<8x128xf32>
    %238 = arith.negf %237 : vector<8x128xf32>
    %239 = math.exp %238 : vector<8x128xf32>
    %cst_51 = arith.constant 1.000000e+00 : f32
    %240 = vector.broadcast %cst_51 : f32 to vector<8x128xf32>
    %241 = arith.addf %240, %239 : vector<8x128xf32>
    %242 = arith.divf %240, %241 : vector<8x128xf32>
    %243 = arith.mulf %234, %170 : vector<8x128xf32>
    %244 = arith.mulf %228, %236 : vector<8x128xf32>
    %245 = arith.addf %243, %244 : vector<8x128xf32>
    %246 = math.tanh %245 : vector<8x128xf32>
    %247 = arith.mulf %242, %246 : vector<8x128xf32>
    %248 = vector.shape_cast %179 : vector<8x1xi1> to vector<8x1xi1>
    %249 = vector.broadcast %248 : vector<8x1xi1> to vector<8x128xi1>
    %250 = arith.select %249, %245, %170 : vector<8x128xi1>, vector<8x128xf32>
    %251 = vector.shape_cast %179 : vector<8x1xi1> to vector<8x1xi1>
    %252 = vector.broadcast %251 : vector<8x1xi1> to vector<8x128xi1>
    %253 = arith.select %252, %247, %173 : vector<8x128xi1>, vector<8x128xf32>
    %254 = arith.truncf %253 : vector<8x128xf32> to vector<8x128xbf16>
    %c2 = arith.constant 2 : index
    %c0_52 = arith.constant 0 : index
    %c0_53 = arith.constant 0 : index
    %255 = vector.load %arg8[%c2, %c0_52, %c0_53] : memref<8x8x128xbf16, #tpu.memory_space<vmem>>, vector<1x8x128xbf16>
    %256 = vector.shape_cast %255 : vector<1x8x128xbf16> to vector<8x128xbf16>
    %257 = vector.shape_cast %254 : vector<8x128xbf16> to vector<1x8x128xbf16>
    tpu.vector_store %arg8[%c2, %c0_52, %c0_53], %257 {strides = array<i32>} : memref<8x8x128xbf16, #tpu.memory_space<vmem>>, vector<1x8x128xbf16>,
    %c3_i32 = arith.constant 3 : i32
    %258 = vector.broadcast %c3_i32 : i32 to vector<8x1xi32>
    %259 = arith.cmpi sgt, %6, %258 : vector<8x1xi32>
    %260 = vector.extract_strided_slice %13 {offsets = [3, 0, 0], sizes = [1, 8, 512], strides = [1, 1, 1]} : vector<8x8x512xf32> to vector<1x8x512xf32>
    %261 = vector.shape_cast %260 : vector<1x8x512xf32> to vector<8x512xf32>
    %262 = arith.truncf %215 : vector<8x128xf32> to vector<8x128xbf16>
    %cst_54 = arith.constant dense<0.000000e+00> : vector<8x512xf32>
    %263 = tpu.matmul %262, %2, %cst_54 {dimension_numbers = #tpu.dot_dimension_numbers<[1], [0], [0], [1], [0, 0, 1, 1], [], []>} : vector<8x128xbf16>, vector<128x512xbf16>, vector<8x512xf32> -> vector<8x512xf32>
    %264 = arith.addf %261, %263 : vector<8x512xf32>
    %265 = vector.extract_strided_slice %264 {offsets = [0, 0], sizes = [8, 128], strides = [1, 1]} : vector<8x512xf32> to vector<8x128xf32>
    %266 = arith.negf %265 : vector<8x128xf32>
    %267 = math.exp %266 : vector<8x128xf32>
    %cst_55 = arith.constant 1.000000e+00 : f32
    %268 = vector.broadcast %cst_55 : f32 to vector<8x128xf32>
    %269 = arith.addf %268, %267 : vector<8x128xf32>
    %270 = arith.divf %268, %269 : vector<8x128xf32>
    %271 = vector.extract_strided_slice %264 {offsets = [0, 128], sizes = [8, 128], strides = [1, 1]} : vector<8x512xf32> to vector<8x128xf32>
    %272 = arith.negf %271 : vector<8x128xf32>
    %273 = math.exp %272 : vector<8x128xf32>
    %cst_56 = arith.constant 1.000000e+00 : f32
    %274 = vector.broadcast %cst_56 : f32 to vector<8x128xf32>
    %275 = arith.addf %274, %273 : vector<8x128xf32>
    %276 = arith.divf %274, %275 : vector<8x128xf32>
    %277 = vector.extract_strided_slice %264 {offsets = [0, 256], sizes = [8, 128], strides = [1, 1]} : vector<8x512xf32> to vector<8x128xf32>
    %278 = math.tanh %277 : vector<8x128xf32>
    %279 = vector.extract_strided_slice %264 {offsets = [0, 384], sizes = [8, 128], strides = [1, 1]} : vector<8x512xf32> to vector<8x128xf32>
    %280 = arith.negf %279 : vector<8x128xf32>
    %281 = math.exp %280 : vector<8x128xf32>
    %cst_57 = arith.constant 1.000000e+00 : f32
    %282 = vector.broadcast %cst_57 : f32 to vector<8x128xf32>
    %283 = arith.addf %282, %281 : vector<8x128xf32>
    %284 = arith.divf %282, %283 : vector<8x128xf32>
    %285 = arith.mulf %276, %212 : vector<8x128xf32>
    %286 = arith.mulf %270, %278 : vector<8x128xf32>
    %287 = arith.addf %285, %286 : vector<8x128xf32>
    %288 = math.tanh %287 : vector<8x128xf32>
    %289 = arith.mulf %284, %288 : vector<8x128xf32>
    %290 = vector.shape_cast %259 : vector<8x1xi1> to vector<8x1xi1>
    %291 = vector.broadcast %290 : vector<8x1xi1> to vector<8x128xi1>
    %292 = arith.select %291, %287, %212 : vector<8x128xi1>, vector<8x128xf32>
    %293 = vector.shape_cast %259 : vector<8x1xi1> to vector<8x1xi1>
    %294 = vector.broadcast %293 : vector<8x1xi1> to vector<8x128xi1>
    %295 = arith.select %294, %289, %215 : vector<8x128xi1>, vector<8x128xf32>
    %296 = arith.truncf %295 : vector<8x128xf32> to vector<8x128xbf16>
    %cst_58 = arith.constant dense<0.000000e+00> : vector<8x512xf32>
    %297 = tpu.matmul %296, %1, %cst_58 {dimension_numbers = #tpu.dot_dimension_numbers<[1], [0], [0], [1], [0, 0, 1, 1], [], []>} : vector<8x128xbf16>, vector<128x512xbf16>, vector<8x512xf32> -> vector<8x512xf32>
    %298 = arith.truncf %253 : vector<8x128xf32> to vector<8x128xbf16>
    %cst_59 = arith.constant dense<0.000000e+00> : vector<8x512xf32>
    %299 = tpu.matmul %298, %3, %cst_59 {dimension_numbers = #tpu.dot_dimension_numbers<[1], [0], [0], [1], [0, 0, 1, 1], [], []>} : vector<8x128xbf16>, vector<128x512xbf16>, vector<8x512xf32> -> vector<8x512xf32>
    %300 = arith.addf %297, %299 : vector<8x512xf32>
    %301 = vector.broadcast %5 : vector<1x512xf32> to vector<8x512xf32>
    %302 = arith.addf %300, %301 : vector<8x512xf32>
    %303 = vector.extract_strided_slice %302 {offsets = [0, 0], sizes = [8, 128], strides = [1, 1]} : vector<8x512xf32> to vector<8x128xf32>
    %304 = arith.negf %303 : vector<8x128xf32>
    %305 = math.exp %304 : vector<8x128xf32>
    %cst_60 = arith.constant 1.000000e+00 : f32
    %306 = vector.broadcast %cst_60 : f32 to vector<8x128xf32>
    %307 = arith.addf %306, %305 : vector<8x128xf32>
    %308 = arith.divf %306, %307 : vector<8x128xf32>
    %309 = vector.extract_strided_slice %302 {offsets = [0, 128], sizes = [8, 128], strides = [1, 1]} : vector<8x512xf32> to vector<8x128xf32>
    %310 = arith.negf %309 : vector<8x128xf32>
    %311 = math.exp %310 : vector<8x128xf32>
    %cst_61 = arith.constant 1.000000e+00 : f32
    %312 = vector.broadcast %cst_61 : f32 to vector<8x128xf32>
    %313 = arith.addf %312, %311 : vector<8x128xf32>
    %314 = arith.divf %312, %313 : vector<8x128xf32>
    %315 = vector.extract_strided_slice %302 {offsets = [0, 256], sizes = [8, 128], strides = [1, 1]} : vector<8x512xf32> to vector<8x128xf32>
    %316 = math.tanh %315 : vector<8x128xf32>
    %317 = vector.extract_strided_slice %302 {offsets = [0, 384], sizes = [8, 128], strides = [1, 1]} : vector<8x512xf32> to vector<8x128xf32>
    %318 = arith.negf %317 : vector<8x128xf32>
    %319 = math.exp %318 : vector<8x128xf32>
    %cst_62 = arith.constant 1.000000e+00 : f32
    %320 = vector.broadcast %cst_62 : f32 to vector<8x128xf32>
    %321 = arith.addf %320, %319 : vector<8x128xf32>
    %322 = arith.divf %320, %321 : vector<8x128xf32>
    %323 = arith.mulf %314, %250 : vector<8x128xf32>
    %324 = arith.mulf %308, %316 : vector<8x128xf32>
    %325 = arith.addf %323, %324 : vector<8x128xf32>
    %326 = math.tanh %325 : vector<8x128xf32>
    %327 = arith.mulf %322, %326 : vector<8x128xf32>
    %328 = vector.shape_cast %259 : vector<8x1xi1> to vector<8x1xi1>
    %329 = vector.broadcast %328 : vector<8x1xi1> to vector<8x128xi1>
    %330 = arith.select %329, %325, %250 : vector<8x128xi1>, vector<8x128xf32>
    %331 = vector.shape_cast %259 : vector<8x1xi1> to vector<8x1xi1>
    %332 = vector.broadcast %331 : vector<8x1xi1> to vector<8x128xi1>
    %333 = arith.select %332, %327, %253 : vector<8x128xi1>, vector<8x128xf32>
    %334 = arith.truncf %333 : vector<8x128xf32> to vector<8x128xbf16>
    %c3 = arith.constant 3 : index
    %c0_63 = arith.constant 0 : index
    %c0_64 = arith.constant 0 : index
    %335 = vector.load %arg8[%c3, %c0_63, %c0_64] : memref<8x8x128xbf16, #tpu.memory_space<vmem>>, vector<1x8x128xbf16>
    %336 = vector.shape_cast %335 : vector<1x8x128xbf16> to vector<8x128xbf16>
    %337 = vector.shape_cast %334 : vector<8x128xbf16> to vector<1x8x128xbf16>
    tpu.vector_store %arg8[%c3, %c0_63, %c0_64], %337 {strides = array<i32>} : memref<8x8x128xbf16, #tpu.memory_space<vmem>>, vector<1x8x128xbf16>,
    %c4_i32 = arith.constant 4 : i32
    %338 = vector.broadcast %c4_i32 : i32 to vector<8x1xi32>
    %339 = arith.cmpi sgt, %6, %338 : vector<8x1xi32>
    %340 = vector.extract_strided_slice %13 {offsets = [4, 0, 0], sizes = [1, 8, 512], strides = [1, 1, 1]} : vector<8x8x512xf32> to vector<1x8x512xf32>
    %341 = vector.shape_cast %340 : vector<1x8x512xf32> to vector<8x512xf32>
    %342 = arith.truncf %295 : vector<8x128xf32> to vector<8x128xbf16>
    %cst_65 = arith.constant dense<0.000000e+00> : vector<8x512xf32>
    %343 = tpu.matmul %342, %2, %cst_65 {dimension_numbers = #tpu.dot_dimension_numbers<[1], [0], [0], [1], [0, 0, 1, 1], [], []>} : vector<8x128xbf16>, vector<128x512xbf16>, vector<8x512xf32> -> vector<8x512xf32>
    %344 = arith.addf %341, %343 : vector<8x512xf32>
    %345 = vector.extract_strided_slice %344 {offsets = [0, 0], sizes = [8, 128], strides = [1, 1]} : vector<8x512xf32> to vector<8x128xf32>
    %346 = arith.negf %345 : vector<8x128xf32>
    %347 = math.exp %346 : vector<8x128xf32>
    %cst_66 = arith.constant 1.000000e+00 : f32
    %348 = vector.broadcast %cst_66 : f32 to vector<8x128xf32>
    %349 = arith.addf %348, %347 : vector<8x128xf32>
    %350 = arith.divf %348, %349 : vector<8x128xf32>
    %351 = vector.extract_strided_slice %344 {offsets = [0, 128], sizes = [8, 128], strides = [1, 1]} : vector<8x512xf32> to vector<8x128xf32>
    %352 = arith.negf %351 : vector<8x128xf32>
    %353 = math.exp %352 : vector<8x128xf32>
    %cst_67 = arith.constant 1.000000e+00 : f32
    %354 = vector.broadcast %cst_67 : f32 to vector<8x128xf32>
    %355 = arith.addf %354, %353 : vector<8x128xf32>
    %356 = arith.divf %354, %355 : vector<8x128xf32>
    %357 = vector.extract_strided_slice %344 {offsets = [0, 256], sizes = [8, 128], strides = [1, 1]} : vector<8x512xf32> to vector<8x128xf32>
    %358 = math.tanh %357 : vector<8x128xf32>
    %359 = vector.extract_strided_slice %344 {offsets = [0, 384], sizes = [8, 128], strides = [1, 1]} : vector<8x512xf32> to vector<8x128xf32>
    %360 = arith.negf %359 : vector<8x128xf32>
    %361 = math.exp %360 : vector<8x128xf32>
    %cst_68 = arith.constant 1.000000e+00 : f32
    %362 = vector.broadcast %cst_68 : f32 to vector<8x128xf32>
    %363 = arith.addf %362, %361 : vector<8x128xf32>
    %364 = arith.divf %362, %363 : vector<8x128xf32>
    %365 = arith.mulf %356, %292 : vector<8x128xf32>
    %366 = arith.mulf %350, %358 : vector<8x128xf32>
    %367 = arith.addf %365, %366 : vector<8x128xf32>
    %368 = math.tanh %367 : vector<8x128xf32>
    %369 = arith.mulf %364, %368 : vector<8x128xf32>
    %370 = vector.shape_cast %339 : vector<8x1xi1> to vector<8x1xi1>
    %371 = vector.broadcast %370 : vector<8x1xi1> to vector<8x128xi1>
    %372 = arith.select %371, %367, %292 : vector<8x128xi1>, vector<8x128xf32>
    %373 = vector.shape_cast %339 : vector<8x1xi1> to vector<8x1xi1>
    %374 = vector.broadcast %373 : vector<8x1xi1> to vector<8x128xi1>
    %375 = arith.select %374, %369, %295 : vector<8x128xi1>, vector<8x128xf32>
    %376 = arith.truncf %375 : vector<8x128xf32> to vector<8x128xbf16>
    %cst_69 = arith.constant dense<0.000000e+00> : vector<8x512xf32>
    %377 = tpu.matmul %376, %1, %cst_69 {dimension_numbers = #tpu.dot_dimension_numbers<[1], [0], [0], [1], [0, 0, 1, 1], [], []>} : vector<8x128xbf16>, vector<128x512xbf16>, vector<8x512xf32> -> vector<8x512xf32>
    %378 = arith.truncf %333 : vector<8x128xf32> to vector<8x128xbf16>
    %cst_70 = arith.constant dense<0.000000e+00> : vector<8x512xf32>
    %379 = tpu.matmul %378, %3, %cst_70 {dimension_numbers = #tpu.dot_dimension_numbers<[1], [0], [0], [1], [0, 0, 1, 1], [], []>} : vector<8x128xbf16>, vector<128x512xbf16>, vector<8x512xf32> -> vector<8x512xf32>
    %380 = arith.addf %377, %379 : vector<8x512xf32>
    %381 = vector.broadcast %5 : vector<1x512xf32> to vector<8x512xf32>
    %382 = arith.addf %380, %381 : vector<8x512xf32>
    %383 = vector.extract_strided_slice %382 {offsets = [0, 0], sizes = [8, 128], strides = [1, 1]} : vector<8x512xf32> to vector<8x128xf32>
    %384 = arith.negf %383 : vector<8x128xf32>
    %385 = math.exp %384 : vector<8x128xf32>
    %cst_71 = arith.constant 1.000000e+00 : f32
    %386 = vector.broadcast %cst_71 : f32 to vector<8x128xf32>
    %387 = arith.addf %386, %385 : vector<8x128xf32>
    %388 = arith.divf %386, %387 : vector<8x128xf32>
    %389 = vector.extract_strided_slice %382 {offsets = [0, 128], sizes = [8, 128], strides = [1, 1]} : vector<8x512xf32> to vector<8x128xf32>
    %390 = arith.negf %389 : vector<8x128xf32>
    %391 = math.exp %390 : vector<8x128xf32>
    %cst_72 = arith.constant 1.000000e+00 : f32
    %392 = vector.broadcast %cst_72 : f32 to vector<8x128xf32>
    %393 = arith.addf %392, %391 : vector<8x128xf32>
    %394 = arith.divf %392, %393 : vector<8x128xf32>
    %395 = vector.extract_strided_slice %382 {offsets = [0, 256], sizes = [8, 128], strides = [1, 1]} : vector<8x512xf32> to vector<8x128xf32>
    %396 = math.tanh %395 : vector<8x128xf32>
    %397 = vector.extract_strided_slice %382 {offsets = [0, 384], sizes = [8, 128], strides = [1, 1]} : vector<8x512xf32> to vector<8x128xf32>
    %398 = arith.negf %397 : vector<8x128xf32>
    %399 = math.exp %398 : vector<8x128xf32>
    %cst_73 = arith.constant 1.000000e+00 : f32
    %400 = vector.broadcast %cst_73 : f32 to vector<8x128xf32>
    %401 = arith.addf %400, %399 : vector<8x128xf32>
    %402 = arith.divf %400, %401 : vector<8x128xf32>
    %403 = arith.mulf %394, %330 : vector<8x128xf32>
    %404 = arith.mulf %388, %396 : vector<8x128xf32>
    %405 = arith.addf %403, %404 : vector<8x128xf32>
    %406 = math.tanh %405 : vector<8x128xf32>
    %407 = arith.mulf %402, %406 : vector<8x128xf32>
    %408 = vector.shape_cast %339 : vector<8x1xi1> to vector<8x1xi1>
    %409 = vector.broadcast %408 : vector<8x1xi1> to vector<8x128xi1>
    %410 = arith.select %409, %405, %330 : vector<8x128xi1>, vector<8x128xf32>
    %411 = vector.shape_cast %339 : vector<8x1xi1> to vector<8x1xi1>
    %412 = vector.broadcast %411 : vector<8x1xi1> to vector<8x128xi1>
    %413 = arith.select %412, %407, %333 : vector<8x128xi1>, vector<8x128xf32>
    %414 = arith.truncf %413 : vector<8x128xf32> to vector<8x128xbf16>
    %c4 = arith.constant 4 : index
    %c0_74 = arith.constant 0 : index
    %c0_75 = arith.constant 0 : index
    %415 = vector.load %arg8[%c4, %c0_74, %c0_75] : memref<8x8x128xbf16, #tpu.memory_space<vmem>>, vector<1x8x128xbf16>
    %416 = vector.shape_cast %415 : vector<1x8x128xbf16> to vector<8x128xbf16>
    %417 = vector.shape_cast %414 : vector<8x128xbf16> to vector<1x8x128xbf16>
    tpu.vector_store %arg8[%c4, %c0_74, %c0_75], %417 {strides = array<i32>} : memref<8x8x128xbf16, #tpu.memory_space<vmem>>, vector<1x8x128xbf16>,
    %c5_i32 = arith.constant 5 : i32
    %418 = vector.broadcast %c5_i32 : i32 to vector<8x1xi32>
    %419 = arith.cmpi sgt, %6, %418 : vector<8x1xi32>
    %420 = vector.extract_strided_slice %13 {offsets = [5, 0, 0], sizes = [1, 8, 512], strides = [1, 1, 1]} : vector<8x8x512xf32> to vector<1x8x512xf32>
    %421 = vector.shape_cast %420 : vector<1x8x512xf32> to vector<8x512xf32>
    %422 = arith.truncf %375 : vector<8x128xf32> to vector<8x128xbf16>
    %cst_76 = arith.constant dense<0.000000e+00> : vector<8x512xf32>
    %423 = tpu.matmul %422, %2, %cst_76 {dimension_numbers = #tpu.dot_dimension_numbers<[1], [0], [0], [1], [0, 0, 1, 1], [], []>} : vector<8x128xbf16>, vector<128x512xbf16>, vector<8x512xf32> -> vector<8x512xf32>
    %424 = arith.addf %421, %423 : vector<8x512xf32>
    %425 = vector.extract_strided_slice %424 {offsets = [0, 0], sizes = [8, 128], strides = [1, 1]} : vector<8x512xf32> to vector<8x128xf32>
    %426 = arith.negf %425 : vector<8x128xf32>
    %427 = math.exp %426 : vector<8x128xf32>
    %cst_77 = arith.constant 1.000000e+00 : f32
    %428 = vector.broadcast %cst_77 : f32 to vector<8x128xf32>
    %429 = arith.addf %428, %427 : vector<8x128xf32>
    %430 = arith.divf %428, %429 : vector<8x128xf32>
    %431 = vector.extract_strided_slice %424 {offsets = [0, 128], sizes = [8, 128], strides = [1, 1]} : vector<8x512xf32> to vector<8x128xf32>
    %432 = arith.negf %431 : vector<8x128xf32>
    %433 = math.exp %432 : vector<8x128xf32>
    %cst_78 = arith.constant 1.000000e+00 : f32
    %434 = vector.broadcast %cst_78 : f32 to vector<8x128xf32>
    %435 = arith.addf %434, %433 : vector<8x128xf32>
    %436 = arith.divf %434, %435 : vector<8x128xf32>
    %437 = vector.extract_strided_slice %424 {offsets = [0, 256], sizes = [8, 128], strides = [1, 1]} : vector<8x512xf32> to vector<8x128xf32>
    %438 = math.tanh %437 : vector<8x128xf32>
    %439 = vector.extract_strided_slice %424 {offsets = [0, 384], sizes = [8, 128], strides = [1, 1]} : vector<8x512xf32> to vector<8x128xf32>
    %440 = arith.negf %439 : vector<8x128xf32>
    %441 = math.exp %440 : vector<8x128xf32>
    %cst_79 = arith.constant 1.000000e+00 : f32
    %442 = vector.broadcast %cst_79 : f32 to vector<8x128xf32>
    %443 = arith.addf %442, %441 : vector<8x128xf32>
    %444 = arith.divf %442, %443 : vector<8x128xf32>
    %445 = arith.mulf %436, %372 : vector<8x128xf32>
    %446 = arith.mulf %430, %438 : vector<8x128xf32>
    %447 = arith.addf %445, %446 : vector<8x128xf32>
    %448 = math.tanh %447 : vector<8x128xf32>
    %449 = arith.mulf %444, %448 : vector<8x128xf32>
    %450 = vector.shape_cast %419 : vector<8x1xi1> to vector<8x1xi1>
    %451 = vector.broadcast %450 : vector<8x1xi1> to vector<8x128xi1>
    %452 = arith.select %451, %447, %372 : vector<8x128xi1>, vector<8x128xf32>
    %453 = vector.shape_cast %419 : vector<8x1xi1> to vector<8x1xi1>
    %454 = vector.broadcast %453 : vector<8x1xi1> to vector<8x128xi1>
    %455 = arith.select %454, %449, %375 : vector<8x128xi1>, vector<8x128xf32>
    %456 = arith.truncf %455 : vector<8x128xf32> to vector<8x128xbf16>
    %cst_80 = arith.constant dense<0.000000e+00> : vector<8x512xf32>
    %457 = tpu.matmul %456, %1, %cst_80 {dimension_numbers = #tpu.dot_dimension_numbers<[1], [0], [0], [1], [0, 0, 1, 1], [], []>} : vector<8x128xbf16>, vector<128x512xbf16>, vector<8x512xf32> -> vector<8x512xf32>
    %458 = arith.truncf %413 : vector<8x128xf32> to vector<8x128xbf16>
    %cst_81 = arith.constant dense<0.000000e+00> : vector<8x512xf32>
    %459 = tpu.matmul %458, %3, %cst_81 {dimension_numbers = #tpu.dot_dimension_numbers<[1], [0], [0], [1], [0, 0, 1, 1], [], []>} : vector<8x128xbf16>, vector<128x512xbf16>, vector<8x512xf32> -> vector<8x512xf32>
    %460 = arith.addf %457, %459 : vector<8x512xf32>
    %461 = vector.broadcast %5 : vector<1x512xf32> to vector<8x512xf32>
    %462 = arith.addf %460, %461 : vector<8x512xf32>
    %463 = vector.extract_strided_slice %462 {offsets = [0, 0], sizes = [8, 128], strides = [1, 1]} : vector<8x512xf32> to vector<8x128xf32>
    %464 = arith.negf %463 : vector<8x128xf32>
    %465 = math.exp %464 : vector<8x128xf32>
    %cst_82 = arith.constant 1.000000e+00 : f32
    %466 = vector.broadcast %cst_82 : f32 to vector<8x128xf32>
    %467 = arith.addf %466, %465 : vector<8x128xf32>
    %468 = arith.divf %466, %467 : vector<8x128xf32>
    %469 = vector.extract_strided_slice %462 {offsets = [0, 128], sizes = [8, 128], strides = [1, 1]} : vector<8x512xf32> to vector<8x128xf32>
    %470 = arith.negf %469 : vector<8x128xf32>
    %471 = math.exp %470 : vector<8x128xf32>
    %cst_83 = arith.constant 1.000000e+00 : f32
    %472 = vector.broadcast %cst_83 : f32 to vector<8x128xf32>
    %473 = arith.addf %472, %471 : vector<8x128xf32>
    %474 = arith.divf %472, %473 : vector<8x128xf32>
    %475 = vector.extract_strided_slice %462 {offsets = [0, 256], sizes = [8, 128], strides = [1, 1]} : vector<8x512xf32> to vector<8x128xf32>
    %476 = math.tanh %475 : vector<8x128xf32>
    %477 = vector.extract_strided_slice %462 {offsets = [0, 384], sizes = [8, 128], strides = [1, 1]} : vector<8x512xf32> to vector<8x128xf32>
    %478 = arith.negf %477 : vector<8x128xf32>
    %479 = math.exp %478 : vector<8x128xf32>
    %cst_84 = arith.constant 1.000000e+00 : f32
    %480 = vector.broadcast %cst_84 : f32 to vector<8x128xf32>
    %481 = arith.addf %480, %479 : vector<8x128xf32>
    %482 = arith.divf %480, %481 : vector<8x128xf32>
    %483 = arith.mulf %474, %410 : vector<8x128xf32>
    %484 = arith.mulf %468, %476 : vector<8x128xf32>
    %485 = arith.addf %483, %484 : vector<8x128xf32>
    %486 = math.tanh %485 : vector<8x128xf32>
    %487 = arith.mulf %482, %486 : vector<8x128xf32>
    %488 = vector.shape_cast %419 : vector<8x1xi1> to vector<8x1xi1>
    %489 = vector.broadcast %488 : vector<8x1xi1> to vector<8x128xi1>
    %490 = arith.select %489, %485, %410 : vector<8x128xi1>, vector<8x128xf32>
    %491 = vector.shape_cast %419 : vector<8x1xi1> to vector<8x1xi1>
    %492 = vector.broadcast %491 : vector<8x1xi1> to vector<8x128xi1>
    %493 = arith.select %492, %487, %413 : vector<8x128xi1>, vector<8x128xf32>
    %494 = arith.truncf %493 : vector<8x128xf32> to vector<8x128xbf16>
    %c5 = arith.constant 5 : index
    %c0_85 = arith.constant 0 : index
    %c0_86 = arith.constant 0 : index
    %495 = vector.load %arg8[%c5, %c0_85, %c0_86] : memref<8x8x128xbf16, #tpu.memory_space<vmem>>, vector<1x8x128xbf16>
    %496 = vector.shape_cast %495 : vector<1x8x128xbf16> to vector<8x128xbf16>
    %497 = vector.shape_cast %494 : vector<8x128xbf16> to vector<1x8x128xbf16>
    tpu.vector_store %arg8[%c5, %c0_85, %c0_86], %497 {strides = array<i32>} : memref<8x8x128xbf16, #tpu.memory_space<vmem>>, vector<1x8x128xbf16>,
    %c6_i32 = arith.constant 6 : i32
    %498 = vector.broadcast %c6_i32 : i32 to vector<8x1xi32>
    %499 = arith.cmpi sgt, %6, %498 : vector<8x1xi32>
    %500 = vector.extract_strided_slice %13 {offsets = [6, 0, 0], sizes = [1, 8, 512], strides = [1, 1, 1]} : vector<8x8x512xf32> to vector<1x8x512xf32>
    %501 = vector.shape_cast %500 : vector<1x8x512xf32> to vector<8x512xf32>
    %502 = arith.truncf %455 : vector<8x128xf32> to vector<8x128xbf16>
    %cst_87 = arith.constant dense<0.000000e+00> : vector<8x512xf32>
    %503 = tpu.matmul %502, %2, %cst_87 {dimension_numbers = #tpu.dot_dimension_numbers<[1], [0], [0], [1], [0, 0, 1, 1], [], []>} : vector<8x128xbf16>, vector<128x512xbf16>, vector<8x512xf32> -> vector<8x512xf32>
    %504 = arith.addf %501, %503 : vector<8x512xf32>
    %505 = vector.extract_strided_slice %504 {offsets = [0, 0], sizes = [8, 128], strides = [1, 1]} : vector<8x512xf32> to vector<8x128xf32>
    %506 = arith.negf %505 : vector<8x128xf32>
    %507 = math.exp %506 : vector<8x128xf32>
    %cst_88 = arith.constant 1.000000e+00 : f32
    %508 = vector.broadcast %cst_88 : f32 to vector<8x128xf32>
    %509 = arith.addf %508, %507 : vector<8x128xf32>
    %510 = arith.divf %508, %509 : vector<8x128xf32>
    %511 = vector.extract_strided_slice %504 {offsets = [0, 128], sizes = [8, 128], strides = [1, 1]} : vector<8x512xf32> to vector<8x128xf32>
    %512 = arith.negf %511 : vector<8x128xf32>
    %513 = math.exp %512 : vector<8x128xf32>
    %cst_89 = arith.constant 1.000000e+00 : f32
    %514 = vector.broadcast %cst_89 : f32 to vector<8x128xf32>
    %515 = arith.addf %514, %513 : vector<8x128xf32>
    %516 = arith.divf %514, %515 : vector<8x128xf32>
    %517 = vector.extract_strided_slice %504 {offsets = [0, 256], sizes = [8, 128], strides = [1, 1]} : vector<8x512xf32> to vector<8x128xf32>
    %518 = math.tanh %517 : vector<8x128xf32>
    %519 = vector.extract_strided_slice %504 {offsets = [0, 384], sizes = [8, 128], strides = [1, 1]} : vector<8x512xf32> to vector<8x128xf32>
    %520 = arith.negf %519 : vector<8x128xf32>
    %521 = math.exp %520 : vector<8x128xf32>
    %cst_90 = arith.constant 1.000000e+00 : f32
    %522 = vector.broadcast %cst_90 : f32 to vector<8x128xf32>
    %523 = arith.addf %522, %521 : vector<8x128xf32>
    %524 = arith.divf %522, %523 : vector<8x128xf32>
    %525 = arith.mulf %516, %452 : vector<8x128xf32>
    %526 = arith.mulf %510, %518 : vector<8x128xf32>
    %527 = arith.addf %525, %526 : vector<8x128xf32>
    %528 = math.tanh %527 : vector<8x128xf32>
    %529 = arith.mulf %524, %528 : vector<8x128xf32>
    %530 = vector.shape_cast %499 : vector<8x1xi1> to vector<8x1xi1>
    %531 = vector.broadcast %530 : vector<8x1xi1> to vector<8x128xi1>
    %532 = arith.select %531, %527, %452 : vector<8x128xi1>, vector<8x128xf32>
    %533 = vector.shape_cast %499 : vector<8x1xi1> to vector<8x1xi1>
    %534 = vector.broadcast %533 : vector<8x1xi1> to vector<8x128xi1>
    %535 = arith.select %534, %529, %455 : vector<8x128xi1>, vector<8x128xf32>
    %536 = arith.truncf %535 : vector<8x128xf32> to vector<8x128xbf16>
    %cst_91 = arith.constant dense<0.000000e+00> : vector<8x512xf32>
    %537 = tpu.matmul %536, %1, %cst_91 {dimension_numbers = #tpu.dot_dimension_numbers<[1], [0], [0], [1], [0, 0, 1, 1], [], []>} : vector<8x128xbf16>, vector<128x512xbf16>, vector<8x512xf32> -> vector<8x512xf32>
    %538 = arith.truncf %493 : vector<8x128xf32> to vector<8x128xbf16>
    %cst_92 = arith.constant dense<0.000000e+00> : vector<8x512xf32>
    %539 = tpu.matmul %538, %3, %cst_92 {dimension_numbers = #tpu.dot_dimension_numbers<[1], [0], [0], [1], [0, 0, 1, 1], [], []>} : vector<8x128xbf16>, vector<128x512xbf16>, vector<8x512xf32> -> vector<8x512xf32>
    %540 = arith.addf %537, %539 : vector<8x512xf32>
    %541 = vector.broadcast %5 : vector<1x512xf32> to vector<8x512xf32>
    %542 = arith.addf %540, %541 : vector<8x512xf32>
    %543 = vector.extract_strided_slice %542 {offsets = [0, 0], sizes = [8, 128], strides = [1, 1]} : vector<8x512xf32> to vector<8x128xf32>
    %544 = arith.negf %543 : vector<8x128xf32>
    %545 = math.exp %544 : vector<8x128xf32>
    %cst_93 = arith.constant 1.000000e+00 : f32
    %546 = vector.broadcast %cst_93 : f32 to vector<8x128xf32>
    %547 = arith.addf %546, %545 : vector<8x128xf32>
    %548 = arith.divf %546, %547 : vector<8x128xf32>
    %549 = vector.extract_strided_slice %542 {offsets = [0, 128], sizes = [8, 128], strides = [1, 1]} : vector<8x512xf32> to vector<8x128xf32>
    %550 = arith.negf %549 : vector<8x128xf32>
    %551 = math.exp %550 : vector<8x128xf32>
    %cst_94 = arith.constant 1.000000e+00 : f32
    %552 = vector.broadcast %cst_94 : f32 to vector<8x128xf32>
    %553 = arith.addf %552, %551 : vector<8x128xf32>
    %554 = arith.divf %552, %553 : vector<8x128xf32>
    %555 = vector.extract_strided_slice %542 {offsets = [0, 256], sizes = [8, 128], strides = [1, 1]} : vector<8x512xf32> to vector<8x128xf32>
    %556 = math.tanh %555 : vector<8x128xf32>
    %557 = vector.extract_strided_slice %542 {offsets = [0, 384], sizes = [8, 128], strides = [1, 1]} : vector<8x512xf32> to vector<8x128xf32>
    %558 = arith.negf %557 : vector<8x128xf32>
    %559 = math.exp %558 : vector<8x128xf32>
    %cst_95 = arith.constant 1.000000e+00 : f32
    %560 = vector.broadcast %cst_95 : f32 to vector<8x128xf32>
    %561 = arith.addf %560, %559 : vector<8x128xf32>
    %562 = arith.divf %560, %561 : vector<8x128xf32>
    %563 = arith.mulf %554, %490 : vector<8x128xf32>
    %564 = arith.mulf %548, %556 : vector<8x128xf32>
    %565 = arith.addf %563, %564 : vector<8x128xf32>
    %566 = math.tanh %565 : vector<8x128xf32>
    %567 = arith.mulf %562, %566 : vector<8x128xf32>
    %568 = vector.shape_cast %499 : vector<8x1xi1> to vector<8x1xi1>
    %569 = vector.broadcast %568 : vector<8x1xi1> to vector<8x128xi1>
    %570 = arith.select %569, %565, %490 : vector<8x128xi1>, vector<8x128xf32>
    %571 = vector.shape_cast %499 : vector<8x1xi1> to vector<8x1xi1>
    %572 = vector.broadcast %571 : vector<8x1xi1> to vector<8x128xi1>
    %573 = arith.select %572, %567, %493 : vector<8x128xi1>, vector<8x128xf32>
    %574 = arith.truncf %573 : vector<8x128xf32> to vector<8x128xbf16>
    %c6 = arith.constant 6 : index
    %c0_96 = arith.constant 0 : index
    %c0_97 = arith.constant 0 : index
    %575 = vector.load %arg8[%c6, %c0_96, %c0_97] : memref<8x8x128xbf16, #tpu.memory_space<vmem>>, vector<1x8x128xbf16>
    %576 = vector.shape_cast %575 : vector<1x8x128xbf16> to vector<8x128xbf16>
    %577 = vector.shape_cast %574 : vector<8x128xbf16> to vector<1x8x128xbf16>
    tpu.vector_store %arg8[%c6, %c0_96, %c0_97], %577 {strides = array<i32>} : memref<8x8x128xbf16, #tpu.memory_space<vmem>>, vector<1x8x128xbf16>,
    %c7_i32 = arith.constant 7 : i32
    %578 = vector.broadcast %c7_i32 : i32 to vector<8x1xi32>
    %579 = arith.cmpi sgt, %6, %578 : vector<8x1xi32>
    %580 = vector.extract_strided_slice %13 {offsets = [7, 0, 0], sizes = [1, 8, 512], strides = [1, 1, 1]} : vector<8x8x512xf32> to vector<1x8x512xf32>
    %581 = vector.shape_cast %580 : vector<1x8x512xf32> to vector<8x512xf32>
    %582 = arith.truncf %535 : vector<8x128xf32> to vector<8x128xbf16>
    %cst_98 = arith.constant dense<0.000000e+00> : vector<8x512xf32>
    %583 = tpu.matmul %582, %2, %cst_98 {dimension_numbers = #tpu.dot_dimension_numbers<[1], [0], [0], [1], [0, 0, 1, 1], [], []>} : vector<8x128xbf16>, vector<128x512xbf16>, vector<8x512xf32> -> vector<8x512xf32>
    %584 = arith.addf %581, %583 : vector<8x512xf32>
    %585 = vector.extract_strided_slice %584 {offsets = [0, 0], sizes = [8, 128], strides = [1, 1]} : vector<8x512xf32> to vector<8x128xf32>
    %586 = arith.negf %585 : vector<8x128xf32>
    %587 = math.exp %586 : vector<8x128xf32>
    %cst_99 = arith.constant 1.000000e+00 : f32
    %588 = vector.broadcast %cst_99 : f32 to vector<8x128xf32>
    %589 = arith.addf %588, %587 : vector<8x128xf32>
    %590 = arith.divf %588, %589 : vector<8x128xf32>
    %591 = vector.extract_strided_slice %584 {offsets = [0, 128], sizes = [8, 128], strides = [1, 1]} : vector<8x512xf32> to vector<8x128xf32>
    %592 = arith.negf %591 : vector<8x128xf32>
    %593 = math.exp %592 : vector<8x128xf32>
    %cst_100 = arith.constant 1.000000e+00 : f32
    %594 = vector.broadcast %cst_100 : f32 to vector<8x128xf32>
    %595 = arith.addf %594, %593 : vector<8x128xf32>
    %596 = arith.divf %594, %595 : vector<8x128xf32>
    %597 = vector.extract_strided_slice %584 {offsets = [0, 256], sizes = [8, 128], strides = [1, 1]} : vector<8x512xf32> to vector<8x128xf32>
    %598 = math.tanh %597 : vector<8x128xf32>
    %599 = vector.extract_strided_slice %584 {offsets = [0, 384], sizes = [8, 128], strides = [1, 1]} : vector<8x512xf32> to vector<8x128xf32>
    %600 = arith.negf %599 : vector<8x128xf32>
    %601 = math.exp %600 : vector<8x128xf32>
    %cst_101 = arith.constant 1.000000e+00 : f32
    %602 = vector.broadcast %cst_101 : f32 to vector<8x128xf32>
    %603 = arith.addf %602, %601 : vector<8x128xf32>
    %604 = arith.divf %602, %603 : vector<8x128xf32>
    %605 = arith.mulf %596, %532 : vector<8x128xf32>
    %606 = arith.mulf %590, %598 : vector<8x128xf32>
    %607 = arith.addf %605, %606 : vector<8x128xf32>
    %608 = math.tanh %607 : vector<8x128xf32>
    %609 = arith.mulf %604, %608 : vector<8x128xf32>
    %610 = vector.shape_cast %579 : vector<8x1xi1> to vector<8x1xi1>
    %611 = vector.broadcast %610 : vector<8x1xi1> to vector<8x128xi1>
    %612 = arith.select %611, %609, %535 : vector<8x128xi1>, vector<8x128xf32>
    %613 = arith.truncf %612 : vector<8x128xf32> to vector<8x128xbf16>
    %cst_102 = arith.constant dense<0.000000e+00> : vector<8x512xf32>
    %614 = tpu.matmul %613, %1, %cst_102 {dimension_numbers = #tpu.dot_dimension_numbers<[1], [0], [0], [1], [0, 0, 1, 1], [], []>} : vector<8x128xbf16>, vector<128x512xbf16>, vector<8x512xf32> -> vector<8x512xf32>
    %615 = arith.truncf %573 : vector<8x128xf32> to vector<8x128xbf16>
    %cst_103 = arith.constant dense<0.000000e+00> : vector<8x512xf32>
    %616 = tpu.matmul %615, %3, %cst_103 {dimension_numbers = #tpu.dot_dimension_numbers<[1], [0], [0], [1], [0, 0, 1, 1], [], []>} : vector<8x128xbf16>, vector<128x512xbf16>, vector<8x512xf32> -> vector<8x512xf32>
    %617 = arith.addf %614, %616 : vector<8x512xf32>
    %618 = vector.broadcast %5 : vector<1x512xf32> to vector<8x512xf32>
    %619 = arith.addf %617, %618 : vector<8x512xf32>
    %620 = vector.extract_strided_slice %619 {offsets = [0, 0], sizes = [8, 128], strides = [1, 1]} : vector<8x512xf32> to vector<8x128xf32>
    %621 = arith.negf %620 : vector<8x128xf32>
    %622 = math.exp %621 : vector<8x128xf32>
    %cst_104 = arith.constant 1.000000e+00 : f32
    %623 = vector.broadcast %cst_104 : f32 to vector<8x128xf32>
    %624 = arith.addf %623, %622 : vector<8x128xf32>
    %625 = arith.divf %623, %624 : vector<8x128xf32>
    %626 = vector.extract_strided_slice %619 {offsets = [0, 128], sizes = [8, 128], strides = [1, 1]} : vector<8x512xf32> to vector<8x128xf32>
    %627 = arith.negf %626 : vector<8x128xf32>
    %628 = math.exp %627 : vector<8x128xf32>
    %cst_105 = arith.constant 1.000000e+00 : f32
    %629 = vector.broadcast %cst_105 : f32 to vector<8x128xf32>
    %630 = arith.addf %629, %628 : vector<8x128xf32>
    %631 = arith.divf %629, %630 : vector<8x128xf32>
    %632 = vector.extract_strided_slice %619 {offsets = [0, 256], sizes = [8, 128], strides = [1, 1]} : vector<8x512xf32> to vector<8x128xf32>
    %633 = math.tanh %632 : vector<8x128xf32>
    %634 = vector.extract_strided_slice %619 {offsets = [0, 384], sizes = [8, 128], strides = [1, 1]} : vector<8x512xf32> to vector<8x128xf32>
    %635 = arith.negf %634 : vector<8x128xf32>
    %636 = math.exp %635 : vector<8x128xf32>
    %cst_106 = arith.constant 1.000000e+00 : f32
    %637 = vector.broadcast %cst_106 : f32 to vector<8x128xf32>
    %638 = arith.addf %637, %636 : vector<8x128xf32>
    %639 = arith.divf %637, %638 : vector<8x128xf32>
    %640 = arith.mulf %631, %570 : vector<8x128xf32>
    %641 = arith.mulf %625, %633 : vector<8x128xf32>
    %642 = arith.addf %640, %641 : vector<8x128xf32>
    %643 = math.tanh %642 : vector<8x128xf32>
    %644 = arith.mulf %639, %643 : vector<8x128xf32>
    %645 = vector.shape_cast %579 : vector<8x1xi1> to vector<8x1xi1>
    %646 = vector.broadcast %645 : vector<8x1xi1> to vector<8x128xi1>
    %647 = arith.select %646, %644, %573 : vector<8x128xi1>, vector<8x128xf32>
    %648 = arith.truncf %647 : vector<8x128xf32> to vector<8x128xbf16>
    %c7 = arith.constant 7 : index
    %c0_107 = arith.constant 0 : index
    %c0_108 = arith.constant 0 : index
    %649 = vector.load %arg8[%c7, %c0_107, %c0_108] : memref<8x8x128xbf16, #tpu.memory_space<vmem>>, vector<1x8x128xbf16>
    %650 = vector.shape_cast %649 : vector<1x8x128xbf16> to vector<8x128xbf16>
    %651 = vector.shape_cast %648 : vector<8x128xbf16> to vector<1x8x128xbf16>
    tpu.vector_store %arg8[%c7, %c0_107, %c0_108], %651 {strides = array<i32>} : memref<8x8x128xbf16, #tpu.memory_space<vmem>>, vector<1x8x128xbf16>,
    return
  }
}

</mosaic_0001>

<llo_original>
// kernel: tpu_custom_call.1
$region0: #{tpu_custom_call.1}
  #allocation0 [shape = 'u32[]', space=smem, size = 0x4, offset = 0x4, fixed_abs, tag = 'smem constant byte address 0x4 - core index']
  #allocation1 [shape = 'u32[72,128]{1,0:T(1,128)}', space=vmem, size = 0x9000, scoped, tag = 'internal scratch']
  %s0 = inlined_call_operand.vmem [shape: s32[8,1], index: 0, kind: input, shape index: {}]
  %s1 = inlined_call_operand.hbm [shape: bf16[8,8,128], index: 1, kind: input, shape index: {}]
  %s2 = inlined_call_operand.hbm [shape: bf16[128,512], index: 2, kind: input, shape index: {}]
  %s3 = inlined_call_operand.hbm [shape: bf16[128,512], index: 3, kind: input, shape index: {}]
  %s4 = inlined_call_operand.hbm [shape: bf16[128,512], index: 4, kind: input, shape index: {}]
  %s5 = inlined_call_operand.hbm [shape: bf16[128,512], index: 5, kind: input, shape index: {}]
  %s6 = inlined_call_operand.vmem [shape: f32[1,512], index: 6, kind: input, shape index: {}]
  %s7 = inlined_call_operand.vmem [shape: f32[1,512], index: 7, kind: input, shape index: {}]
  %s8 = inlined_call_operand.hbm [shape: bf16[8,8,128], index: 8, kind: output, shape index: {}]
  %s9 = sld [smem:[#allocation0]]
  $region62: #{tpu_custom_call.1} parent=0
    _
  %s11 = ssub.s32 1, %s9
  %s12 = scalar_select 0, %s11, %s9
  $region1: #{tpu_custom_call.1} parent=0
    #allocation2 [shape = 'u8[16384]{0}', space=vmem, size = 0x4000, scoped, tag = 'input window, operand 1, single buffered']
    #allocation3 [shape = 's32[1]{0}', space=sflag, size = 0x4, scoped, tag = 'scoped memory for tpu_custom_call.1']
    #allocation4 [shape = 's32[1]{0}', space=sflag, size = 0x4, scoped, tag = 'scoped memory for tpu_custom_call.1']
    #allocation5 [shape = 'u8[131072]{0}', space=vmem, size = 0x20000, scoped, tag = 'input window, operand 2, single buffered']
    #allocation6 [shape = 's32[1]{0}', space=sflag, size = 0x4, scoped, tag = 'scoped memory for tpu_custom_call.1']
    #allocation7 [shape = 'u8[131072]{0}', space=vmem, size = 0x20000, scoped, tag = 'input window, operand 3, single buffered']
    #allocation8 [shape = 'u8[131072]{0}', space=vmem, size = 0x20000, scoped, tag = 'input window, operand 4, single buffered']
    #allocation9 [shape = 's32[1]{0}', space=sflag, size = 0x4, scoped, tag = 'scoped memory for tpu_custom_call.1']
    #allocation10 [shape = 'u8[131072]{0}', space=vmem, size = 0x20000, scoped, tag = 'input window, operand 5, single buffered']
    #allocation11 [shape = 'u8[16384]{0}', space=vmem, size = 0x4000, scoped, tag = 'output window, operand 0, single buffered']
    %13 = vsyncpa [#allocation3], 0
    %14 = vsyncpa [#allocation6], 0
    %15 = vsyncpa [#allocation9], 0
    %16 = vsyncpa [#allocation4], 0
    // Predicated region
    $region2: #{tpu_custom_call.1} parent=1 // pred_check
      _
    $region3: #{tpu_custom_call.1} parent=1 // pred_check_branch
      %18 = sbr.rel (0) target = $region5
    $region4: #{tpu_custom_call.1} parent=1 // pred_region
      _
    $region5: #{tpu_custom_call.1} parent=1 // pred_fallthru
      _
    // Predicated region
    $region6: #{tpu_custom_call.1} parent=1 // pred_check
      _
    $region7: #{tpu_custom_call.1} parent=1 // pred_check_branch
      %20 = sbr.rel (0) target = $region9
    $region8: #{tpu_custom_call.1} parent=1 // pred_region
      %22 = vsyncadd [#allocation3], 0
      %s23 = sshll.u32 %s1, 4
      %s24 = int_to_ptr.hbm [resolvable:$true] %s23
      %s25 = sshll.u32 [#allocation2], 4
      %s26 = int_to_ptr.vmem [resolvable:$true] %s25
      %31 = dma.hbm_to_vmem [thread:$0]  %s24, 512, %s26, [#allocation3], 64, 64, 4
    $region9: #{tpu_custom_call.1} parent=1 // pred_fallthru
      _
    // Predicated region
    $region10: #{tpu_custom_call.1} parent=1 // pred_check
      _
    $region11: #{tpu_custom_call.1} parent=1 // pred_check_branch
      %33 = sbr.rel (0) target = $region13
    $region12: #{tpu_custom_call.1} parent=1 // pred_region
      %35 = vsyncadd [#allocation6], 0
      %s36 = sshll.u32 %s2, 4
      %s37 = int_to_ptr.hbm [resolvable:$true] %s36
      %s38 = sshll.u32 [#allocation5], 4
      %s39 = int_to_ptr.vmem [resolvable:$true] %s38
      %44 = dma.hbm_to_vmem [thread:$0]  %s37, 4096, %s39, [#allocation6], 256, 256, 16
    $region13: #{tpu_custom_call.1} parent=1 // pred_fallthru
      _
    // Predicated region
    $region14: #{tpu_custom_call.1} parent=1 // pred_check
      _
    $region15: #{tpu_custom_call.1} parent=1 // pred_check_branch
      %46 = sbr.rel (0) target = $region17
    $region16: #{tpu_custom_call.1} parent=1 // pred_region
      %48 = vsyncadd [#allocation6], 0
      %s49 = sshll.u32 %s3, 4
      %s50 = int_to_ptr.hbm [resolvable:$true] %s49
      %s51 = sshll.u32 [#allocation7], 4
      %s52 = int_to_ptr.vmem [resolvable:$true] %s51
      %57 = dma.hbm_to_vmem [thread:$0]  %s50, 4096, %s52, [#allocation6], 256, 256, 16
    $region17: #{tpu_custom_call.1} parent=1 // pred_fallthru
      _
    // Predicated region
    $region18: #{tpu_custom_call.1} parent=1 // pred_check
      _
    $region19: #{tpu_custom_call.1} parent=1 // pred_check_branch
      %59 = sbr.rel (0) target = $region21
    $region20: #{tpu_custom_call.1} parent=1 // pred_region
      %61 = vsyncadd [#allocation9], 0
      %s62 = sshll.u32 %s4, 4
      %s63 = int_to_ptr.hbm [resolvable:$true] %s62
      %s64 = sshll.u32 [#allocation8], 4
      %s65 = int_to_ptr.vmem [resolvable:$true] %s64
      %70 = dma.hbm_to_vmem [thread:$0]  %s63, 4096, %s65, [#allocation9], 256, 256, 16
    $region21: #{tpu_custom_call.1} parent=1 // pred_fallthru
      _
    // Predicated region
    $region22: #{tpu_custom_call.1} parent=1 // pred_check
      _
    $region23: #{tpu_custom_call.1} parent=1 // pred_check_branch
      %72 = sbr.rel (0) target = $region25
    $region24: #{tpu_custom_call.1} parent=1 // pred_region
      %74 = vsyncadd [#allocation9], 0
      %s75 = sshll.u32 %s5, 4
      %s76 = int_to_ptr.hbm [resolvable:$true] %s75
      %s77 = sshll.u32 [#allocation10], 4
      %s78 = int_to_ptr.vmem [resolvable:$true] %s77
      %83 = dma.hbm_to_vmem [thread:$0]  %s76, 4096, %s78, [#allocation9], 256, 256, 16
    $region25: #{tpu_custom_call.1} parent=1 // pred_fallthru
      _
    // Predicated region
    $region26: #{tpu_custom_call.1} parent=1 // pred_check
      _
    $region27: #{tpu_custom_call.1} parent=1 // pred_check_branch
      %85 = sbr.rel (0) target = $region29
    $region28: #{tpu_custom_call.1} parent=1 // pred_region
      _
    $region29: #{tpu_custom_call.1} parent=1 // pred_fallthru
      _
    // Predicated region
    $region30: #{tpu_custom_call.1} parent=1 // pred_check
      _
    $region31: #{tpu_custom_call.1} parent=1 // pred_check_branch
      %87 = sbr.rel (0) target = $region33
    $region32: #{tpu_custom_call.1} parent=1 // pred_region
      _
    $region33: #{tpu_custom_call.1} parent=1 // pred_fallthru
      _
    // Predicated region
    $region34: #{tpu_custom_call.1} parent=1 // pred_check
      _
    $region35: #{tpu_custom_call.1} parent=1 // pred_check_branch
      %89 = sbr.rel (0) target = $region37
    $region36: #{tpu_custom_call.1} parent=1 // pred_region
      %91 = dma.done [#allocation3], 512
    $region37: #{tpu_custom_call.1} parent=1 // pred_fallthru
      _
    // Predicated region
    $region38: #{tpu_custom_call.1} parent=1 // pred_check
      _
    $region39: #{tpu_custom_call.1} parent=1 // pred_check_branch
      %93 = sbr.rel (0) target = $region41
    $region40: #{tpu_custom_call.1} parent=1 // pred_region
      %95 = dma.done [#allocation6], 4096
    $region41: #{tpu_custom_call.1} parent=1 // pred_fallthru
      _
    // Predicated region
    $region42: #{tpu_custom_call.1} parent=1 // pred_check
      _
    $region43: #{tpu_custom_call.1} parent=1 // pred_check_branch
      %97 = sbr.rel (0) target = $region45
    $region44: #{tpu_custom_call.1} parent=1 // pred_region
      %99 = dma.done [#allocation6], 4096
    $region45: #{tpu_custom_call.1} parent=1 // pred_fallthru
      _
    // Predicated region
    $region46: #{tpu_custom_call.1} parent=1 // pred_check
      _
    $region47: #{tpu_custom_call.1} parent=1 // pred_check_branch
      %101 = sbr.rel (0) target = $region49
    $region48: #{tpu_custom_call.1} parent=1 // pred_region
      %103 = dma.done [#allocation9], 4096
    $region49: #{tpu_custom_call.1} parent=1 // pred_fallthru
      _
    // Predicated region
    $region50: #{tpu_custom_call.1} parent=1 // pred_check
      _
    $region51: #{tpu_custom_call.1} parent=1 // pred_check_branch
      %105 = sbr.rel (0) target = $region53
    $region52: #{tpu_custom_call.1} parent=1 // pred_region
      %107 = dma.done [#allocation9], 4096
    $region53: #{tpu_custom_call.1} parent=1 // pred_fallthru
      _
    %v109 = vld [vmem:[#allocation5] sm:$0xff]
    %v110 = vld [vmem:[#allocation5 + $0x8] sm:$0xff]
    %v111 = vld [vmem:[#allocation5 + $0x10] sm:$0xff]
    %v112 = vld [vmem:[#allocation5 + $0x18] sm:$0xff]
    %v113 = vld [vmem:[#allocation5 + $0x20] sm:$0xff]
    %v114 = vld [vmem:[#allocation5 + $0x28] sm:$0xff]
    %v115 = vld [vmem:[#allocation5 + $0x30] sm:$0xff]
    %v116 = vld [vmem:[#allocation5 + $0x38] sm:$0xff]
    %v117 = vld [vmem:[#allocation5 + $0x40] sm:$0xff]
    %v118 = vld [vmem:[#allocation5 + $0x48] sm:$0xff]
    %v119 = vld [vmem:[#allocation5 + $0x50] sm:$0xff]
    %v120 = vld [vmem:[#allocation5 + $0x58] sm:$0xff]
    %v121 = vld [vmem:[#allocation5 + $0x60] sm:$0xff]
    %v122 = vld [vmem:[#allocation5 + $0x68] sm:$0xff]
    %v123 = vld [vmem:[#allocation5 + $0x70] sm:$0xff]
    %v124 = vld [vmem:[#allocation5 + $0x78] sm:$0xff]
    %v125 = vld [vmem:[#allocation5 + $0x80] sm:$0xff]
    %v126 = vld [vmem:[#allocation5 + $0x88] sm:$0xff]
    %v127 = vld [vmem:[#allocation5 + $0x90] sm:$0xff]
    %v128 = vld [vmem:[#allocation5 + $0x98] sm:$0xff]
    %v129 = vld [vmem:[#allocation5 + $0xa0] sm:$0xff]
    %v130 = vld [vmem:[#allocation5 + $0xa8] sm:$0xff]
    %v131 = vld [vmem:[#allocation5 + $0xb0] sm:$0xff]
    %v132 = vld [vmem:[#allocation5 + $0xb8] sm:$0xff]
    %v133 = vld [vmem:[#allocation5 + $0xc0] sm:$0xff]
    %v134 = vld [vmem:[#allocation5 + $0xc8] sm:$0xff]
    %v135 = vld [vmem:[#allocation5 + $0xd0] sm:$0xff]
    %v136 = vld [vmem:[#allocation5 + $0xd8] sm:$0xff]
    %v137 = vld [vmem:[#allocation5 + $0xe0] sm:$0xff]
    %v138 = vld [vmem:[#allocation5 + $0xe8] sm:$0xff]
    %v139 = vld [vmem:[#allocation5 + $0xf0] sm:$0xff]
    %v140 = vld [vmem:[#allocation5 + $0xf8] sm:$0xff]
    %v141 = vld [vmem:[#allocation7] sm:$0xff]
    %v142 = vld [vmem:[#allocation7 + $0x8] sm:$0xff]
    %v143 = vld [vmem:[#allocation7 + $0x10] sm:$0xff]
    %v144 = vld [vmem:[#allocation7 + $0x18] sm:$0xff]
    %v145 = vld [vmem:[#allocation7 + $0x20] sm:$0xff]
    %v146 = vld [vmem:[#allocation7 + $0x28] sm:$0xff]
    %v147 = vld [vmem:[#allocation7 + $0x30] sm:$0xff]
    %v148 = vld [vmem:[#allocation7 + $0x38] sm:$0xff]
    %v149 = vld [vmem:[#allocation7 + $0x40] sm:$0xff]
    %v150 = vld [vmem:[#allocation7 + $0x48] sm:$0xff]
    %v151 = vld [vmem:[#allocation7 + $0x50] sm:$0xff]
    %v152 = vld [vmem:[#allocation7 + $0x58] sm:$0xff]
    %v153 = vld [vmem:[#allocation7 + $0x60] sm:$0xff]
    %v154 = vld [vmem:[#allocation7 + $0x68] sm:$0xff]
    %v155 = vld [vmem:[#allocation7 + $0x70] sm:$0xff]
    %v156 = vld [vmem:[#allocation7 + $0x78] sm:$0xff]
    %v157 = vld [vmem:[#allocation7 + $0x80] sm:$0xff]
    %v158 = vld [vmem:[#allocation7 + $0x88] sm:$0xff]
    %v159 = vld [vmem:[#allocation7 + $0x90] sm:$0xff]
    %v160 = vld [vmem:[#allocation7 + $0x98] sm:$0xff]
    %v161 = vld [vmem:[#allocation7 + $0xa0] sm:$0xff]
    %v162 = vld [vmem:[#allocation7 + $0xa8] sm:$0xff]
    %v163 = vld [vmem:[#allocation7 + $0xb0] sm:$0xff]
    %v164 = vld [vmem:[#allocation7 + $0xb8] sm:$0xff]
    %v165 = vld [vmem:[#allocation7 + $0xc0] sm:$0xff]
    %v166 = vld [vmem:[#allocation7 + $0xc8] sm:$0xff]
    %v167 = vld [vmem:[#allocation7 + $0xd0] sm:$0xff]
    %v168 = vld [vmem:[#allocation7 + $0xd8] sm:$0xff]
    %v169 = vld [vmem:[#allocation7 + $0xe0] sm:$0xff]
    %v170 = vld [vmem:[#allocation7 + $0xe8] sm:$0xff]
    %v171 = vld [vmem:[#allocation7 + $0xf0] sm:$0xff]
    %v172 = vld [vmem:[#allocation7 + $0xf8] sm:$0xff]
    %v173 = vld [vmem:[#allocation8] sm:$0xff]
    %v174 = vld [vmem:[#allocation8 + $0x8] sm:$0xff]
    %v175 = vld [vmem:[#allocation8 + $0x10] sm:$0xff]
    %v176 = vld [vmem:[#allocation8 + $0x18] sm:$0xff]
    %v177 = vld [vmem:[#allocation8 + $0x20] sm:$0xff]
    %v178 = vld [vmem:[#allocation8 + $0x28] sm:$0xff]
    %v179 = vld [vmem:[#allocation8 + $0x30] sm:$0xff]
    %v180 = vld [vmem:[#allocation8 + $0x38] sm:$0xff]
    %v181 = vld [vmem:[#allocation8 + $0x40] sm:$0xff]
    %v182 = vld [vmem:[#allocation8 + $0x48] sm:$0xff]
    %v183 = vld [vmem:[#allocation8 + $0x50] sm:$0xff]
    %v184 = vld [vmem:[#allocation8 + $0x58] sm:$0xff]
    %v185 = vld [vmem:[#allocation8 + $0x60] sm:$0xff]
    %v186 = vld [vmem:[#allocation8 + $0x68] sm:$0xff]
    %v187 = vld [vmem:[#allocation8 + $0x70] sm:$0xff]
    %v188 = vld [vmem:[#allocation8 + $0x78] sm:$0xff]
    %v189 = vld [vmem:[#allocation8 + $0x80] sm:$0xff]
    %v190 = vld [vmem:[#allocation8 + $0x88] sm:$0xff]
    %v191 = vld [vmem:[#allocation8 + $0x90] sm:$0xff]
    %v192 = vld [vmem:[#allocation8 + $0x98] sm:$0xff]
    %v193 = vld [vmem:[#allocation8 + $0xa0] sm:$0xff]
    %v194 = vld [vmem:[#allocation8 + $0xa8] sm:$0xff]
    %v195 = vld [vmem:[#allocation8 + $0xb0] sm:$0xff]
    %v196 = vld [vmem:[#allocation8 + $0xb8] sm:$0xff]
    %v197 = vld [vmem:[#allocation8 + $0xc0] sm:$0xff]
    %v198 = vld [vmem:[#allocation8 + $0xc8] sm:$0xff]
    %v199 = vld [vmem:[#allocation8 + $0xd0] sm:$0xff]
    %v200 = vld [vmem:[#allocation8 + $0xd8] sm:$0xff]
    %v201 = vld [vmem:[#allocation8 + $0xe0] sm:$0xff]
    %v202 = vld [vmem:[#allocation8 + $0xe8] sm:$0xff]
    %v203 = vld [vmem:[#allocation8 + $0xf0] sm:$0xff]
    %v204 = vld [vmem:[#allocation8 + $0xf8] sm:$0xff]
    %v205 = vld [vmem:[#allocation10] sm:$0xff]
    %v206 = vld [vmem:[#allocation10 + $0x8] sm:$0xff]
    %v207 = vld [vmem:[#allocation10 + $0x10] sm:$0xff]
    %v208 = vld [vmem:[#allocation10 + $0x18] sm:$0xff]
    %v209 = vld [vmem:[#allocation10 + $0x20] sm:$0xff]
    %v210 = vld [vmem:[#allocation10 + $0x28] sm:$0xff]
    %v211 = vld [vmem:[#allocation10 + $0x30] sm:$0xff]
    %v212 = vld [vmem:[#allocation10 + $0x38] sm:$0xff]
    %v213 = vld [vmem:[#allocation10 + $0x40] sm:$0xff]
    %v214 = vld [vmem:[#allocation10 + $0x48] sm:$0xff]
    %v215 = vld [vmem:[#allocation10 + $0x50] sm:$0xff]
    %v216 = vld [vmem:[#allocation10 + $0x58] sm:$0xff]
    %v217 = vld [vmem:[#allocation10 + $0x60] sm:$0xff]
    %v218 = vld [vmem:[#allocation10 + $0x68] sm:$0xff]
    %v219 = vld [vmem:[#allocation10 + $0x70] sm:$0xff]
    %v220 = vld [vmem:[#allocation10 + $0x78] sm:$0xff]
    %v221 = vld [vmem:[#allocation10 + $0x80] sm:$0xff]
    %v222 = vld [vmem:[#allocation10 + $0x88] sm:$0xff]
    %v223 = vld [vmem:[#allocation10 + $0x90] sm:$0xff]
    %v224 = vld [vmem:[#allocation10 + $0x98] sm:$0xff]
    %v225 = vld [vmem:[#allocation10 + $0xa0] sm:$0xff]
    %v226 = vld [vmem:[#allocation10 + $0xa8] sm:$0xff]
    %v227 = vld [vmem:[#allocation10 + $0xb0] sm:$0xff]
    %v228 = vld [vmem:[#allocation10 + $0xb8] sm:$0xff]
    %v229 = vld [vmem:[#allocation10 + $0xc0] sm:$0xff]
    %v230 = vld [vmem:[#allocation10 + $0xc8] sm:$0xff]
    %v231 = vld [vmem:[#allocation10 + $0xd0] sm:$0xff]
    %v232 = vld [vmem:[#allocation10 + $0xd8] sm:$0xff]
    %v233 = vld [vmem:[#allocation10 + $0xe0] sm:$0xff]
    %v234 = vld [vmem:[#allocation10 + $0xe8] sm:$0xff]
    %v235 = vld [vmem:[#allocation10 + $0xf0] sm:$0xff]
    %v236 = vld [vmem:[#allocation10 + $0xf8] sm:$0xff]
    %v237 = vld [vmem:[%s6] sm:$0xf]
    %v238 = vld [vmem:[%s7] sm:$0xf]
    %v239 = vld [vmem:[%s0] sm:$0xff]
    %v240 = vld [vmem:[#allocation2] sm:$0xf]
    %v241 = vld [vmem:[#allocation2 + $0x4] sm:$0xf]
    %v242 = vld [vmem:[#allocation2 + $0x8] sm:$0xf]
    %v243 = vld [vmem:[#allocation2 + $0xc] sm:$0xf]
    %v244 = vld [vmem:[#allocation2 + $0x10] sm:$0xf]
    %v245 = vld [vmem:[#allocation2 + $0x14] sm:$0xf]
    %v246 = vld [vmem:[#allocation2 + $0x18] sm:$0xf]
    %v247 = vld [vmem:[#allocation2 + $0x1c] sm:$0xf]
    %v256 = vunpack.c.l.b16 %v240
    %v257 = vunpack.c.l.b16 %v241
    %v258 = vunpack.c.l.b16 %v242
    %v259 = vunpack.c.l.b16 %v243
    %v260 = vunpack.c.l.b16 %v244
    %v261 = vunpack.c.l.b16 %v245
    %v262 = vunpack.c.l.b16 %v246
    %v263 = vunpack.c.l.b16 %v247
    %v264 = vpack.c.b16 %v257, %v256
    %v265 = vpack.c.b16 %v259, %v258
    %v266 = vpack.c.b16 %v261, %v260
    %v267 = vpack.c.b16 %v263, %v262
    %v304 = vunpack.c.l.b16 %v109
    %v305 = vunpack.c.h.b16 %v109
    %v306 = vunpack.c.l.b16 %v110
    %v307 = vunpack.c.h.b16 %v110
    %v308 = vunpack.c.l.b16 %v111
    %v309 = vunpack.c.h.b16 %v111
    %v310 = vunpack.c.l.b16 %v112
    %v311 = vunpack.c.h.b16 %v112
    %v312 = vunpack.c.l.b16 %v113
    %v313 = vunpack.c.h.b16 %v113
    %v314 = vunpack.c.l.b16 %v114
    %v315 = vunpack.c.h.b16 %v114
    %v316 = vunpack.c.l.b16 %v115
    %v317 = vunpack.c.h.b16 %v115
    %v318 = vunpack.c.l.b16 %v116
    %v319 = vunpack.c.h.b16 %v116
    %v320 = vunpack.c.l.b16 %v117
    %v321 = vunpack.c.h.b16 %v117
    %v322 = vunpack.c.l.b16 %v118
    %v323 = vunpack.c.h.b16 %v118
    %v324 = vunpack.c.l.b16 %v119
    %v325 = vunpack.c.h.b16 %v119
    %v326 = vunpack.c.l.b16 %v120
    %v327 = vunpack.c.h.b16 %v120
    %v328 = vunpack.c.l.b16 %v121
    %v329 = vunpack.c.h.b16 %v121
    %v330 = vunpack.c.l.b16 %v122
    %v331 = vunpack.c.h.b16 %v122
    %v332 = vunpack.c.l.b16 %v123
    %v333 = vunpack.c.h.b16 %v123
    %v334 = vunpack.c.l.b16 %v124
    %v335 = vunpack.c.h.b16 %v124
    %v336 = vunpack.c.l.b16 %v125
    %v337 = vunpack.c.h.b16 %v125
    %v338 = vunpack.c.l.b16 %v126
    %v339 = vunpack.c.h.b16 %v126
    %v340 = vunpack.c.l.b16 %v127
    %v341 = vunpack.c.h.b16 %v127
    %v342 = vunpack.c.l.b16 %v128
    %v343 = vunpack.c.h.b16 %v128
    %v344 = vunpack.c.l.b16 %v129
    %v345 = vunpack.c.h.b16 %v129
    %v346 = vunpack.c.l.b16 %v130
    %v347 = vunpack.c.h.b16 %v130
    %v348 = vunpack.c.l.b16 %v131
    %v349 = vunpack.c.h.b16 %v131
    %v350 = vunpack.c.l.b16 %v132
    %v351 = vunpack.c.h.b16 %v132
    %v352 = vunpack.c.l.b16 %v133
    %v353 = vunpack.c.h.b16 %v133
    %v354 = vunpack.c.l.b16 %v134
    %v355 = vunpack.c.h.b16 %v134
    %v356 = vunpack.c.l.b16 %v135
    %v357 = vunpack.c.h.b16 %v135
    %v358 = vunpack.c.l.b16 %v136
    %v359 = vunpack.c.h.b16 %v136
    %v360 = vunpack.c.l.b16 %v137
    %v361 = vunpack.c.h.b16 %v137
    %v362 = vunpack.c.l.b16 %v138
    %v363 = vunpack.c.h.b16 %v138
    %v364 = vunpack.c.l.b16 %v139
    %v365 = vunpack.c.h.b16 %v139
    %v366 = vunpack.c.l.b16 %v140
    %v367 = vunpack.c.h.b16 %v140
    %v368 = vpack.c.b16 %v308, %v304
    %v369 = vpack.c.b16 %v309, %v305
    %v370 = vpack.c.b16 %v310, %v306
    %v371 = vpack.c.b16 %v311, %v307
    %v372 = vpack.c.b16 %v316, %v312
    %v373 = vpack.c.b16 %v317, %v313
    %v374 = vpack.c.b16 %v318, %v314
    %v375 = vpack.c.b16 %v319, %v315
    %v376 = vpack.c.b16 %v324, %v320
    %v377 = vpack.c.b16 %v325, %v321
    %v378 = vpack.c.b16 %v326, %v322
    %v379 = vpack.c.b16 %v327, %v323
    %v380 = vpack.c.b16 %v332, %v328
    %v381 = vpack.c.b16 %v333, %v329
    %v382 = vpack.c.b16 %v334, %v330
    %v383 = vpack.c.b16 %v335, %v331
    %v384 = vpack.c.b16 %v340, %v336
    %v385 = vpack.c.b16 %v341, %v337
    %v386 = vpack.c.b16 %v342, %v338
    %v387 = vpack.c.b16 %v343, %v339
    %v388 = vpack.c.b16 %v348, %v344
    %v389 = vpack.c.b16 %v349, %v345
    %v390 = vpack.c.b16 %v350, %v346
    %v391 = vpack.c.b16 %v351, %v347
    %v392 = vpack.c.b16 %v356, %v352
    %v393 = vpack.c.b16 %v357, %v353
    %v394 = vpack.c.b16 %v358, %v354
    %v395 = vpack.c.b16 %v359, %v355
    %v396 = vpack.c.b16 %v364, %v360
    %v397 = vpack.c.b16 %v365, %v361
    %v398 = vpack.c.b16 %v366, %v362
    %v399 = vpack.c.b16 %v367, %v363
    %432 = vmatpush.bf16.msra.mxu0 %v396
    %433 = vmatpush.bf16.msra.mxu0 %v392
    %434 = vmatpush.bf16.msra.mxu0 %v388
    %435 = vmatpush.bf16.msra.mxu0 %v384
    %436 = vmatpush.bf16.msra.mxu0 %v380
    %437 = vmatpush.bf16.msra.mxu0 %v376
    %438 = vmatpush.bf16.msra.mxu0 %v372
    %439 = vmatpush.bf16.msra.mxu0 %v368
    %440 = vmatmul.bf16.gmra.mxu0 %v264
    %v441 = vpop.f32.mrf.mxu0
    %v442 = vadd.f32 0.0, %v441
    %v443 = vpop.f32.mrf.mxu0
    %v444 = vadd.f32 0.0, %v443
    %445 = vmatmul.bf16.gmra.mxu0 %v265
    %v446 = vpop.f32.mrf.mxu0
    %v447 = vadd.f32 0.0, %v446
    %v448 = vpop.f32.mrf.mxu0
    %v449 = vadd.f32 0.0, %v448
    %450 = vmatmul.bf16.gmra.mxu0 %v266
    %v451 = vpop.f32.mrf.mxu0
    %v452 = vadd.f32 0.0, %v451
    %v453 = vpop.f32.mrf.mxu0
    %v454 = vadd.f32 0.0, %v453
    %455 = vmatmul.bf16.gmra.mxu0 %v267
    %v456 = vpop.f32.mrf.mxu0
    %v457 = vadd.f32 0.0, %v456
    %v458 = vpop.f32.mrf.mxu0
    %v459 = vadd.f32 0.0, %v458
    %460 = vdwg.mxu0
    %461 = vmatpush.bf16.msra.mxu0 %v397
    %462 = vmatpush.bf16.msra.mxu0 %v393
    %463 = vmatpush.bf16.msra.mxu0 %v389
    %464 = vmatpush.bf16.msra.mxu0 %v385
    %465 = vmatpush.bf16.msra.mxu0 %v381
    %466 = vmatpush.bf16.msra.mxu0 %v377
    %467 = vmatpush.bf16.msra.mxu0 %v373
    %468 = vmatpush.bf16.msra.mxu0 %v369
    %469 = vmatmul.bf16.gmra.mxu0 %v264
    %v470 = vpop.f32.mrf.mxu0
    %v471 = vadd.f32 0.0, %v470
    %v472 = vpop.f32.mrf.mxu0
    %v473 = vadd.f32 0.0, %v472
    %474 = vmatmul.bf16.gmra.mxu0 %v265
    %v475 = vpop.f32.mrf.mxu0
    %v476 = vadd.f32 0.0, %v475
    %v477 = vpop.f32.mrf.mxu0
    %v478 = vadd.f32 0.0, %v477
    %479 = vmatmul.bf16.gmra.mxu0 %v266
    %v480 = vpop.f32.mrf.mxu0
    %v481 = vadd.f32 0.0, %v480
    %v482 = vpop.f32.mrf.mxu0
    %v483 = vadd.f32 0.0, %v482
    %484 = vmatmul.bf16.gmra.mxu0 %v267
    %v485 = vpop.f32.mrf.mxu0
    %v486 = vadd.f32 0.0, %v485
    %v487 = vpop.f32.mrf.mxu0
    %v488 = vadd.f32 0.0, %v487
    %489 = vdwg.mxu0
    %490 = vmatpush.bf16.msra.mxu0 %v398
    %491 = vmatpush.bf16.msra.mxu0 %v394
    %492 = vmatpush.bf16.msra.mxu0 %v390
    %493 = vmatpush.bf16.msra.mxu0 %v386
    %494 = vmatpush.bf16.msra.mxu0 %v382
    %495 = vmatpush.bf16.msra.mxu0 %v378
    %496 = vmatpush.bf16.msra.mxu0 %v374
    %497 = vmatpush.bf16.msra.mxu0 %v370
    %498 = vmatmul.bf16.gmra.mxu0 %v264
    %v499 = vpop.f32.mrf.mxu0
    %v500 = vadd.f32 0.0, %v499
    %v501 = vpop.f32.mrf.mxu0
    %v502 = vadd.f32 0.0, %v501
    %503 = vmatmul.bf16.gmra.mxu0 %v265
    %v504 = vpop.f32.mrf.mxu0
    %v505 = vadd.f32 0.0, %v504
    %v506 = vpop.f32.mrf.mxu0
    %v507 = vadd.f32 0.0, %v506
    %508 = vmatmul.bf16.gmra.mxu0 %v266
    %v509 = vpop.f32.mrf.mxu0
    %v510 = vadd.f32 0.0, %v509
    %v511 = vpop.f32.mrf.mxu0
    %v512 = vadd.f32 0.0, %v511
    %513 = vmatmul.bf16.gmra.mxu0 %v267
    %v514 = vpop.f32.mrf.mxu0
    %v515 = vadd.f32 0.0, %v514
    %v516 = vpop.f32.mrf.mxu0
    %v517 = vadd.f32 0.0, %v516
    %518 = vdwg.mxu0
    %519 = vmatpush.bf16.msra.mxu0 %v399
    %520 = vmatpush.bf16.msra.mxu0 %v395
    %521 = vmatpush.bf16.msra.mxu0 %v391
    %522 = vmatpush.bf16.msra.mxu0 %v387
    %523 = vmatpush.bf16.msra.mxu0 %v383
    %524 = vmatpush.bf16.msra.mxu0 %v379
    %525 = vmatpush.bf16.msra.mxu0 %v375
    %526 = vmatpush.bf16.msra.mxu0 %v371
    %527 = vmatmul.bf16.gmra.mxu0 %v264
    %v528 = vpop.f32.mrf.mxu0
    %v529 = vadd.f32 0.0, %v528
    %v530 = vpop.f32.mrf.mxu0
    %v531 = vadd.f32 0.0, %v530
    %532 = vmatmul.bf16.gmra.mxu0 %v265
    %v533 = vpop.f32.mrf.mxu0
    %v534 = vadd.f32 0.0, %v533
    %v535 = vpop.f32.mrf.mxu0
    %v536 = vadd.f32 0.0, %v535
    %537 = vmatmul.bf16.gmra.mxu0 %v266
    %v538 = vpop.f32.mrf.mxu0
    %v539 = vadd.f32 0.0, %v538
    %v540 = vpop.f32.mrf.mxu0
    %v541 = vadd.f32 0.0, %v540
    %542 = vmatmul.bf16.gmra.mxu0 %v267
    %v543 = vpop.f32.mrf.mxu0
    %v544 = vadd.f32 0.0, %v543
    %v545 = vpop.f32.mrf.mxu0
    %v546 = vadd.f32 0.0, %v545
    %547 = vdwg.mxu0
    %v549 = vperm.slane %v237, 0
    %v550 = vperm.slane %v237, 1
    %v551 = vperm.slane %v237, 2
    %v552 = vperm.slane %v237, 3
    %v557 = vadd.f32 %v442, %v549
    %v558 = vadd.f32 %v471, %v550
    %v559 = vadd.f32 %v500, %v551
    %v560 = vadd.f32 %v529, %v552
    %v561 = vadd.f32 %v444, %v549
    %v562 = vadd.f32 %v473, %v550
    %v563 = vadd.f32 %v502, %v551
    %v564 = vadd.f32 %v531, %v552
    %v565 = vadd.f32 %v447, %v549
    %v566 = vadd.f32 %v476, %v550
    %v567 = vadd.f32 %v505, %v551
    %v568 = vadd.f32 %v534, %v552
    %v569 = vadd.f32 %v449, %v549
    %v570 = vadd.f32 %v478, %v550
    %v571 = vadd.f32 %v507, %v551
    %v572 = vadd.f32 %v536, %v552
    %v573 = vadd.f32 %v452, %v549
    %v574 = vadd.f32 %v481, %v550
    %v575 = vadd.f32 %v510, %v551
    %v576 = vadd.f32 %v539, %v552
    %v577 = vadd.f32 %v454, %v549
    %v578 = vadd.f32 %v483, %v550
    %v579 = vadd.f32 %v512, %v551
    %v580 = vadd.f32 %v541, %v552
    %v581 = vadd.f32 %v457, %v549
    %v582 = vadd.f32 %v486, %v550
    %v583 = vadd.f32 %v515, %v551
    %v584 = vadd.f32 %v544, %v552
    %v585 = vadd.f32 %v459, %v549
    %v586 = vadd.f32 %v488, %v550
    %v587 = vadd.f32 %v517, %v551
    %v588 = vadd.f32 %v546, %v552
    %vm589 = vcmp.gt.s32.totalorder %v239, 0
    %v622 = vunpack.c.l.b16 %v173
    %v623 = vunpack.c.h.b16 %v173
    %v624 = vunpack.c.l.b16 %v174
    %v625 = vunpack.c.h.b16 %v174
    %v626 = vunpack.c.l.b16 %v175
    %v627 = vunpack.c.h.b16 %v175
    %v628 = vunpack.c.l.b16 %v176
    %v629 = vunpack.c.h.b16 %v176
    %v630 = vunpack.c.l.b16 %v177
    %v631 = vunpack.c.h.b16 %v177
    %v632 = vunpack.c.l.b16 %v178
    %v633 = vunpack.c.h.b16 %v178
    %v634 = vunpack.c.l.b16 %v179
    %v635 = vunpack.c.h.b16 %v179
    %v636 = vunpack.c.l.b16 %v180
    %v637 = vunpack.c.h.b16 %v180
    %v638 = vunpack.c.l.b16 %v181
    %v639 = vunpack.c.h.b16 %v181
    %v640 = vunpack.c.l.b16 %v182
    %v641 = vunpack.c.h.b16 %v182
    %v642 = vunpack.c.l.b16 %v183
    %v643 = vunpack.c.h.b16 %v183
    %v644 = vunpack.c.l.b16 %v184
    %v645 = vunpack.c.h.b16 %v184
    %v646 = vunpack.c.l.b16 %v185
    %v647 = vunpack.c.h.b16 %v185
    %v648 = vunpack.c.l.b16 %v186
    %v649 = vunpack.c.h.b16 %v186
    %v650 = vunpack.c.l.b16 %v187
    %v651 = vunpack.c.h.b16 %v187
    %v652 = vunpack.c.l.b16 %v188
    %v653 = vunpack.c.h.b16 %v188
    %v654 = vunpack.c.l.b16 %v189
    %v655 = vunpack.c.h.b16 %v189
    %v656 = vunpack.c.l.b16 %v190
    %v657 = vunpack.c.h.b16 %v190
    %v658 = vunpack.c.l.b16 %v191
    %v659 = vunpack.c.h.b16 %v191
    %v660 = vunpack.c.l.b16 %v192
    %v661 = vunpack.c.h.b16 %v192
    %v662 = vunpack.c.l.b16 %v193
    %v663 = vunpack.c.h.b16 %v193
    %v664 = vunpack.c.l.b16 %v194
    %v665 = vunpack.c.h.b16 %v194
    %v666 = vunpack.c.l.b16 %v195
    %v667 = vunpack.c.h.b16 %v195
    %v668 = vunpack.c.l.b16 %v196
    %v669 = vunpack.c.h.b16 %v196
    %v670 = vunpack.c.l.b16 %v197
    %v671 = vunpack.c.h.b16 %v197
    %v672 = vunpack.c.l.b16 %v198
    %v673 = vunpack.c.h.b16 %v198
    %v674 = vunpack.c.l.b16 %v199
    %v675 = vunpack.c.h.b16 %v199
    %v676 = vunpack.c.l.b16 %v200
    %v677 = vunpack.c.h.b16 %v200
    %v678 = vunpack.c.l.b16 %v201
    %v679 = vunpack.c.h.b16 %v201
    %v680 = vunpack.c.l.b16 %v202
    %v681 = vunpack.c.h.b16 %v202
    %v682 = vunpack.c.l.b16 %v203
    %v683 = vunpack.c.h.b16 %v203
    %v684 = vunpack.c.l.b16 %v204
    %v685 = vunpack.c.h.b16 %v204
    %v686 = vpack.c.b16 %v626, %v622
    %v687 = vpack.c.b16 %v627, %v623
    %v688 = vpack.c.b16 %v628, %v624
    %v689 = vpack.c.b16 %v629, %v625
    %v690 = vpack.c.b16 %v634, %v630
    %v691 = vpack.c.b16 %v635, %v631
    %v692 = vpack.c.b16 %v636, %v632
    %v693 = vpack.c.b16 %v637, %v633
    %v694 = vpack.c.b16 %v642, %v638
    %v695 = vpack.c.b16 %v643, %v639
    %v696 = vpack.c.b16 %v644, %v640
    %v697 = vpack.c.b16 %v645, %v641
    %v698 = vpack.c.b16 %v650, %v646
    %v699 = vpack.c.b16 %v651, %v647
    %v700 = vpack.c.b16 %v652, %v648
    %v701 = vpack.c.b16 %v653, %v649
    %v702 = vpack.c.b16 %v658, %v654
    %v703 = vpack.c.b16 %v659, %v655
    %v704 = vpack.c.b16 %v660, %v656
    %v705 = vpack.c.b16 %v661, %v657
    %v706 = vpack.c.b16 %v666, %v662
    %v707 = vpack.c.b16 %v667, %v663
    %v708 = vpack.c.b16 %v668, %v664
    %v709 = vpack.c.b16 %v669, %v665
    %v710 = vpack.c.b16 %v674, %v670
    %v711 = vpack.c.b16 %v675, %v671
    %v712 = vpack.c.b16 %v676, %v672
    %v713 = vpack.c.b16 %v677, %v673
    %v714 = vpack.c.b16 %v682, %v678
    %v715 = vpack.c.b16 %v683, %v679
    %v716 = vpack.c.b16 %v684, %v680
    %v717 = vpack.c.b16 %v685, %v681
    %750 = vmatpush.bf16.msra.mxu0 %v714
    %751 = vmatpush.bf16.msra.mxu0 %v710
    %752 = vmatpush.bf16.msra.mxu0 %v706
    %753 = vmatpush.bf16.msra.mxu0 %v702
    %754 = vmatpush.bf16.msra.mxu0 %v698
    %755 = vmatpush.bf16.msra.mxu0 %v694
    %756 = vmatpush.bf16.msra.mxu0 %v690
    %757 = vmatpush.bf16.msra.mxu0 %v686
    %758 = vmatmul.bf16.gmra.mxu0 0
    %v759 = vpop.f32.mrf.mxu0
    %v760 = vadd.f32 0.0, %v759
    %v761 = vpop.f32.mrf.mxu0
    %762 = vdwg.mxu0
    %763 = vmatpush.bf16.msra.mxu0 %v715
    %764 = vmatpush.bf16.msra.mxu0 %v711
    %765 = vmatpush.bf16.msra.mxu0 %v707
    %766 = vmatpush.bf16.msra.mxu0 %v703
    %767 = vmatpush.bf16.msra.mxu0 %v699
    %768 = vmatpush.bf16.msra.mxu0 %v695
    %769 = vmatpush.bf16.msra.mxu0 %v691
    %770 = vmatpush.bf16.msra.mxu0 %v687
    %771 = vmatmul.bf16.gmra.mxu0 0
    %v772 = vpop.f32.mrf.mxu0
    %v773 = vadd.f32 0.0, %v772
    %v774 = vpop.f32.mrf.mxu0
    %775 = vdwg.mxu0
    %776 = vmatpush.bf16.msra.mxu0 %v716
    %777 = vmatpush.bf16.msra.mxu0 %v712
    %778 = vmatpush.bf16.msra.mxu0 %v708
    %779 = vmatpush.bf16.msra.mxu0 %v704
    %780 = vmatpush.bf16.msra.mxu0 %v700
    %781 = vmatpush.bf16.msra.mxu0 %v696
    %782 = vmatpush.bf16.msra.mxu0 %v692
    %783 = vmatpush.bf16.msra.mxu0 %v688
    %784 = vmatmul.bf16.gmra.mxu0 0
    %v785 = vpop.f32.mrf.mxu0
    %v786 = vadd.f32 0.0, %v785
    %v787 = vpop.f32.mrf.mxu0
    %788 = vdwg.mxu0
    %789 = vmatpush.bf16.msra.mxu0 %v717
    %790 = vmatpush.bf16.msra.mxu0 %v713
    %791 = vmatpush.bf16.msra.mxu0 %v709
    %792 = vmatpush.bf16.msra.mxu0 %v705
    %793 = vmatpush.bf16.msra.mxu0 %v701
    %794 = vmatpush.bf16.msra.mxu0 %v697
    %795 = vmatpush.bf16.msra.mxu0 %v693
    %796 = vmatpush.bf16.msra.mxu0 %v689
    %797 = vmatmul.bf16.gmra.mxu0 0
    %v798 = vpop.f32.mrf.mxu0
    %v799 = vadd.f32 0.0, %v798
    %v800 = vpop.f32.mrf.mxu0
    %801 = vdwg.mxu0
    %v802 = vadd.f32 %v557, %v760
    %v803 = vadd.f32 %v558, %v773
    %v804 = vadd.f32 %v559, %v786
    %v805 = vadd.f32 %v560, %v799
    %v806 = vxor.u32 %v802, 2147483648
    %v807 = vmul.f32 %v806, 1.442695
    %v808 = vpow.pop %v807
    %v809 = vadd.f32 %v808, 1.0
    %v810 = vrcp.pop %v809
    %v811 = vmul.f32 %v809, %v810
    %v812 = vsub.f32 1.0, %v811
    %v813 = vmul.f32 %v810, %v812
    %v814 = vadd.f32 %v810, %v813
    %vm815 = vweird.f32 %v809
    %vm816 = vweird.f32 %v810
    %vm817 = vmor %vm815, %vm816
    %v818 = vsel %vm817, %v810, %v814
    %v819 = vand.u32 2147483647, %v809
    %vm820 = vcmp.eq.f32.partialorder %v819, 8.507059e+37
    %v821 = vand.u32 %v809, 2147483648
    %v822 = vor.u32 1.1754944e-38, %v821
    %v823 = vsel %vm820, %v822, %v818
    %v824 = vmul.f32 1.0, %v823
    %v825 = vxor.u32 %v803, 2147483648
    %v826 = vmul.f32 %v825, 1.442695
    %v827 = vpow.pop %v826
    %v828 = vadd.f32 %v827, 1.0
    %v829 = vrcp.pop %v828
    %v830 = vmul.f32 %v828, %v829
    %v831 = vsub.f32 1.0, %v830
    %v832 = vmul.f32 %v829, %v831
    %v833 = vadd.f32 %v829, %v832
    %vm834 = vweird.f32 %v828
    %vm835 = vweird.f32 %v829
    %vm836 = vmor %vm834, %vm835
    %v837 = vsel %vm836, %v829, %v833
    %v838 = vand.u32 2147483647, %v828
    %vm839 = vcmp.eq.f32.partialorder %v838, 8.507059e+37
    %v840 = vand.u32 %v828, 2147483648
    %v841 = vor.u32 1.1754944e-38, %v840
    %v842 = vsel %vm839, %v841, %v837
    %v843 = vmul.f32 1.0, %v842
    %v844 = vtanh.pop %v804
    %v845 = vxor.u32 %v805, 2147483648
    %v846 = vmul.f32 %v845, 1.442695
    %v847 = vpow.pop %v846
    %v848 = vadd.f32 %v847, 1.0
    %v849 = vrcp.pop %v848
    %v850 = vmul.f32 %v848, %v849
    %v851 = vsub.f32 1.0, %v850
    %v852 = vmul.f32 %v849, %v851
    %v853 = vadd.f32 %v849, %v852
    %vm854 = vweird.f32 %v848
    %vm855 = vweird.f32 %v849
    %vm856 = vmor %vm854, %vm855
    %v857 = vsel %vm856, %v849, %v853
    %v858 = vand.u32 2147483647, %v848
    %vm859 = vcmp.eq.f32.partialorder %v858, 8.507059e+37
    %v860 = vand.u32 %v848, 2147483648
    %v861 = vor.u32 1.1754944e-38, %v860
    %v862 = vsel %vm859, %v861, %v857
    %v863 = vmul.f32 1.0, %v862
    %v864 = vmul.f32 %v843, 0.0
    %v865 = vmul.f32 %v824, %v844
    %v866 = vadd.f32 %v864, %v865
    %v867 = vtanh.pop %v866
    %v868 = vmul.f32 %v863, %v867
    %v869 = vsel %vm589, 1, 0
    %870 = vset.pattern.permute.xlu0 0
    %871 = vperm.xlu0 %870, %v869
    %v872 = vpop.permute.xlu0 %871
    %vm873 = vcmp.eq.s32.totalorder %v872, 1
    %v874 = vsel %vm873, %v866, 0.0
    %v875 = vsel %vm873, %v868, 0.0
    %v876 = vpack.c.bf16 %v875, %v875
    %v909 = vunpack.c.l.b16 %v205
    %v910 = vunpack.c.h.b16 %v205
    %v911 = vunpack.c.l.b16 %v206
    %v912 = vunpack.c.h.b16 %v206
    %v913 = vunpack.c.l.b16 %v207
    %v914 = vunpack.c.h.b16 %v207
    %v915 = vunpack.c.l.b16 %v208
    %v916 = vunpack.c.h.b16 %v208
    %v917 = vunpack.c.l.b16 %v209
    %v918 = vunpack.c.h.b16 %v209
    %v919 = vunpack.c.l.b16 %v210
    %v920 = vunpack.c.h.b16 %v210
    %v921 = vunpack.c.l.b16 %v211
    %v922 = vunpack.c.h.b16 %v211
    %v923 = vunpack.c.l.b16 %v212
    %v924 = vunpack.c.h.b16 %v212
    %v925 = vunpack.c.l.b16 %v213
    %v926 = vunpack.c.h.b16 %v213
    %v927 = vunpack.c.l.b16 %v214
    %v928 = vunpack.c.h.b16 %v214
    %v929 = vunpack.c.l.b16 %v215
    %v930 = vunpack.c.h.b16 %v215
    %v931 = vunpack.c.l.b16 %v216
    %v932 = vunpack.c.h.b16 %v216
    %v933 = vunpack.c.l.b16 %v217
    %v934 = vunpack.c.h.b16 %v217
    %v935 = vunpack.c.l.b16 %v218
    %v936 = vunpack.c.h.b16 %v218
    %v937 = vunpack.c.l.b16 %v219
    %v938 = vunpack.c.h.b16 %v219
    %v939 = vunpack.c.l.b16 %v220
    %v940 = vunpack.c.h.b16 %v220
    %v941 = vunpack.c.l.b16 %v221
    %v942 = vunpack.c.h.b16 %v221
    %v943 = vunpack.c.l.b16 %v222
    %v944 = vunpack.c.h.b16 %v222
    %v945 = vunpack.c.l.b16 %v223
    %v946 = vunpack.c.h.b16 %v223
    %v947 = vunpack.c.l.b16 %v224
    %v948 = vunpack.c.h.b16 %v224
    %v949 = vunpack.c.l.b16 %v225
    %v950 = vunpack.c.h.b16 %v225
    %v951 = vunpack.c.l.b16 %v226
    %v952 = vunpack.c.h.b16 %v226
    %v953 = vunpack.c.l.b16 %v227
    %v954 = vunpack.c.h.b16 %v227
    %v955 = vunpack.c.l.b16 %v228
    %v956 = vunpack.c.h.b16 %v228
    %v957 = vunpack.c.l.b16 %v229
    %v958 = vunpack.c.h.b16 %v229
    %v959 = vunpack.c.l.b16 %v230
    %v960 = vunpack.c.h.b16 %v230
    %v961 = vunpack.c.l.b16 %v231
    %v962 = vunpack.c.h.b16 %v231
    %v963 = vunpack.c.l.b16 %v232
    %v964 = vunpack.c.h.b16 %v232
    %v965 = vunpack.c.l.b16 %v233
    %v966 = vunpack.c.h.b16 %v233
    %v967 = vunpack.c.l.b16 %v234
    %v968 = vunpack.c.h.b16 %v234
    %v969 = vunpack.c.l.b16 %v235
    %v970 = vunpack.c.h.b16 %v235
    %v971 = vunpack.c.l.b16 %v236
    %v972 = vunpack.c.h.b16 %v236
    %v973 = vpack.c.b16 %v913, %v909
    %v974 = vpack.c.b16 %v914, %v910
    %v975 = vpack.c.b16 %v915, %v911
    %v976 = vpack.c.b16 %v916, %v912
    %v977 = vpack.c.b16 %v921, %v917
    %v978 = vpack.c.b16 %v922, %v918
    %v979 = vpack.c.b16 %v923, %v919
    %v980 = vpack.c.b16 %v924, %v920
    %v981 = vpack.c.b16 %v929, %v925
    %v982 = vpack.c.b16 %v930, %v926
    %v983 = vpack.c.b16 %v931, %v927
    %v984 = vpack.c.b16 %v932, %v928
    %v985 = vpack.c.b16 %v937, %v933
    %v986 = vpack.c.b16 %v938, %v934
    %v987 = vpack.c.b16 %v939, %v935
    %v988 = vpack.c.b16 %v940, %v936
    %v989 = vpack.c.b16 %v945, %v941
    %v990 = vpack.c.b16 %v946, %v942
    %v991 = vpack.c.b16 %v947, %v943
    %v992 = vpack.c.b16 %v948, %v944
    %v993 = vpack.c.b16 %v953, %v949
    %v994 = vpack.c.b16 %v954, %v950
    %v995 = vpack.c.b16 %v955, %v951
    %v996 = vpack.c.b16 %v956, %v952
    %v997 = vpack.c.b16 %v961, %v957
    %v998 = vpack.c.b16 %v962, %v958
    %v999 = vpack.c.b16 %v963, %v959
    %v1000 = vpack.c.b16 %v964, %v960
    %v1001 = vpack.c.b16 %v969, %v965
    %v1002 = vpack.c.b16 %v970, %v966
    %v1003 = vpack.c.b16 %v971, %v967
    %v1004 = vpack.c.b16 %v972, %v968
    %1037 = vmatpush.bf16.msra.mxu0 %v1001
    %1038 = vmatpush.bf16.msra.mxu0 %v997
    %1039 = vmatpush.bf16.msra.mxu0 %v993
    %1040 = vmatpush.bf16.msra.mxu0 %v989
    %1041 = vmatpush.bf16.msra.mxu0 %v985
    %1042 = vmatpush.bf16.msra.mxu0 %v981
    %1043 = vmatpush.bf16.msra.mxu0 %v977
    %1044 = vmatpush.bf16.msra.mxu0 %v973
    %1045 = vmatmul.bf16.gmra.mxu0 0
    %v1046 = vpop.f32.mrf.mxu0
    %v1047 = vadd.f32 0.0, %v1046
    %v1048 = vpop.f32.mrf.mxu0
    %1049 = vdwg.mxu0
    %1050 = vmatpush.bf16.msra.mxu0 %v1002
    %1051 = vmatpush.bf16.msra.mxu0 %v998
    %1052 = vmatpush.bf16.msra.mxu0 %v994
    %1053 = vmatpush.bf16.msra.mxu0 %v990
    %1054 = vmatpush.bf16.msra.mxu0 %v986
    %1055 = vmatpush.bf16.msra.mxu0 %v982
    %1056 = vmatpush.bf16.msra.mxu0 %v978
    %1057 = vmatpush.bf16.msra.mxu0 %v974
    %1058 = vmatmul.bf16.gmra.mxu0 0
    %v1059 = vpop.f32.mrf.mxu0
    %v1060 = vadd.f32 0.0, %v1059
    %v1061 = vpop.f32.mrf.mxu0
    %1062 = vdwg.mxu0
    %1063 = vmatpush.bf16.msra.mxu0 %v1003
    %1064 = vmatpush.bf16.msra.mxu0 %v999
    %1065 = vmatpush.bf16.msra.mxu0 %v995
    %1066 = vmatpush.bf16.msra.mxu0 %v991
    %1067 = vmatpush.bf16.msra.mxu0 %v987
    %1068 = vmatpush.bf16.msra.mxu0 %v983
    %1069 = vmatpush.bf16.msra.mxu0 %v979
    %1070 = vmatpush.bf16.msra.mxu0 %v975
    %1071 = vmatmul.bf16.gmra.mxu0 0
    %v1072 = vpop.f32.mrf.mxu0
    %v1073 = vadd.f32 0.0, %v1072
    %v1074 = vpop.f32.mrf.mxu0
    %1075 = vdwg.mxu0
    %1076 = vmatpush.bf16.msra.mxu0 %v1004
    %1077 = vmatpush.bf16.msra.mxu0 %v1000
    %1078 = vmatpush.bf16.msra.mxu0 %v996
    %1079 = vmatpush.bf16.msra.mxu0 %v992
    %1080 = vmatpush.bf16.msra.mxu0 %v988
    %1081 = vmatpush.bf16.msra.mxu0 %v984
    %1082 = vmatpush.bf16.msra.mxu0 %v980
    %1083 = vmatpush.bf16.msra.mxu0 %v976
    %1084 = vmatmul.bf16.gmra.mxu0 0
    %v1085 = vpop.f32.mrf.mxu0
    %v1086 = vadd.f32 0.0, %v1085
    %v1087 = vpop.f32.mrf.mxu0
    %1088 = vdwg.mxu0
    %v1121 = vunpack.c.l.b16 %v141
    %v1122 = vunpack.c.h.b16 %v141
    %v1123 = vunpack.c.l.b16 %v142
    %v1124 = vunpack.c.h.b16 %v142
    %v1125 = vunpack.c.l.b16 %v143
    %v1126 = vunpack.c.h.b16 %v143
    %v1127 = vunpack.c.l.b16 %v144
    %v1128 = vunpack.c.h.b16 %v144
    %v1129 = vunpack.c.l.b16 %v145
    %v1130 = vunpack.c.h.b16 %v145
    %v1131 = vunpack.c.l.b16 %v146
    %v1132 = vunpack.c.h.b16 %v146
    %v1133 = vunpack.c.l.b16 %v147
    %v1134 = vunpack.c.h.b16 %v147
    %v1135 = vunpack.c.l.b16 %v148
    %v1136 = vunpack.c.h.b16 %v148
    %v1137 = vunpack.c.l.b16 %v149
    %v1138 = vunpack.c.h.b16 %v149
    %v1139 = vunpack.c.l.b16 %v150
    %v1140 = vunpack.c.h.b16 %v150
    %v1141 = vunpack.c.l.b16 %v151
    %v1142 = vunpack.c.h.b16 %v151
    %v1143 = vunpack.c.l.b16 %v152
    %v1144 = vunpack.c.h.b16 %v152
    %v1145 = vunpack.c.l.b16 %v153
    %v1146 = vunpack.c.h.b16 %v153
    %v1147 = vunpack.c.l.b16 %v154
    %v1148 = vunpack.c.h.b16 %v154
    %v1149 = vunpack.c.l.b16 %v155
    %v1150 = vunpack.c.h.b16 %v155
    %v1151 = vunpack.c.l.b16 %v156
    %v1152 = vunpack.c.h.b16 %v156
    %v1153 = vunpack.c.l.b16 %v157
    %v1154 = vunpack.c.h.b16 %v157
    %v1155 = vunpack.c.l.b16 %v158
    %v1156 = vunpack.c.h.b16 %v158
    %v1157 = vunpack.c.l.b16 %v159
    %v1158 = vunpack.c.h.b16 %v159
    %v1159 = vunpack.c.l.b16 %v160
    %v1160 = vunpack.c.h.b16 %v160
    %v1161 = vunpack.c.l.b16 %v161
    %v1162 = vunpack.c.h.b16 %v161
    %v1163 = vunpack.c.l.b16 %v162
    %v1164 = vunpack.c.h.b16 %v162
    %v1165 = vunpack.c.l.b16 %v163
    %v1166 = vunpack.c.h.b16 %v163
    %v1167 = vunpack.c.l.b16 %v164
    %v1168 = vunpack.c.h.b16 %v164
    %v1169 = vunpack.c.l.b16 %v165
    %v1170 = vunpack.c.h.b16 %v165
    %v1171 = vunpack.c.l.b16 %v166
    %v1172 = vunpack.c.h.b16 %v166
    %v1173 = vunpack.c.l.b16 %v167
    %v1174 = vunpack.c.h.b16 %v167
    %v1175 = vunpack.c.l.b16 %v168
    %v1176 = vunpack.c.h.b16 %v168
    %v1177 = vunpack.c.l.b16 %v169
    %v1178 = vunpack.c.h.b16 %v169
    %v1179 = vunpack.c.l.b16 %v170
    %v1180 = vunpack.c.h.b16 %v170
    %v1181 = vunpack.c.l.b16 %v171
    %v1182 = vunpack.c.h.b16 %v171
    %v1183 = vunpack.c.l.b16 %v172
    %v1184 = vunpack.c.h.b16 %v172
    %v1185 = vpack.c.b16 %v1125, %v1121
    %v1186 = vpack.c.b16 %v1126, %v1122
    %v1187 = vpack.c.b16 %v1127, %v1123
    %v1188 = vpack.c.b16 %v1128, %v1124
    %v1189 = vpack.c.b16 %v1133, %v1129
    %v1190 = vpack.c.b16 %v1134, %v1130
    %v1191 = vpack.c.b16 %v1135, %v1131
    %v1192 = vpack.c.b16 %v1136, %v1132
    %v1193 = vpack.c.b16 %v1141, %v1137
    %v1194 = vpack.c.b16 %v1142, %v1138
    %v1195 = vpack.c.b16 %v1143, %v1139
    %v1196 = vpack.c.b16 %v1144, %v1140
    %v1197 = vpack.c.b16 %v1149, %v1145
    %v1198 = vpack.c.b16 %v1150, %v1146
    %v1199 = vpack.c.b16 %v1151, %v1147
    %v1200 = vpack.c.b16 %v1152, %v1148
    %v1201 = vpack.c.b16 %v1157, %v1153
    %v1202 = vpack.c.b16 %v1158, %v1154
    %v1203 = vpack.c.b16 %v1159, %v1155
    %v1204 = vpack.c.b16 %v1160, %v1156
    %v1205 = vpack.c.b16 %v1165, %v1161
    %v1206 = vpack.c.b16 %v1166, %v1162
    %v1207 = vpack.c.b16 %v1167, %v1163
    %v1208 = vpack.c.b16 %v1168, %v1164
    %v1209 = vpack.c.b16 %v1173, %v1169
    %v1210 = vpack.c.b16 %v1174, %v1170
    %v1211 = vpack.c.b16 %v1175, %v1171
    %v1212 = vpack.c.b16 %v1176, %v1172
    %v1213 = vpack.c.b16 %v1181, %v1177
    %v1214 = vpack.c.b16 %v1182, %v1178
    %v1215 = vpack.c.b16 %v1183, %v1179
    %v1216 = vpack.c.b16 %v1184, %v1180
    %1249 = vmatpush.bf16.msra.mxu0 %v1213
    %1250 = vmatpush.bf16.msra.mxu0 %v1209
    %1251 = vmatpush.bf16.msra.mxu0 %v1205
    %1252 = vmatpush.bf16.msra.mxu0 %v1201
    %1253 = vmatpush.bf16.msra.mxu0 %v1197
    %1254 = vmatpush.bf16.msra.mxu0 %v1193
    %1255 = vmatpush.bf16.msra.mxu0 %v1189
    %1256 = vmatpush.bf16.msra.mxu0 %v1185
    %1257 = vmatmul.bf16.gmra.mxu0 %v876
    %v1258 = vpop.f32.mrf.mxu0
    %v1259 = vadd.f32 %v1047, %v1258
    %v1260 = vpop.f32.mrf.mxu0
    %1261 = vdwg.mxu0
    %1262 = vmatpush.bf16.msra.mxu0 %v1214
    %1263 = vmatpush.bf16.msra.mxu0 %v1210
    %1264 = vmatpush.bf16.msra.mxu0 %v1206
    %1265 = vmatpush.bf16.msra.mxu0 %v1202
    %1266 = vmatpush.bf16.msra.mxu0 %v1198
    %1267 = vmatpush.bf16.msra.mxu0 %v1194
    %1268 = vmatpush.bf16.msra.mxu0 %v1190
    %1269 = vmatpush.bf16.msra.mxu0 %v1186
    %1270 = vmatmul.bf16.gmra.mxu0 %v876
    %v1271 = vpop.f32.mrf.mxu0
    %v1272 = vadd.f32 %v1060, %v1271
    %v1273 = vpop.f32.mrf.mxu0
    %1274 = vdwg.mxu0
    %1275 = vmatpush.bf16.msra.mxu0 %v1215
    %1276 = vmatpush.bf16.msra.mxu0 %v1211
    %1277 = vmatpush.bf16.msra.mxu0 %v1207
    %1278 = vmatpush.bf16.msra.mxu0 %v1203
    %1279 = vmatpush.bf16.msra.mxu0 %v1199
    %1280 = vmatpush.bf16.msra.mxu0 %v1195
    %1281 = vmatpush.bf16.msra.mxu0 %v1191
    %1282 = vmatpush.bf16.msra.mxu0 %v1187
    %1283 = vmatmul.bf16.gmra.mxu0 %v876
    %v1284 = vpop.f32.mrf.mxu0
    %v1285 = vadd.f32 %v1073, %v1284
    %v1286 = vpop.f32.mrf.mxu0
    %1287 = vdwg.mxu0
    %1288 = vmatpush.bf16.msra.mxu0 %v1216
    %1289 = vmatpush.bf16.msra.mxu0 %v1212
    %1290 = vmatpush.bf16.msra.mxu0 %v1208
    %1291 = vmatpush.bf16.msra.mxu0 %v1204
    %1292 = vmatpush.bf16.msra.mxu0 %v1200
    %1293 = vmatpush.bf16.msra.mxu0 %v1196
    %1294 = vmatpush.bf16.msra.mxu0 %v1192
    %1295 = vmatpush.bf16.msra.mxu0 %v1188
    %1296 = vmatmul.bf16.gmra.mxu0 %v876
    %v1297 = vpop.f32.mrf.mxu0
    %v1298 = vadd.f32 %v1086, %v1297
    %v1299 = vpop.f32.mrf.mxu0
    %1300 = vdwg.mxu0
    %v1302 = vperm.slane %v238, 0
    %v1303 = vperm.slane %v238, 1
    %v1304 = vperm.slane %v238, 2
    %v1305 = vperm.slane %v238, 3
    %v1310 = vadd.f32 %v1259, %v1302
    %v1311 = vadd.f32 %v1272, %v1303
    %v1312 = vadd.f32 %v1285, %v1304
    %v1313 = vadd.f32 %v1298, %v1305
    %v1314 = vxor.u32 %v1310, 2147483648
    %v1315 = vmul.f32 %v1314, 1.442695
    %v1316 = vpow.pop %v1315
    %v1317 = vadd.f32 %v1316, 1.0
    %v1318 = vrcp.pop %v1317
    %v1319 = vmul.f32 %v1317, %v1318
    %v1320 = vsub.f32 1.0, %v1319
    %v1321 = vmul.f32 %v1318, %v1320
    %v1322 = vadd.f32 %v1318, %v1321
    %vm1323 = vweird.f32 %v1317
    %vm1324 = vweird.f32 %v1318
    %vm1325 = vmor %vm1323, %vm1324
    %v1326 = vsel %vm1325, %v1318, %v1322
    %v1327 = vand.u32 2147483647, %v1317
    %vm1328 = vcmp.eq.f32.partialorder %v1327, 8.507059e+37
    %v1329 = vand.u32 %v1317, 2147483648
    %v1330 = vor.u32 1.1754944e-38, %v1329
    %v1331 = vsel %vm1328, %v1330, %v1326
    %v1332 = vmul.f32 1.0, %v1331
    %v1333 = vxor.u32 %v1311, 2147483648
    %v1334 = vmul.f32 %v1333, 1.442695
    %v1335 = vpow.pop %v1334
    %v1336 = vadd.f32 %v1335, 1.0
    %v1337 = vrcp.pop %v1336
    %v1338 = vmul.f32 %v1336, %v1337
    %v1339 = vsub.f32 1.0, %v1338
    %v1340 = vmul.f32 %v1337, %v1339
    %v1341 = vadd.f32 %v1337, %v1340
    %vm1342 = vweird.f32 %v1336
    %vm1343 = vweird.f32 %v1337
    %vm1344 = vmor %vm1342, %vm1343
    %v1345 = vsel %vm1344, %v1337, %v1341
    %v1346 = vand.u32 2147483647, %v1336
    %vm1347 = vcmp.eq.f32.partialorder %v1346, 8.507059e+37
    %v1348 = vand.u32 %v1336, 2147483648
    %v1349 = vor.u32 1.1754944e-38, %v1348
    %v1350 = vsel %vm1347, %v1349, %v1345
    %v1351 = vmul.f32 1.0, %v1350
    %v1352 = vtanh.pop %v1312
    %v1353 = vxor.u32 %v1313, 2147483648
    %v1354 = vmul.f32 %v1353, 1.442695
    %v1355 = vpow.pop %v1354
    %v1356 = vadd.f32 %v1355, 1.0
    %v1357 = vrcp.pop %v1356
    %v1358 = vmul.f32 %v1356, %v1357
    %v1359 = vsub.f32 1.0, %v1358
    %v1360 = vmul.f32 %v1357, %v1359
    %v1361 = vadd.f32 %v1357, %v1360
    %vm1362 = vweird.f32 %v1356
    %vm1363 = vweird.f32 %v1357
    %vm1364 = vmor %vm1362, %vm1363
    %v1365 = vsel %vm1364, %v1357, %v1361
    %v1366 = vand.u32 2147483647, %v1356
    %vm1367 = vcmp.eq.f32.partialorder %v1366, 8.507059e+37
    %v1368 = vand.u32 %v1356, 2147483648
    %v1369 = vor.u32 1.1754944e-38, %v1368
    %v1370 = vsel %vm1367, %v1369, %v1365
    %v1371 = vmul.f32 1.0, %v1370
    %v1372 = vmul.f32 %v1351, 0.0
    %v1373 = vmul.f32 %v1332, %v1352
    %v1374 = vadd.f32 %v1372, %v1373
    %v1375 = vtanh.pop %v1374
    %v1376 = vmul.f32 %v1371, %v1375
    %v1377 = vsel %vm873, %v1374, 0.0
    %v1378 = vsel %vm873, %v1376, 0.0
    %v1379 = vpack.c.bf16 %v1378, %v1378
    %1380 = vst [vmem:[#allocation11] sm:$0xf] %v1379
    %vm1381 = vcmp.gt.s32.totalorder %v239, 1
    %1382 = vmatpush.bf16.msra.mxu0 %v714
    %1383 = vmatpush.bf16.msra.mxu0 %v710
    %1384 = vmatpush.bf16.msra.mxu0 %v706
    %1385 = vmatpush.bf16.msra.mxu0 %v702
    %1386 = vmatpush.bf16.msra.mxu0 %v698
    %1387 = vmatpush.bf16.msra.mxu0 %v694
    %1388 = vmatpush.bf16.msra.mxu0 %v690
    %1389 = vmatpush.bf16.msra.mxu0 %v686
    %1390 = vmatmul.bf16.gmra.mxu0 %v876
    %v1391 = vpop.f32.mrf.mxu0
    %v1392 = vadd.f32 0.0, %v1391
    %v1393 = vpop.f32.mrf.mxu0
    %1394 = vdwg.mxu0
    %1395 = vmatpush.bf16.msra.mxu0 %v715
    %1396 = vmatpush.bf16.msra.mxu0 %v711
    %1397 = vmatpush.bf16.msra.mxu0 %v707
    %1398 = vmatpush.bf16.msra.mxu0 %v703
    %1399 = vmatpush.bf16.msra.mxu0 %v699
    %1400 = vmatpush.bf16.msra.mxu0 %v695
    %1401 = vmatpush.bf16.msra.mxu0 %v691
    %1402 = vmatpush.bf16.msra.mxu0 %v687
    %1403 = vmatmul.bf16.gmra.mxu0 %v876
    %v1404 = vpop.f32.mrf.mxu0
    %v1405 = vadd.f32 0.0, %v1404
    %v1406 = vpop.f32.mrf.mxu0
    %1407 = vdwg.mxu0
    %1408 = vmatpush.bf16.msra.mxu0 %v716
    %1409 = vmatpush.bf16.msra.mxu0 %v712
    %1410 = vmatpush.bf16.msra.mxu0 %v708
    %1411 = vmatpush.bf16.msra.mxu0 %v704
    %1412 = vmatpush.bf16.msra.mxu0 %v700
    %1413 = vmatpush.bf16.msra.mxu0 %v696
    %1414 = vmatpush.bf16.msra.mxu0 %v692
    %1415 = vmatpush.bf16.msra.mxu0 %v688
    %1416 = vmatmul.bf16.gmra.mxu0 %v876
    %v1417 = vpop.f32.mrf.mxu0
    %v1418 = vadd.f32 0.0, %v1417
    %v1419 = vpop.f32.mrf.mxu0
    %1420 = vdwg.mxu0
    %1421 = vmatpush.bf16.msra.mxu0 %v717
    %1422 = vmatpush.bf16.msra.mxu0 %v713
    %1423 = vmatpush.bf16.msra.mxu0 %v709
    %1424 = vmatpush.bf16.msra.mxu0 %v705
    %1425 = vmatpush.bf16.msra.mxu0 %v701
    %1426 = vmatpush.bf16.msra.mxu0 %v697
    %1427 = vmatpush.bf16.msra.mxu0 %v693
    %1428 = vmatpush.bf16.msra.mxu0 %v689
    %1429 = vmatmul.bf16.gmra.mxu0 %v876
    %v1430 = vpop.f32.mrf.mxu0
    %v1431 = vadd.f32 0.0, %v1430
    %v1432 = vpop.f32.mrf.mxu0
    %1433 = vdwg.mxu0
    %v1434 = vadd.f32 %v561, %v1392
    %v1435 = vadd.f32 %v562, %v1405
    %v1436 = vadd.f32 %v563, %v1418
    %v1437 = vadd.f32 %v564, %v1431
    %v1438 = vxor.u32 %v1434, 2147483648
    %v1439 = vmul.f32 %v1438, 1.442695
    %v1440 = vpow.pop %v1439
    %v1441 = vadd.f32 %v1440, 1.0
    %v1442 = vrcp.pop %v1441
    %v1443 = vmul.f32 %v1441, %v1442
    %v1444 = vsub.f32 1.0, %v1443
    %v1445 = vmul.f32 %v1442, %v1444
    %v1446 = vadd.f32 %v1442, %v1445
    %vm1447 = vweird.f32 %v1441
    %vm1448 = vweird.f32 %v1442
    %vm1449 = vmor %vm1447, %vm1448
    %v1450 = vsel %vm1449, %v1442, %v1446
    %v1451 = vand.u32 2147483647, %v1441
    %vm1452 = vcmp.eq.f32.partialorder %v1451, 8.507059e+37
    %v1453 = vand.u32 %v1441, 2147483648
    %v1454 = vor.u32 1.1754944e-38, %v1453
    %v1455 = vsel %vm1452, %v1454, %v1450
    %v1456 = vmul.f32 1.0, %v1455
    %v1457 = vxor.u32 %v1435, 2147483648
    %v1458 = vmul.f32 %v1457, 1.442695
    %v1459 = vpow.pop %v1458
    %v1460 = vadd.f32 %v1459, 1.0
    %v1461 = vrcp.pop %v1460
    %v1462 = vmul.f32 %v1460, %v1461
    %v1463 = vsub.f32 1.0, %v1462
    %v1464 = vmul.f32 %v1461, %v1463
    %v1465 = vadd.f32 %v1461, %v1464
    %vm1466 = vweird.f32 %v1460
    %vm1467 = vweird.f32 %v1461
    %vm1468 = vmor %vm1466, %vm1467
    %v1469 = vsel %vm1468, %v1461, %v1465
    %v1470 = vand.u32 2147483647, %v1460
    %vm1471 = vcmp.eq.f32.partialorder %v1470, 8.507059e+37
    %v1472 = vand.u32 %v1460, 2147483648
    %v1473 = vor.u32 1.1754944e-38, %v1472
    %v1474 = vsel %vm1471, %v1473, %v1469
    %v1475 = vmul.f32 1.0, %v1474
    %v1476 = vtanh.pop %v1436
    %v1477 = vxor.u32 %v1437, 2147483648
    %v1478 = vmul.f32 %v1477, 1.442695
    %v1479 = vpow.pop %v1478
    %v1480 = vadd.f32 %v1479, 1.0
    %v1481 = vrcp.pop %v1480
    %v1482 = vmul.f32 %v1480, %v1481
    %v1483 = vsub.f32 1.0, %v1482
    %v1484 = vmul.f32 %v1481, %v1483
    %v1485 = vadd.f32 %v1481, %v1484
    %vm1486 = vweird.f32 %v1480
    %vm1487 = vweird.f32 %v1481
    %vm1488 = vmor %vm1486, %vm1487
    %v1489 = vsel %vm1488, %v1481, %v1485
    %v1490 = vand.u32 2147483647, %v1480
    %vm1491 = vcmp.eq.f32.partialorder %v1490, 8.507059e+37
    %v1492 = vand.u32 %v1480, 2147483648
    %v1493 = vor.u32 1.1754944e-38, %v1492
    %v1494 = vsel %vm1491, %v1493, %v1489
    %v1495 = vmul.f32 1.0, %v1494
    %v1496 = vmul.f32 %v1475, %v874
    %v1497 = vmul.f32 %v1456, %v1476
    %v1498 = vadd.f32 %v1496, %v1497
    %v1499 = vtanh.pop %v1498
    %v1500 = vmul.f32 %v1495, %v1499
    %v1501 = vsel %vm1381, 1, 0
    %1502 = vset.pattern.permute.xlu0 0
    %1503 = vperm.xlu0 %1502, %v1501
    %v1504 = vpop.permute.xlu0 %1503
    %vm1505 = vcmp.eq.s32.totalorder %v1504, 1
    %v1506 = vsel %vm1505, %v1498, %v874
    %v1507 = vsel %vm1505, %v1500, %v875
    %v1508 = vpack.c.bf16 %v1507, %v1507
    %1509 = vmatpush.bf16.msra.mxu0 %v1001
    %1510 = vmatpush.bf16.msra.mxu0 %v997
    %1511 = vmatpush.bf16.msra.mxu0 %v993
    %1512 = vmatpush.bf16.msra.mxu0 %v989
    %1513 = vmatpush.bf16.msra.mxu0 %v985
    %1514 = vmatpush.bf16.msra.mxu0 %v981
    %1515 = vmatpush.bf16.msra.mxu0 %v977
    %1516 = vmatpush.bf16.msra.mxu0 %v973
    %1517 = vmatmul.bf16.gmra.mxu0 %v1379
    %v1518 = vpop.f32.mrf.mxu0
    %v1519 = vadd.f32 0.0, %v1518
    %v1520 = vpop.f32.mrf.mxu0
    %1521 = vdwg.mxu0
    %1522 = vmatpush.bf16.msra.mxu0 %v1002
    %1523 = vmatpush.bf16.msra.mxu0 %v998
    %1524 = vmatpush.bf16.msra.mxu0 %v994
    %1525 = vmatpush.bf16.msra.mxu0 %v990
    %1526 = vmatpush.bf16.msra.mxu0 %v986
    %1527 = vmatpush.bf16.msra.mxu0 %v982
    %1528 = vmatpush.bf16.msra.mxu0 %v978
    %1529 = vmatpush.bf16.msra.mxu0 %v974
    %1530 = vmatmul.bf16.gmra.mxu0 %v1379
    %v1531 = vpop.f32.mrf.mxu0
    %v1532 = vadd.f32 0.0, %v1531
    %v1533 = vpop.f32.mrf.mxu0
    %1534 = vdwg.mxu0
    %1535 = vmatpush.bf16.msra.mxu0 %v1003
    %1536 = vmatpush.bf16.msra.mxu0 %v999
    %1537 = vmatpush.bf16.msra.mxu0 %v995
    %1538 = vmatpush.bf16.msra.mxu0 %v991
    %1539 = vmatpush.bf16.msra.mxu0 %v987
    %1540 = vmatpush.bf16.msra.mxu0 %v983
    %1541 = vmatpush.bf16.msra.mxu0 %v979
    %1542 = vmatpush.bf16.msra.mxu0 %v975
    %1543 = vmatmul.bf16.gmra.mxu0 %v1379
    %v1544 = vpop.f32.mrf.mxu0
    %v1545 = vadd.f32 0.0, %v1544
    %v1546 = vpop.f32.mrf.mxu0
    %1547 = vdwg.mxu0
    %1548 = vmatpush.bf16.msra.mxu0 %v1004
    %1549 = vmatpush.bf16.msra.mxu0 %v1000
    %1550 = vmatpush.bf16.msra.mxu0 %v996
    %1551 = vmatpush.bf16.msra.mxu0 %v992
    %1552 = vmatpush.bf16.msra.mxu0 %v988
    %1553 = vmatpush.bf16.msra.mxu0 %v984
    %1554 = vmatpush.bf16.msra.mxu0 %v980
    %1555 = vmatpush.bf16.msra.mxu0 %v976
    %1556 = vmatmul.bf16.gmra.mxu0 %v1379
    %v1557 = vpop.f32.mrf.mxu0
    %v1558 = vadd.f32 0.0, %v1557
    %v1559 = vpop.f32.mrf.mxu0
    %1560 = vdwg.mxu0
    %1561 = vmatpush.bf16.msra.mxu0 %v1213
    %1562 = vmatpush.bf16.msra.mxu0 %v1209
    %1563 = vmatpush.bf16.msra.mxu0 %v1205
    %1564 = vmatpush.bf16.msra.mxu0 %v1201
    %1565 = vmatpush.bf16.msra.mxu0 %v1197
    %1566 = vmatpush.bf16.msra.mxu0 %v1193
    %1567 = vmatpush.bf16.msra.mxu0 %v1189
    %1568 = vmatpush.bf16.msra.mxu0 %v1185
    %1569 = vmatmul.bf16.gmra.mxu0 %v1508
    %v1570 = vpop.f32.mrf.mxu0
    %v1571 = vadd.f32 %v1519, %v1570
    %v1572 = vpop.f32.mrf.mxu0
    %1573 = vdwg.mxu0
    %1574 = vmatpush.bf16.msra.mxu0 %v1214
    %1575 = vmatpush.bf16.msra.mxu0 %v1210
    %1576 = vmatpush.bf16.msra.mxu0 %v1206
    %1577 = vmatpush.bf16.msra.mxu0 %v1202
    %1578 = vmatpush.bf16.msra.mxu0 %v1198
    %1579 = vmatpush.bf16.msra.mxu0 %v1194
    %1580 = vmatpush.bf16.msra.mxu0 %v1190
    %1581 = vmatpush.bf16.msra.mxu0 %v1186
    %1582 = vmatmul.bf16.gmra.mxu0 %v1508
    %v1583 = vpop.f32.mrf.mxu0
    %v1584 = vadd.f32 %v1532, %v1583
    %v1585 = vpop.f32.mrf.mxu0
    %1586 = vdwg.mxu0
    %1587 = vmatpush.bf16.msra.mxu0 %v1215
    %1588 = vmatpush.bf16.msra.mxu0 %v1211
    %1589 = vmatpush.bf16.msra.mxu0 %v1207
    %1590 = vmatpush.bf16.msra.mxu0 %v1203
    %1591 = vmatpush.bf16.msra.mxu0 %v1199
    %1592 = vmatpush.bf16.msra.mxu0 %v1195
    %1593 = vmatpush.bf16.msra.mxu0 %v1191
    %1594 = vmatpush.bf16.msra.mxu0 %v1187
    %1595 = vmatmul.bf16.gmra.mxu0 %v1508
    %v1596 = vpop.f32.mrf.mxu0
    %v1597 = vadd.f32 %v1545, %v1596
    %v1598 = vpop.f32.mrf.mxu0
    %1599 = vdwg.mxu0
    %1600 = vmatpush.bf16.msra.mxu0 %v1216
    %1601 = vmatpush.bf16.msra.mxu0 %v1212
    %1602 = vmatpush.bf16.msra.mxu0 %v1208
    %1603 = vmatpush.bf16.msra.mxu0 %v1204
    %1604 = vmatpush.bf16.msra.mxu0 %v1200
    %1605 = vmatpush.bf16.msra.mxu0 %v1196
    %1606 = vmatpush.bf16.msra.mxu0 %v1192
    %1607 = vmatpush.bf16.msra.mxu0 %v1188
    %1608 = vmatmul.bf16.gmra.mxu0 %v1508
    %v1609 = vpop.f32.mrf.mxu0
    %v1610 = vadd.f32 %v1558, %v1609
    %v1611 = vpop.f32.mrf.mxu0
    %1612 = vdwg.mxu0
    %v1613 = vadd.f32 %v1571, %v1302
    %v1614 = vadd.f32 %v1584, %v1303
    %v1615 = vadd.f32 %v1597, %v1304
    %v1616 = vadd.f32 %v1610, %v1305
    %v1617 = vxor.u32 %v1613, 2147483648
    %v1618 = vmul.f32 %v1617, 1.442695
    %v1619 = vpow.pop %v1618
    %v1620 = vadd.f32 %v1619, 1.0
    %v1621 = vrcp.pop %v1620
    %v1622 = vmul.f32 %v1620, %v1621
    %v1623 = vsub.f32 1.0, %v1622
    %v1624 = vmul.f32 %v1621, %v1623
    %v1625 = vadd.f32 %v1621, %v1624
    %vm1626 = vweird.f32 %v1620
    %vm1627 = vweird.f32 %v1621
    %vm1628 = vmor %vm1626, %vm1627
    %v1629 = vsel %vm1628, %v1621, %v1625
    %v1630 = vand.u32 2147483647, %v1620
    %vm1631 = vcmp.eq.f32.partialorder %v1630, 8.507059e+37
    %v1632 = vand.u32 %v1620, 2147483648
    %v1633 = vor.u32 1.1754944e-38, %v1632
    %v1634 = vsel %vm1631, %v1633, %v1629
    %v1635 = vmul.f32 1.0, %v1634
    %v1636 = vxor.u32 %v1614, 2147483648
    %v1637 = vmul.f32 %v1636, 1.442695
    %v1638 = vpow.pop %v1637
    %v1639 = vadd.f32 %v1638, 1.0
    %v1640 = vrcp.pop %v1639
    %v1641 = vmul.f32 %v1639, %v1640
    %v1642 = vsub.f32 1.0, %v1641
    %v1643 = vmul.f32 %v1640, %v1642
    %v1644 = vadd.f32 %v1640, %v1643
    %vm1645 = vweird.f32 %v1639
    %vm1646 = vweird.f32 %v1640
    %vm1647 = vmor %vm1645, %vm1646
    %v1648 = vsel %vm1647, %v1640, %v1644
    %v1649 = vand.u32 2147483647, %v1639
    %vm1650 = vcmp.eq.f32.partialorder %v1649, 8.507059e+37
    %v1651 = vand.u32 %v1639, 2147483648
    %v1652 = vor.u32 1.1754944e-38, %v1651
    %v1653 = vsel %vm1650, %v1652, %v1648
    %v1654 = vmul.f32 1.0, %v1653
    %v1655 = vtanh.pop %v1615
    %v1656 = vxor.u32 %v1616, 2147483648
    %v1657 = vmul.f32 %v1656, 1.442695
    %v1658 = vpow.pop %v1657
    %v1659 = vadd.f32 %v1658, 1.0
    %v1660 = vrcp.pop %v1659
    %v1661 = vmul.f32 %v1659, %v1660
    %v1662 = vsub.f32 1.0, %v1661
    %v1663 = vmul.f32 %v1660, %v1662
    %v1664 = vadd.f32 %v1660, %v1663
    %vm1665 = vweird.f32 %v1659
    %vm1666 = vweird.f32 %v1660
    %vm1667 = vmor %vm1665, %vm1666
    %v1668 = vsel %vm1667, %v1660, %v1664
    %v1669 = vand.u32 2147483647, %v1659
    %vm1670 = vcmp.eq.f32.partialorder %v1669, 8.507059e+37
    %v1671 = vand.u32 %v1659, 2147483648
    %v1672 = vor.u32 1.1754944e-38, %v1671
    %v1673 = vsel %vm1670, %v1672, %v1668
    %v1674 = vmul.f32 1.0, %v1673
    %v1675 = vmul.f32 %v1654, %v1377
    %v1676 = vmul.f32 %v1635, %v1655
    %v1677 = vadd.f32 %v1675, %v1676
    %v1678 = vtanh.pop %v1677
    %v1679 = vmul.f32 %v1674, %v1678
    %v1680 = vsel %vm1505, %v1677, %v1377
    %v1681 = vsel %vm1505, %v1679, %v1378
    %v1682 = vpack.c.bf16 %v1681, %v1681
    %s1683 = scalar_lea.vmem [#allocation11], 4
    %1684 = vst [vmem:[%s1683] sm:$0xf] %v1682
    %vm1685 = vcmp.gt.s32.totalorder %v239, 2
    %1686 = vmatpush.bf16.msra.mxu0 %v714
    %1687 = vmatpush.bf16.msra.mxu0 %v710
    %1688 = vmatpush.bf16.msra.mxu0 %v706
    %1689 = vmatpush.bf16.msra.mxu0 %v702
    %1690 = vmatpush.bf16.msra.mxu0 %v698
    %1691 = vmatpush.bf16.msra.mxu0 %v694
    %1692 = vmatpush.bf16.msra.mxu0 %v690
    %1693 = vmatpush.bf16.msra.mxu0 %v686
    %1694 = vmatmul.bf16.gmra.mxu0 %v1508
    %v1695 = vpop.f32.mrf.mxu0
    %v1696 = vadd.f32 0.0, %v1695
    %v1697 = vpop.f32.mrf.mxu0
    %1698 = vdwg.mxu0
    %1699 = vmatpush.bf16.msra.mxu0 %v715
    %1700 = vmatpush.bf16.msra.mxu0 %v711
    %1701 = vmatpush.bf16.msra.mxu0 %v707
    %1702 = vmatpush.bf16.msra.mxu0 %v703
    %1703 = vmatpush.bf16.msra.mxu0 %v699
    %1704 = vmatpush.bf16.msra.mxu0 %v695
    %1705 = vmatpush.bf16.msra.mxu0 %v691
    %1706 = vmatpush.bf16.msra.mxu0 %v687
    %1707 = vmatmul.bf16.gmra.mxu0 %v1508
    %v1708 = vpop.f32.mrf.mxu0
    %v1709 = vadd.f32 0.0, %v1708
    %v1710 = vpop.f32.mrf.mxu0
    %1711 = vdwg.mxu0
    %1712 = vmatpush.bf16.msra.mxu0 %v716
    %1713 = vmatpush.bf16.msra.mxu0 %v712
    %1714 = vmatpush.bf16.msra.mxu0 %v708
    %1715 = vmatpush.bf16.msra.mxu0 %v704
    %1716 = vmatpush.bf16.msra.mxu0 %v700
    %1717 = vmatpush.bf16.msra.mxu0 %v696
    %1718 = vmatpush.bf16.msra.mxu0 %v692
    %1719 = vmatpush.bf16.msra.mxu0 %v688
    %1720 = vmatmul.bf16.gmra.mxu0 %v1508
    %v1721 = vpop.f32.mrf.mxu0
    %v1722 = vadd.f32 0.0, %v1721
    %v1723 = vpop.f32.mrf.mxu0
    %1724 = vdwg.mxu0
    %1725 = vmatpush.bf16.msra.mxu0 %v717
    %1726 = vmatpush.bf16.msra.mxu0 %v713
    %1727 = vmatpush.bf16.msra.mxu0 %v709
    %1728 = vmatpush.bf16.msra.mxu0 %v705
    %1729 = vmatpush.bf16.msra.mxu0 %v701
    %1730 = vmatpush.bf16.msra.mxu0 %v697
    %1731 = vmatpush.bf16.msra.mxu0 %v693
    %1732 = vmatpush.bf16.msra.mxu0 %v689
    %1733 = vmatmul.bf16.gmra.mxu0 %v1508
    %v1734 = vpop.f32.mrf.mxu0
    %v1735 = vadd.f32 0.0, %v1734
    %v1736 = vpop.f32.mrf.mxu0
    %1737 = vdwg.mxu0
    %v1738 = vadd.f32 %v565, %v1696
    %v1739 = vadd.f32 %v566, %v1709
    %v1740 = vadd.f32 %v567, %v1722
    %v1741 = vadd.f32 %v568, %v1735
    %v1742 = vxor.u32 %v1738, 2147483648
    %v1743 = vmul.f32 %v1742, 1.442695
    %v1744 = vpow.pop %v1743
    %v1745 = vadd.f32 %v1744, 1.0
    %v1746 = vrcp.pop %v1745
    %v1747 = vmul.f32 %v1745, %v1746
    %v1748 = vsub.f32 1.0, %v1747
    %v1749 = vmul.f32 %v1746, %v1748
    %v1750 = vadd.f32 %v1746, %v1749
    %vm1751 = vweird.f32 %v1745
    %vm1752 = vweird.f32 %v1746
    %vm1753 = vmor %vm1751, %vm1752
    %v1754 = vsel %vm1753, %v1746, %v1750
    %v1755 = vand.u32 2147483647, %v1745
    %vm1756 = vcmp.eq.f32.partialorder %v1755, 8.507059e+37
    %v1757 = vand.u32 %v1745, 2147483648
    %v1758 = vor.u32 1.1754944e-38, %v1757
    %v1759 = vsel %vm1756, %v1758, %v1754
    %v1760 = vmul.f32 1.0, %v1759
    %v1761 = vxor.u32 %v1739, 2147483648
    %v1762 = vmul.f32 %v1761, 1.442695
    %v1763 = vpow.pop %v1762
    %v1764 = vadd.f32 %v1763, 1.0
    %v1765 = vrcp.pop %v1764
    %v1766 = vmul.f32 %v1764, %v1765
    %v1767 = vsub.f32 1.0, %v1766
    %v1768 = vmul.f32 %v1765, %v1767
    %v1769 = vadd.f32 %v1765, %v1768
    %vm1770 = vweird.f32 %v1764
    %vm1771 = vweird.f32 %v1765
    %vm1772 = vmor %vm1770, %vm1771
    %v1773 = vsel %vm1772, %v1765, %v1769
    %v1774 = vand.u32 2147483647, %v1764
    %vm1775 = vcmp.eq.f32.partialorder %v1774, 8.507059e+37
    %v1776 = vand.u32 %v1764, 2147483648
    %v1777 = vor.u32 1.1754944e-38, %v1776
    %v1778 = vsel %vm1775, %v1777, %v1773
    %v1779 = vmul.f32 1.0, %v1778
    %v1780 = vtanh.pop %v1740
    %v1781 = vxor.u32 %v1741, 2147483648
    %v1782 = vmul.f32 %v1781, 1.442695
    %v1783 = vpow.pop %v1782
    %v1784 = vadd.f32 %v1783, 1.0
    %v1785 = vrcp.pop %v1784
    %v1786 = vmul.f32 %v1784, %v1785
    %v1787 = vsub.f32 1.0, %v1786
    %v1788 = vmul.f32 %v1785, %v1787
    %v1789 = vadd.f32 %v1785, %v1788
    %vm1790 = vweird.f32 %v1784
    %vm1791 = vweird.f32 %v1785
    %vm1792 = vmor %vm1790, %vm1791
    %v1793 = vsel %vm1792, %v1785, %v1789
    %v1794 = vand.u32 2147483647, %v1784
    %vm1795 = vcmp.eq.f32.partialorder %v1794, 8.507059e+37
    %v1796 = vand.u32 %v1784, 2147483648
    %v1797 = vor.u32 1.1754944e-38, %v1796
    %v1798 = vsel %vm1795, %v1797, %v1793
    %v1799 = vmul.f32 1.0, %v1798
    %v1800 = vmul.f32 %v1779, %v1506
    %v1801 = vmul.f32 %v1760, %v1780
    %v1802 = vadd.f32 %v1800, %v1801
    %v1803 = vtanh.pop %v1802
    %v1804 = vmul.f32 %v1799, %v1803
    %v1805 = vsel %vm1685, 1, 0
    %1806 = vset.pattern.permute.xlu0 0
    %1807 = vperm.xlu0 %1806, %v1805
    %v1808 = vpop.permute.xlu0 %1807
    %vm1809 = vcmp.eq.s32.totalorder %v1808, 1
    %v1810 = vsel %vm1809, %v1802, %v1506
    %v1811 = vsel %vm1809, %v1804, %v1507
    %v1812 = vpack.c.bf16 %v1811, %v1811
    %1813 = vmatpush.bf16.msra.mxu0 %v1001
    %1814 = vmatpush.bf16.msra.mxu0 %v997
    %1815 = vmatpush.bf16.msra.mxu0 %v993
    %1816 = vmatpush.bf16.msra.mxu0 %v989
    %1817 = vmatpush.bf16.msra.mxu0 %v985
    %1818 = vmatpush.bf16.msra.mxu0 %v981
    %1819 = vmatpush.bf16.msra.mxu0 %v977
    %1820 = vmatpush.bf16.msra.mxu0 %v973
    %1821 = vmatmul.bf16.gmra.mxu0 %v1682
    %v1822 = vpop.f32.mrf.mxu0
    %v1823 = vadd.f32 0.0, %v1822
    %v1824 = vpop.f32.mrf.mxu0
    %1825 = vdwg.mxu0
    %1826 = vmatpush.bf16.msra.mxu0 %v1002
    %1827 = vmatpush.bf16.msra.mxu0 %v998
    %1828 = vmatpush.bf16.msra.mxu0 %v994
    %1829 = vmatpush.bf16.msra.mxu0 %v990
    %1830 = vmatpush.bf16.msra.mxu0 %v986
    %1831 = vmatpush.bf16.msra.mxu0 %v982
    %1832 = vmatpush.bf16.msra.mxu0 %v978
    %1833 = vmatpush.bf16.msra.mxu0 %v974
    %1834 = vmatmul.bf16.gmra.mxu0 %v1682
    %v1835 = vpop.f32.mrf.mxu0
    %v1836 = vadd.f32 0.0, %v1835
    %v1837 = vpop.f32.mrf.mxu0
    %1838 = vdwg.mxu0
    %1839 = vmatpush.bf16.msra.mxu0 %v1003
    %1840 = vmatpush.bf16.msra.mxu0 %v999
    %1841 = vmatpush.bf16.msra.mxu0 %v995
    %1842 = vmatpush.bf16.msra.mxu0 %v991
    %1843 = vmatpush.bf16.msra.mxu0 %v987
    %1844 = vmatpush.bf16.msra.mxu0 %v983
    %1845 = vmatpush.bf16.msra.mxu0 %v979
    %1846 = vmatpush.bf16.msra.mxu0 %v975
    %1847 = vmatmul.bf16.gmra.mxu0 %v1682
    %v1848 = vpop.f32.mrf.mxu0
    %v1849 = vadd.f32 0.0, %v1848
    %v1850 = vpop.f32.mrf.mxu0
    %1851 = vdwg.mxu0
    %1852 = vmatpush.bf16.msra.mxu0 %v1004
    %1853 = vmatpush.bf16.msra.mxu0 %v1000
    %1854 = vmatpush.bf16.msra.mxu0 %v996
    %1855 = vmatpush.bf16.msra.mxu0 %v992
    %1856 = vmatpush.bf16.msra.mxu0 %v988
    %1857 = vmatpush.bf16.msra.mxu0 %v984
    %1858 = vmatpush.bf16.msra.mxu0 %v980
    %1859 = vmatpush.bf16.msra.mxu0 %v976
    %1860 = vmatmul.bf16.gmra.mxu0 %v1682
    %v1861 = vpop.f32.mrf.mxu0
    %v1862 = vadd.f32 0.0, %v1861
    %v1863 = vpop.f32.mrf.mxu0
    %1864 = vdwg.mxu0
    %1865 = vmatpush.bf16.msra.mxu0 %v1213
    %1866 = vmatpush.bf16.msra.mxu0 %v1209
    %1867 = vmatpush.bf16.msra.mxu0 %v1205
    %1868 = vmatpush.bf16.msra.mxu0 %v1201
    %1869 = vmatpush.bf16.msra.mxu0 %v1197
    %1870 = vmatpush.bf16.msra.mxu0 %v1193
    %1871 = vmatpush.bf16.msra.mxu0 %v1189
    %1872 = vmatpush.bf16.msra.mxu0 %v1185
    %1873 = vmatmul.bf16.gmra.mxu0 %v1812
    %v1874 = vpop.f32.mrf.mxu0
    %v1875 = vadd.f32 %v1823, %v1874
    %v1876 = vpop.f32.mrf.mxu0
    %1877 = vdwg.mxu0
    %1878 = vmatpush.bf16.msra.mxu0 %v1214
    %1879 = vmatpush.bf16.msra.mxu0 %v1210
    %1880 = vmatpush.bf16.msra.mxu0 %v1206
    %1881 = vmatpush.bf16.msra.mxu0 %v1202
    %1882 = vmatpush.bf16.msra.mxu0 %v1198
    %1883 = vmatpush.bf16.msra.mxu0 %v1194
    %1884 = vmatpush.bf16.msra.mxu0 %v1190
    %1885 = vmatpush.bf16.msra.mxu0 %v1186
    %1886 = vmatmul.bf16.gmra.mxu0 %v1812
    %v1887 = vpop.f32.mrf.mxu0
    %v1888 = vadd.f32 %v1836, %v1887
    %v1889 = vpop.f32.mrf.mxu0
    %1890 = vdwg.mxu0
    %1891 = vmatpush.bf16.msra.mxu0 %v1215
    %1892 = vmatpush.bf16.msra.mxu0 %v1211
    %1893 = vmatpush.bf16.msra.mxu0 %v1207
    %1894 = vmatpush.bf16.msra.mxu0 %v1203
    %1895 = vmatpush.bf16.msra.mxu0 %v1199
    %1896 = vmatpush.bf16.msra.mxu0 %v1195
    %1897 = vmatpush.bf16.msra.mxu0 %v1191
    %1898 = vmatpush.bf16.msra.mxu0 %v1187
    %1899 = vmatmul.bf16.gmra.mxu0 %v1812
    %v1900 = vpop.f32.mrf.mxu0
    %v1901 = vadd.f32 %v1849, %v1900
    %v1902 = vpop.f32.mrf.mxu0
    %1903 = vdwg.mxu0
    %1904 = vmatpush.bf16.msra.mxu0 %v1216
    %1905 = vmatpush.bf16.msra.mxu0 %v1212
    %1906 = vmatpush.bf16.msra.mxu0 %v1208
    %1907 = vmatpush.bf16.msra.mxu0 %v1204
    %1908 = vmatpush.bf16.msra.mxu0 %v1200
    %1909 = vmatpush.bf16.msra.mxu0 %v1196
    %1910 = vmatpush.bf16.msra.mxu0 %v1192
    %1911 = vmatpush.bf16.msra.mxu0 %v1188
    %1912 = vmatmul.bf16.gmra.mxu0 %v1812
    %v1913 = vpop.f32.mrf.mxu0
    %v1914 = vadd.f32 %v1862, %v1913
    %v1915 = vpop.f32.mrf.mxu0
    %1916 = vdwg.mxu0
    %v1917 = vadd.f32 %v1875, %v1302
    %v1918 = vadd.f32 %v1888, %v1303
    %v1919 = vadd.f32 %v1901, %v1304
    %v1920 = vadd.f32 %v1914, %v1305
    %v1921 = vxor.u32 %v1917, 2147483648
    %v1922 = vmul.f32 %v1921, 1.442695
    %v1923 = vpow.pop %v1922
    %v1924 = vadd.f32 %v1923, 1.0
    %v1925 = vrcp.pop %v1924
    %v1926 = vmul.f32 %v1924, %v1925
    %v1927 = vsub.f32 1.0, %v1926
    %v1928 = vmul.f32 %v1925, %v1927
    %v1929 = vadd.f32 %v1925, %v1928
    %vm1930 = vweird.f32 %v1924
    %vm1931 = vweird.f32 %v1925
    %vm1932 = vmor %vm1930, %vm1931
    %v1933 = vsel %vm1932, %v1925, %v1929
    %v1934 = vand.u32 2147483647, %v1924
    %vm1935 = vcmp.eq.f32.partialorder %v1934, 8.507059e+37
    %v1936 = vand.u32 %v1924, 2147483648
    %v1937 = vor.u32 1.1754944e-38, %v1936
    %v1938 = vsel %vm1935, %v1937, %v1933
    %v1939 = vmul.f32 1.0, %v1938
    %v1940 = vxor.u32 %v1918, 2147483648
    %v1941 = vmul.f32 %v1940, 1.442695
    %v1942 = vpow.pop %v1941
    %v1943 = vadd.f32 %v1942, 1.0
    %v1944 = vrcp.pop %v1943
    %v1945 = vmul.f32 %v1943, %v1944
    %v1946 = vsub.f32 1.0, %v1945
    %v1947 = vmul.f32 %v1944, %v1946
    %v1948 = vadd.f32 %v1944, %v1947
    %vm1949 = vweird.f32 %v1943
    %vm1950 = vweird.f32 %v1944
    %vm1951 = vmor %vm1949, %vm1950
    %v1952 = vsel %vm1951, %v1944, %v1948
    %v1953 = vand.u32 2147483647, %v1943
    %vm1954 = vcmp.eq.f32.partialorder %v1953, 8.507059e+37
    %v1955 = vand.u32 %v1943, 2147483648
    %v1956 = vor.u32 1.1754944e-38, %v1955
    %v1957 = vsel %vm1954, %v1956, %v1952
    %v1958 = vmul.f32 1.0, %v1957
    %v1959 = vtanh.pop %v1919
    %v1960 = vxor.u32 %v1920, 2147483648
    %v1961 = vmul.f32 %v1960, 1.442695
    %v1962 = vpow.pop %v1961
    %v1963 = vadd.f32 %v1962, 1.0
    %v1964 = vrcp.pop %v1963
    %v1965 = vmul.f32 %v1963, %v1964
    %v1966 = vsub.f32 1.0, %v1965
    %v1967 = vmul.f32 %v1964, %v1966
    %v1968 = vadd.f32 %v1964, %v1967
    %vm1969 = vweird.f32 %v1963
    %vm1970 = vweird.f32 %v1964
    %vm1971 = vmor %vm1969, %vm1970
    %v1972 = vsel %vm1971, %v1964, %v1968
    %v1973 = vand.u32 2147483647, %v1963
    %vm1974 = vcmp.eq.f32.partialorder %v1973, 8.507059e+37
    %v1975 = vand.u32 %v1963, 2147483648
    %v1976 = vor.u32 1.1754944e-38, %v1975
    %v1977 = vsel %vm1974, %v1976, %v1972
    %v1978 = vmul.f32 1.0, %v1977
    %v1979 = vmul.f32 %v1958, %v1680
    %v1980 = vmul.f32 %v1939, %v1959
    %v1981 = vadd.f32 %v1979, %v1980
    %v1982 = vtanh.pop %v1981
    %v1983 = vmul.f32 %v1978, %v1982
    %v1984 = vsel %vm1809, %v1981, %v1680
    %v1985 = vsel %vm1809, %v1983, %v1681
    %v1986 = vpack.c.bf16 %v1985, %v1985
    %s1987 = scalar_lea.vmem [#allocation11], 8
    %1988 = vst [vmem:[%s1987] sm:$0xf] %v1986
    %vm1989 = vcmp.gt.s32.totalorder %v239, 3
    %1990 = vmatpush.bf16.msra.mxu0 %v714
    %1991 = vmatpush.bf16.msra.mxu0 %v710
    %1992 = vmatpush.bf16.msra.mxu0 %v706
    %1993 = vmatpush.bf16.msra.mxu0 %v702
    %1994 = vmatpush.bf16.msra.mxu0 %v698
    %1995 = vmatpush.bf16.msra.mxu0 %v694
    %1996 = vmatpush.bf16.msra.mxu0 %v690
    %1997 = vmatpush.bf16.msra.mxu0 %v686
    %1998 = vmatmul.bf16.gmra.mxu0 %v1812
    %v1999 = vpop.f32.mrf.mxu0
    %v2000 = vadd.f32 0.0, %v1999
    %v2001 = vpop.f32.mrf.mxu0
    %2002 = vdwg.mxu0
    %2003 = vmatpush.bf16.msra.mxu0 %v715
    %2004 = vmatpush.bf16.msra.mxu0 %v711
    %2005 = vmatpush.bf16.msra.mxu0 %v707
    %2006 = vmatpush.bf16.msra.mxu0 %v703
    %2007 = vmatpush.bf16.msra.mxu0 %v699
    %2008 = vmatpush.bf16.msra.mxu0 %v695
    %2009 = vmatpush.bf16.msra.mxu0 %v691
    %2010 = vmatpush.bf16.msra.mxu0 %v687
    %2011 = vmatmul.bf16.gmra.mxu0 %v1812
    %v2012 = vpop.f32.mrf.mxu0
    %v2013 = vadd.f32 0.0, %v2012
    %v2014 = vpop.f32.mrf.mxu0
    %2015 = vdwg.mxu0
    %2016 = vmatpush.bf16.msra.mxu0 %v716
    %2017 = vmatpush.bf16.msra.mxu0 %v712
    %2018 = vmatpush.bf16.msra.mxu0 %v708
    %2019 = vmatpush.bf16.msra.mxu0 %v704
    %2020 = vmatpush.bf16.msra.mxu0 %v700
    %2021 = vmatpush.bf16.msra.mxu0 %v696
    %2022 = vmatpush.bf16.msra.mxu0 %v692
    %2023 = vmatpush.bf16.msra.mxu0 %v688
    %2024 = vmatmul.bf16.gmra.mxu0 %v1812
    %v2025 = vpop.f32.mrf.mxu0
    %v2026 = vadd.f32 0.0, %v2025
    %v2027 = vpop.f32.mrf.mxu0
    %2028 = vdwg.mxu0
    %2029 = vmatpush.bf16.msra.mxu0 %v717
    %2030 = vmatpush.bf16.msra.mxu0 %v713
    %2031 = vmatpush.bf16.msra.mxu0 %v709
    %2032 = vmatpush.bf16.msra.mxu0 %v705
    %2033 = vmatpush.bf16.msra.mxu0 %v701
    %2034 = vmatpush.bf16.msra.mxu0 %v697
    %2035 = vmatpush.bf16.msra.mxu0 %v693
    %2036 = vmatpush.bf16.msra.mxu0 %v689
    %2037 = vmatmul.bf16.gmra.mxu0 %v1812
    %v2038 = vpop.f32.mrf.mxu0
    %v2039 = vadd.f32 0.0, %v2038
    %v2040 = vpop.f32.mrf.mxu0
    %2041 = vdwg.mxu0
    %v2042 = vadd.f32 %v569, %v2000
    %v2043 = vadd.f32 %v570, %v2013
    %v2044 = vadd.f32 %v571, %v2026
    %v2045 = vadd.f32 %v572, %v2039
    %v2046 = vxor.u32 %v2042, 2147483648
    %v2047 = vmul.f32 %v2046, 1.442695
    %v2048 = vpow.pop %v2047
    %v2049 = vadd.f32 %v2048, 1.0
    %v2050 = vrcp.pop %v2049
    %v2051 = vmul.f32 %v2049, %v2050
    %v2052 = vsub.f32 1.0, %v2051
    %v2053 = vmul.f32 %v2050, %v2052
    %v2054 = vadd.f32 %v2050, %v2053
    %vm2055 = vweird.f32 %v2049
    %vm2056 = vweird.f32 %v2050
    %vm2057 = vmor %vm2055, %vm2056
    %v2058 = vsel %vm2057, %v2050, %v2054
    %v2059 = vand.u32 2147483647, %v2049
    %vm2060 = vcmp.eq.f32.partialorder %v2059, 8.507059e+37
    %v2061 = vand.u32 %v2049, 2147483648
    %v2062 = vor.u32 1.1754944e-38, %v2061
    %v2063 = vsel %vm2060, %v2062, %v2058
    %v2064 = vmul.f32 1.0, %v2063
    %v2065 = vxor.u32 %v2043, 2147483648
    %v2066 = vmul.f32 %v2065, 1.442695
    %v2067 = vpow.pop %v2066
    %v2068 = vadd.f32 %v2067, 1.0
    %v2069 = vrcp.pop %v2068
    %v2070 = vmul.f32 %v2068, %v2069
    %v2071 = vsub.f32 1.0, %v2070
    %v2072 = vmul.f32 %v2069, %v2071
    %v2073 = vadd.f32 %v2069, %v2072
    %vm2074 = vweird.f32 %v2068
    %vm2075 = vweird.f32 %v2069
    %vm2076 = vmor %vm2074, %vm2075
    %v2077 = vsel %vm2076, %v2069, %v2073
    %v2078 = vand.u32 2147483647, %v2068
    %vm2079 = vcmp.eq.f32.partialorder %v2078, 8.507059e+37
    %v2080 = vand.u32 %v2068, 2147483648
    %v2081 = vor.u32 1.1754944e-38, %v2080
    %v2082 = vsel %vm2079, %v2081, %v2077
    %v2083 = vmul.f32 1.0, %v2082
    %v2084 = vtanh.pop %v2044
    %v2085 = vxor.u32 %v2045, 2147483648
    %v2086 = vmul.f32 %v2085, 1.442695
    %v2087 = vpow.pop %v2086
    %v2088 = vadd.f32 %v2087, 1.0
    %v2089 = vrcp.pop %v2088
    %v2090 = vmul.f32 %v2088, %v2089
    %v2091 = vsub.f32 1.0, %v2090
    %v2092 = vmul.f32 %v2089, %v2091
    %v2093 = vadd.f32 %v2089, %v2092
    %vm2094 = vweird.f32 %v2088
    %vm2095 = vweird.f32 %v2089
    %vm2096 = vmor %vm2094, %vm2095
    %v2097 = vsel %vm2096, %v2089, %v2093
    %v2098 = vand.u32 2147483647, %v2088
    %vm2099 = vcmp.eq.f32.partialorder %v2098, 8.507059e+37
    %v2100 = vand.u32 %v2088, 2147483648
    %v2101 = vor.u32 1.1754944e-38, %v2100
    %v2102 = vsel %vm2099, %v2101, %v2097
    %v2103 = vmul.f32 1.0, %v2102
    %v2104 = vmul.f32 %v2083, %v1810
    %v2105 = vmul.f32 %v2064, %v2084
    %v2106 = vadd.f32 %v2104, %v2105
    %v2107 = vtanh.pop %v2106
    %v2108 = vmul.f32 %v2103, %v2107
    %v2109 = vsel %vm1989, 1, 0
    %2110 = vset.pattern.permute.xlu0 0
    %2111 = vperm.xlu0 %2110, %v2109
    %v2112 = vpop.permute.xlu0 %2111
    %vm2113 = vcmp.eq.s32.totalorder %v2112, 1
    %v2114 = vsel %vm2113, %v2106, %v1810
    %v2115 = vsel %vm2113, %v2108, %v1811
    %v2116 = vpack.c.bf16 %v2115, %v2115
    %2117 = vmatpush.bf16.msra.mxu0 %v1001
    %2118 = vmatpush.bf16.msra.mxu0 %v997
    %2119 = vmatpush.bf16.msra.mxu0 %v993
    %2120 = vmatpush.bf16.msra.mxu0 %v989
    %2121 = vmatpush.bf16.msra.mxu0 %v985
    %2122 = vmatpush.bf16.msra.mxu0 %v981
    %2123 = vmatpush.bf16.msra.mxu0 %v977
    %2124 = vmatpush.bf16.msra.mxu0 %v973
    %2125 = vmatmul.bf16.gmra.mxu0 %v1986
    %v2126 = vpop.f32.mrf.mxu0
    %v2127 = vadd.f32 0.0, %v2126
    %v2128 = vpop.f32.mrf.mxu0
    %2129 = vdwg.mxu0
    %2130 = vmatpush.bf16.msra.mxu0 %v1002
    %2131 = vmatpush.bf16.msra.mxu0 %v998
    %2132 = vmatpush.bf16.msra.mxu0 %v994
    %2133 = vmatpush.bf16.msra.mxu0 %v990
    %2134 = vmatpush.bf16.msra.mxu0 %v986
    %2135 = vmatpush.bf16.msra.mxu0 %v982
    %2136 = vmatpush.bf16.msra.mxu0 %v978
    %2137 = vmatpush.bf16.msra.mxu0 %v974
    %2138 = vmatmul.bf16.gmra.mxu0 %v1986
    %v2139 = vpop.f32.mrf.mxu0
    %v2140 = vadd.f32 0.0, %v2139
    %v2141 = vpop.f32.mrf.mxu0
    %2142 = vdwg.mxu0
    %2143 = vmatpush.bf16.msra.mxu0 %v1003
    %2144 = vmatpush.bf16.msra.mxu0 %v999
    %2145 = vmatpush.bf16.msra.mxu0 %v995
    %2146 = vmatpush.bf16.msra.mxu0 %v991
    %2147 = vmatpush.bf16.msra.mxu0 %v987
    %2148 = vmatpush.bf16.msra.mxu0 %v983
    %2149 = vmatpush.bf16.msra.mxu0 %v979
    %2150 = vmatpush.bf16.msra.mxu0 %v975
    %2151 = vmatmul.bf16.gmra.mxu0 %v1986
    %v2152 = vpop.f32.mrf.mxu0
    %v2153 = vadd.f32 0.0, %v2152
    %v2154 = vpop.f32.mrf.mxu0
    %2155 = vdwg.mxu0
    %2156 = vmatpush.bf16.msra.mxu0 %v1004
    %2157 = vmatpush.bf16.msra.mxu0 %v1000
    %2158 = vmatpush.bf16.msra.mxu0 %v996
    %2159 = vmatpush.bf16.msra.mxu0 %v992
    %2160 = vmatpush.bf16.msra.mxu0 %v988
    %2161 = vmatpush.bf16.msra.mxu0 %v984
    %2162 = vmatpush.bf16.msra.mxu0 %v980
    %2163 = vmatpush.bf16.msra.mxu0 %v976
    %2164 = vmatmul.bf16.gmra.mxu0 %v1986
    %v2165 = vpop.f32.mrf.mxu0
    %v2166 = vadd.f32 0.0, %v2165
    %v2167 = vpop.f32.mrf.mxu0
    %2168 = vdwg.mxu0
    %2169 = vmatpush.bf16.msra.mxu0 %v1213
    %2170 = vmatpush.bf16.msra.mxu0 %v1209
    %2171 = vmatpush.bf16.msra.mxu0 %v1205
    %2172 = vmatpush.bf16.msra.mxu0 %v1201
    %2173 = vmatpush.bf16.msra.mxu0 %v1197
    %2174 = vmatpush.bf16.msra.mxu0 %v1193
    %2175 = vmatpush.bf16.msra.mxu0 %v1189
    %2176 = vmatpush.bf16.msra.mxu0 %v1185
    %2177 = vmatmul.bf16.gmra.mxu0 %v2116
    %v2178 = vpop.f32.mrf.mxu0
    %v2179 = vadd.f32 %v2127, %v2178
    %v2180 = vpop.f32.mrf.mxu0
    %2181 = vdwg.mxu0
    %2182 = vmatpush.bf16.msra.mxu0 %v1214
    %2183 = vmatpush.bf16.msra.mxu0 %v1210
    %2184 = vmatpush.bf16.msra.mxu0 %v1206
    %2185 = vmatpush.bf16.msra.mxu0 %v1202
    %2186 = vmatpush.bf16.msra.mxu0 %v1198
    %2187 = vmatpush.bf16.msra.mxu0 %v1194
    %2188 = vmatpush.bf16.msra.mxu0 %v1190
    %2189 = vmatpush.bf16.msra.mxu0 %v1186
    %2190 = vmatmul.bf16.gmra.mxu0 %v2116
    %v2191 = vpop.f32.mrf.mxu0
    %v2192 = vadd.f32 %v2140, %v2191
    %v2193 = vpop.f32.mrf.mxu0
    %2194 = vdwg.mxu0
    %2195 = vmatpush.bf16.msra.mxu0 %v1215
    %2196 = vmatpush.bf16.msra.mxu0 %v1211
    %2197 = vmatpush.bf16.msra.mxu0 %v1207
    %2198 = vmatpush.bf16.msra.mxu0 %v1203
    %2199 = vmatpush.bf16.msra.mxu0 %v1199
    %2200 = vmatpush.bf16.msra.mxu0 %v1195
    %2201 = vmatpush.bf16.msra.mxu0 %v1191
    %2202 = vmatpush.bf16.msra.mxu0 %v1187
    %2203 = vmatmul.bf16.gmra.mxu0 %v2116
    %v2204 = vpop.f32.mrf.mxu0
    %v2205 = vadd.f32 %v2153, %v2204
    %v2206 = vpop.f32.mrf.mxu0
    %2207 = vdwg.mxu0
    %2208 = vmatpush.bf16.msra.mxu0 %v1216
    %2209 = vmatpush.bf16.msra.mxu0 %v1212
    %2210 = vmatpush.bf16.msra.mxu0 %v1208
    %2211 = vmatpush.bf16.msra.mxu0 %v1204
    %2212 = vmatpush.bf16.msra.mxu0 %v1200
    %2213 = vmatpush.bf16.msra.mxu0 %v1196
    %2214 = vmatpush.bf16.msra.mxu0 %v1192
    %2215 = vmatpush.bf16.msra.mxu0 %v1188
    %2216 = vmatmul.bf16.gmra.mxu0 %v2116
    %v2217 = vpop.f32.mrf.mxu0
    %v2218 = vadd.f32 %v2166, %v2217
    %v2219 = vpop.f32.mrf.mxu0
    %2220 = vdwg.mxu0
    %v2221 = vadd.f32 %v2179, %v1302
    %v2222 = vadd.f32 %v2192, %v1303
    %v2223 = vadd.f32 %v2205, %v1304
    %v2224 = vadd.f32 %v2218, %v1305
    %v2225 = vxor.u32 %v2221, 2147483648
    %v2226 = vmul.f32 %v2225, 1.442695
    %v2227 = vpow.pop %v2226
    %v2228 = vadd.f32 %v2227, 1.0
    %v2229 = vrcp.pop %v2228
    %v2230 = vmul.f32 %v2228, %v2229
    %v2231 = vsub.f32 1.0, %v2230
    %v2232 = vmul.f32 %v2229, %v2231
    %v2233 = vadd.f32 %v2229, %v2232
    %vm2234 = vweird.f32 %v2228
    %vm2235 = vweird.f32 %v2229
    %vm2236 = vmor %vm2234, %vm2235
    %v2237 = vsel %vm2236, %v2229, %v2233
    %v2238 = vand.u32 2147483647, %v2228
    %vm2239 = vcmp.eq.f32.partialorder %v2238, 8.507059e+37
    %v2240 = vand.u32 %v2228, 2147483648
    %v2241 = vor.u32 1.1754944e-38, %v2240
    %v2242 = vsel %vm2239, %v2241, %v2237
    %v2243 = vmul.f32 1.0, %v2242
    %v2244 = vxor.u32 %v2222, 2147483648
    %v2245 = vmul.f32 %v2244, 1.442695
    %v2246 = vpow.pop %v2245
    %v2247 = vadd.f32 %v2246, 1.0
    %v2248 = vrcp.pop %v2247
    %v2249 = vmul.f32 %v2247, %v2248
    %v2250 = vsub.f32 1.0, %v2249
    %v2251 = vmul.f32 %v2248, %v2250
    %v2252 = vadd.f32 %v2248, %v2251
    %vm2253 = vweird.f32 %v2247
    %vm2254 = vweird.f32 %v2248
    %vm2255 = vmor %vm2253, %vm2254
    %v2256 = vsel %vm2255, %v2248, %v2252
    %v2257 = vand.u32 2147483647, %v2247
    %vm2258 = vcmp.eq.f32.partialorder %v2257, 8.507059e+37
    %v2259 = vand.u32 %v2247, 2147483648
    %v2260 = vor.u32 1.1754944e-38, %v2259
    %v2261 = vsel %vm2258, %v2260, %v2256
    %v2262 = vmul.f32 1.0, %v2261
    %v2263 = vtanh.pop %v2223
    %v2264 = vxor.u32 %v2224, 2147483648
    %v2265 = vmul.f32 %v2264, 1.442695
    %v2266 = vpow.pop %v2265
    %v2267 = vadd.f32 %v2266, 1.0
    %v2268 = vrcp.pop %v2267
    %v2269 = vmul.f32 %v2267, %v2268
    %v2270 = vsub.f32 1.0, %v2269
    %v2271 = vmul.f32 %v2268, %v2270
    %v2272 = vadd.f32 %v2268, %v2271
    %vm2273 = vweird.f32 %v2267
    %vm2274 = vweird.f32 %v2268
    %vm2275 = vmor %vm2273, %vm2274
    %v2276 = vsel %vm2275, %v2268, %v2272
    %v2277 = vand.u32 2147483647, %v2267
    %vm2278 = vcmp.eq.f32.partialorder %v2277, 8.507059e+37
    %v2279 = vand.u32 %v2267, 2147483648
    %v2280 = vor.u32 1.1754944e-38, %v2279
    %v2281 = vsel %vm2278, %v2280, %v2276
    %v2282 = vmul.f32 1.0, %v2281
    %v2283 = vmul.f32 %v2262, %v1984
    %v2284 = vmul.f32 %v2243, %v2263
    %v2285 = vadd.f32 %v2283, %v2284
    %v2286 = vtanh.pop %v2285
    %v2287 = vmul.f32 %v2282, %v2286
    %v2288 = vsel %vm2113, %v2285, %v1984
    %v2289 = vsel %vm2113, %v2287, %v1985
    %v2290 = vpack.c.bf16 %v2289, %v2289
    %s2291 = scalar_lea.vmem [#allocation11], 12
    %2292 = vst [vmem:[%s2291] sm:$0xf] %v2290
    %vm2293 = vcmp.gt.s32.totalorder %v239, 4
    %2294 = vmatpush.bf16.msra.mxu0 %v714
    %2295 = vmatpush.bf16.msra.mxu0 %v710
    %2296 = vmatpush.bf16.msra.mxu0 %v706
    %2297 = vmatpush.bf16.msra.mxu0 %v702
    %2298 = vmatpush.bf16.msra.mxu0 %v698
    %2299 = vmatpush.bf16.msra.mxu0 %v694
    %2300 = vmatpush.bf16.msra.mxu0 %v690
    %2301 = vmatpush.bf16.msra.mxu0 %v686
    %2302 = vmatmul.bf16.gmra.mxu0 %v2116
    %v2303 = vpop.f32.mrf.mxu0
    %v2304 = vadd.f32 0.0, %v2303
    %v2305 = vpop.f32.mrf.mxu0
    %2306 = vdwg.mxu0
    %2307 = vmatpush.bf16.msra.mxu0 %v715
    %2308 = vmatpush.bf16.msra.mxu0 %v711
    %2309 = vmatpush.bf16.msra.mxu0 %v707
    %2310 = vmatpush.bf16.msra.mxu0 %v703
    %2311 = vmatpush.bf16.msra.mxu0 %v699
    %2312 = vmatpush.bf16.msra.mxu0 %v695
    %2313 = vmatpush.bf16.msra.mxu0 %v691
    %2314 = vmatpush.bf16.msra.mxu0 %v687
    %2315 = vmatmul.bf16.gmra.mxu0 %v2116
    %v2316 = vpop.f32.mrf.mxu0
    %v2317 = vadd.f32 0.0, %v2316
    %v2318 = vpop.f32.mrf.mxu0
    %2319 = vdwg.mxu0
    %2320 = vmatpush.bf16.msra.mxu0 %v716
    %2321 = vmatpush.bf16.msra.mxu0 %v712
    %2322 = vmatpush.bf16.msra.mxu0 %v708
    %2323 = vmatpush.bf16.msra.mxu0 %v704
    %2324 = vmatpush.bf16.msra.mxu0 %v700
    %2325 = vmatpush.bf16.msra.mxu0 %v696
    %2326 = vmatpush.bf16.msra.mxu0 %v692
    %2327 = vmatpush.bf16.msra.mxu0 %v688
    %2328 = vmatmul.bf16.gmra.mxu0 %v2116
    %v2329 = vpop.f32.mrf.mxu0
    %v2330 = vadd.f32 0.0, %v2329
    %v2331 = vpop.f32.mrf.mxu0
    %2332 = vdwg.mxu0
    %2333 = vmatpush.bf16.msra.mxu0 %v717
    %2334 = vmatpush.bf16.msra.mxu0 %v713
    %2335 = vmatpush.bf16.msra.mxu0 %v709
    %2336 = vmatpush.bf16.msra.mxu0 %v705
    %2337 = vmatpush.bf16.msra.mxu0 %v701
    %2338 = vmatpush.bf16.msra.mxu0 %v697
    %2339 = vmatpush.bf16.msra.mxu0 %v693
    %2340 = vmatpush.bf16.msra.mxu0 %v689
    %2341 = vmatmul.bf16.gmra.mxu0 %v2116
    %v2342 = vpop.f32.mrf.mxu0
    %v2343 = vadd.f32 0.0, %v2342
    %v2344 = vpop.f32.mrf.mxu0
    %2345 = vdwg.mxu0
    %v2346 = vadd.f32 %v573, %v2304
    %v2347 = vadd.f32 %v574, %v2317
    %v2348 = vadd.f32 %v575, %v2330
    %v2349 = vadd.f32 %v576, %v2343
    %v2350 = vxor.u32 %v2346, 2147483648
    %v2351 = vmul.f32 %v2350, 1.442695
    %v2352 = vpow.pop %v2351
    %v2353 = vadd.f32 %v2352, 1.0
    %v2354 = vrcp.pop %v2353
    %v2355 = vmul.f32 %v2353, %v2354
    %v2356 = vsub.f32 1.0, %v2355
    %v2357 = vmul.f32 %v2354, %v2356
    %v2358 = vadd.f32 %v2354, %v2357
    %vm2359 = vweird.f32 %v2353
    %vm2360 = vweird.f32 %v2354
    %vm2361 = vmor %vm2359, %vm2360
    %v2362 = vsel %vm2361, %v2354, %v2358
    %v2363 = vand.u32 2147483647, %v2353
    %vm2364 = vcmp.eq.f32.partialorder %v2363, 8.507059e+37
    %v2365 = vand.u32 %v2353, 2147483648
    %v2366 = vor.u32 1.1754944e-38, %v2365
    %v2367 = vsel %vm2364, %v2366, %v2362
    %v2368 = vmul.f32 1.0, %v2367
    %v2369 = vxor.u32 %v2347, 2147483648
    %v2370 = vmul.f32 %v2369, 1.442695
    %v2371 = vpow.pop %v2370
    %v2372 = vadd.f32 %v2371, 1.0
    %v2373 = vrcp.pop %v2372
    %v2374 = vmul.f32 %v2372, %v2373
    %v2375 = vsub.f32 1.0, %v2374
    %v2376 = vmul.f32 %v2373, %v2375
    %v2377 = vadd.f32 %v2373, %v2376
    %vm2378 = vweird.f32 %v2372
    %vm2379 = vweird.f32 %v2373
    %vm2380 = vmor %vm2378, %vm2379
    %v2381 = vsel %vm2380, %v2373, %v2377
    %v2382 = vand.u32 2147483647, %v2372
    %vm2383 = vcmp.eq.f32.partialorder %v2382, 8.507059e+37
    %v2384 = vand.u32 %v2372, 2147483648
    %v2385 = vor.u32 1.1754944e-38, %v2384
    %v2386 = vsel %vm2383, %v2385, %v2381
    %v2387 = vmul.f32 1.0, %v2386
    %v2388 = vtanh.pop %v2348
    %v2389 = vxor.u32 %v2349, 2147483648
    %v2390 = vmul.f32 %v2389, 1.442695
    %v2391 = vpow.pop %v2390
    %v2392 = vadd.f32 %v2391, 1.0
    %v2393 = vrcp.pop %v2392
    %v2394 = vmul.f32 %v2392, %v2393
    %v2395 = vsub.f32 1.0, %v2394
    %v2396 = vmul.f32 %v2393, %v2395
    %v2397 = vadd.f32 %v2393, %v2396
    %vm2398 = vweird.f32 %v2392
    %vm2399 = vweird.f32 %v2393
    %vm2400 = vmor %vm2398, %vm2399
    %v2401 = vsel %vm2400, %v2393, %v2397
    %v2402 = vand.u32 2147483647, %v2392
    %vm2403 = vcmp.eq.f32.partialorder %v2402, 8.507059e+37
    %v2404 = vand.u32 %v2392, 2147483648
    %v2405 = vor.u32 1.1754944e-38, %v2404
    %v2406 = vsel %vm2403, %v2405, %v2401
    %v2407 = vmul.f32 1.0, %v2406
    %v2408 = vmul.f32 %v2387, %v2114
    %v2409 = vmul.f32 %v2368, %v2388
    %v2410 = vadd.f32 %v2408, %v2409
    %v2411 = vtanh.pop %v2410
    %v2412 = vmul.f32 %v2407, %v2411
    %v2413 = vsel %vm2293, 1, 0
    %2414 = vset.pattern.permute.xlu0 0
    %2415 = vperm.xlu0 %2414, %v2413
    %v2416 = vpop.permute.xlu0 %2415
    %vm2417 = vcmp.eq.s32.totalorder %v2416, 1
    %v2418 = vsel %vm2417, %v2410, %v2114
    %v2419 = vsel %vm2417, %v2412, %v2115
    %v2420 = vpack.c.bf16 %v2419, %v2419
    %2421 = vmatpush.bf16.msra.mxu0 %v1001
    %2422 = vmatpush.bf16.msra.mxu0 %v997
    %2423 = vmatpush.bf16.msra.mxu0 %v993
    %2424 = vmatpush.bf16.msra.mxu0 %v989
    %2425 = vmatpush.bf16.msra.mxu0 %v985
    %2426 = vmatpush.bf16.msra.mxu0 %v981
    %2427 = vmatpush.bf16.msra.mxu0 %v977
    %2428 = vmatpush.bf16.msra.mxu0 %v973
    %2429 = vmatmul.bf16.gmra.mxu0 %v2290
    %v2430 = vpop.f32.mrf.mxu0
    %v2431 = vadd.f32 0.0, %v2430
    %v2432 = vpop.f32.mrf.mxu0
    %2433 = vdwg.mxu0
    %2434 = vmatpush.bf16.msra.mxu0 %v1002
    %2435 = vmatpush.bf16.msra.mxu0 %v998
    %2436 = vmatpush.bf16.msra.mxu0 %v994
    %2437 = vmatpush.bf16.msra.mxu0 %v990
    %2438 = vmatpush.bf16.msra.mxu0 %v986
    %2439 = vmatpush.bf16.msra.mxu0 %v982
    %2440 = vmatpush.bf16.msra.mxu0 %v978
    %2441 = vmatpush.bf16.msra.mxu0 %v974
    %2442 = vmatmul.bf16.gmra.mxu0 %v2290
    %v2443 = vpop.f32.mrf.mxu0
    %v2444 = vadd.f32 0.0, %v2443
    %v2445 = vpop.f32.mrf.mxu0
    %2446 = vdwg.mxu0
    %2447 = vmatpush.bf16.msra.mxu0 %v1003
    %2448 = vmatpush.bf16.msra.mxu0 %v999
    %2449 = vmatpush.bf16.msra.mxu0 %v995
    %2450 = vmatpush.bf16.msra.mxu0 %v991
    %2451 = vmatpush.bf16.msra.mxu0 %v987
    %2452 = vmatpush.bf16.msra.mxu0 %v983
    %2453 = vmatpush.bf16.msra.mxu0 %v979
    %2454 = vmatpush.bf16.msra.mxu0 %v975
    %2455 = vmatmul.bf16.gmra.mxu0 %v2290
    %v2456 = vpop.f32.mrf.mxu0
    %v2457 = vadd.f32 0.0, %v2456
    %v2458 = vpop.f32.mrf.mxu0
    %2459 = vdwg.mxu0
    %2460 = vmatpush.bf16.msra.mxu0 %v1004
    %2461 = vmatpush.bf16.msra.mxu0 %v1000
    %2462 = vmatpush.bf16.msra.mxu0 %v996
    %2463 = vmatpush.bf16.msra.mxu0 %v992
    %2464 = vmatpush.bf16.msra.mxu0 %v988
    %2465 = vmatpush.bf16.msra.mxu0 %v984
    %2466 = vmatpush.bf16.msra.mxu0 %v980
    %2467 = vmatpush.bf16.msra.mxu0 %v976
    %2468 = vmatmul.bf16.gmra.mxu0 %v2290
    %v2469 = vpop.f32.mrf.mxu0
    %v2470 = vadd.f32 0.0, %v2469
    %v2471 = vpop.f32.mrf.mxu0
    %2472 = vdwg.mxu0
    %2473 = vmatpush.bf16.msra.mxu0 %v1213
    %2474 = vmatpush.bf16.msra.mxu0 %v1209
    %2475 = vmatpush.bf16.msra.mxu0 %v1205
    %2476 = vmatpush.bf16.msra.mxu0 %v1201
    %2477 = vmatpush.bf16.msra.mxu0 %v1197
    %2478 = vmatpush.bf16.msra.mxu0 %v1193
    %2479 = vmatpush.bf16.msra.mxu0 %v1189
    %2480 = vmatpush.bf16.msra.mxu0 %v1185
    %2481 = vmatmul.bf16.gmra.mxu0 %v2420
    %v2482 = vpop.f32.mrf.mxu0
    %v2483 = vadd.f32 %v2431, %v2482
    %v2484 = vpop.f32.mrf.mxu0
    %2485 = vdwg.mxu0
    %2486 = vmatpush.bf16.msra.mxu0 %v1214
    %2487 = vmatpush.bf16.msra.mxu0 %v1210
    %2488 = vmatpush.bf16.msra.mxu0 %v1206
    %2489 = vmatpush.bf16.msra.mxu0 %v1202
    %2490 = vmatpush.bf16.msra.mxu0 %v1198
    %2491 = vmatpush.bf16.msra.mxu0 %v1194
    %2492 = vmatpush.bf16.msra.mxu0 %v1190
    %2493 = vmatpush.bf16.msra.mxu0 %v1186
    %2494 = vmatmul.bf16.gmra.mxu0 %v2420
    %v2495 = vpop.f32.mrf.mxu0
    %v2496 = vadd.f32 %v2444, %v2495
    %v2497 = vpop.f32.mrf.mxu0
    %2498 = vdwg.mxu0
    %2499 = vmatpush.bf16.msra.mxu0 %v1215
    %2500 = vmatpush.bf16.msra.mxu0 %v1211
    %2501 = vmatpush.bf16.msra.mxu0 %v1207
    %2502 = vmatpush.bf16.msra.mxu0 %v1203
    %2503 = vmatpush.bf16.msra.mxu0 %v1199
    %2504 = vmatpush.bf16.msra.mxu0 %v1195
    %2505 = vmatpush.bf16.msra.mxu0 %v1191
    %2506 = vmatpush.bf16.msra.mxu0 %v1187
    %2507 = vmatmul.bf16.gmra.mxu0 %v2420
    %v2508 = vpop.f32.mrf.mxu0
    %v2509 = vadd.f32 %v2457, %v2508
    %v2510 = vpop.f32.mrf.mxu0
    %2511 = vdwg.mxu0
    %2512 = vmatpush.bf16.msra.mxu0 %v1216
    %2513 = vmatpush.bf16.msra.mxu0 %v1212
    %2514 = vmatpush.bf16.msra.mxu0 %v1208
    %2515 = vmatpush.bf16.msra.mxu0 %v1204
    %2516 = vmatpush.bf16.msra.mxu0 %v1200
    %2517 = vmatpush.bf16.msra.mxu0 %v1196
    %2518 = vmatpush.bf16.msra.mxu0 %v1192
    %2519 = vmatpush.bf16.msra.mxu0 %v1188
    %2520 = vmatmul.bf16.gmra.mxu0 %v2420
    %v2521 = vpop.f32.mrf.mxu0
    %v2522 = vadd.f32 %v2470, %v2521
    %v2523 = vpop.f32.mrf.mxu0
    %2524 = vdwg.mxu0
    %v2525 = vadd.f32 %v2483, %v1302
    %v2526 = vadd.f32 %v2496, %v1303
    %v2527 = vadd.f32 %v2509, %v1304
    %v2528 = vadd.f32 %v2522, %v1305
    %v2529 = vxor.u32 %v2525, 2147483648
    %v2530 = vmul.f32 %v2529, 1.442695
    %v2531 = vpow.pop %v2530
    %v2532 = vadd.f32 %v2531, 1.0
    %v2533 = vrcp.pop %v2532
    %v2534 = vmul.f32 %v2532, %v2533
    %v2535 = vsub.f32 1.0, %v2534
    %v2536 = vmul.f32 %v2533, %v2535
    %v2537 = vadd.f32 %v2533, %v2536
    %vm2538 = vweird.f32 %v2532
    %vm2539 = vweird.f32 %v2533
    %vm2540 = vmor %vm2538, %vm2539
    %v2541 = vsel %vm2540, %v2533, %v2537
    %v2542 = vand.u32 2147483647, %v2532
    %vm2543 = vcmp.eq.f32.partialorder %v2542, 8.507059e+37
    %v2544 = vand.u32 %v2532, 2147483648
    %v2545 = vor.u32 1.1754944e-38, %v2544
    %v2546 = vsel %vm2543, %v2545, %v2541
    %v2547 = vmul.f32 1.0, %v2546
    %v2548 = vxor.u32 %v2526, 2147483648
    %v2549 = vmul.f32 %v2548, 1.442695
    %v2550 = vpow.pop %v2549
    %v2551 = vadd.f32 %v2550, 1.0
    %v2552 = vrcp.pop %v2551
    %v2553 = vmul.f32 %v2551, %v2552
    %v2554 = vsub.f32 1.0, %v2553
    %v2555 = vmul.f32 %v2552, %v2554
    %v2556 = vadd.f32 %v2552, %v2555
    %vm2557 = vweird.f32 %v2551
    %vm2558 = vweird.f32 %v2552
    %vm2559 = vmor %vm2557, %vm2558
    %v2560 = vsel %vm2559, %v2552, %v2556
    %v2561 = vand.u32 2147483647, %v2551
    %vm2562 = vcmp.eq.f32.partialorder %v2561, 8.507059e+37
    %v2563 = vand.u32 %v2551, 2147483648
    %v2564 = vor.u32 1.1754944e-38, %v2563
    %v2565 = vsel %vm2562, %v2564, %v2560
    %v2566 = vmul.f32 1.0, %v2565
    %v2567 = vtanh.pop %v2527
    %v2568 = vxor.u32 %v2528, 2147483648
    %v2569 = vmul.f32 %v2568, 1.442695
    %v2570 = vpow.pop %v2569
    %v2571 = vadd.f32 %v2570, 1.0
    %v2572 = vrcp.pop %v2571
    %v2573 = vmul.f32 %v2571, %v2572
    %v2574 = vsub.f32 1.0, %v2573
    %v2575 = vmul.f32 %v2572, %v2574
    %v2576 = vadd.f32 %v2572, %v2575
    %vm2577 = vweird.f32 %v2571
    %vm2578 = vweird.f32 %v2572
    %vm2579 = vmor %vm2577, %vm2578
    %v2580 = vsel %vm2579, %v2572, %v2576
    %v2581 = vand.u32 2147483647, %v2571
    %vm2582 = vcmp.eq.f32.partialorder %v2581, 8.507059e+37
    %v2583 = vand.u32 %v2571, 2147483648
    %v2584 = vor.u32 1.1754944e-38, %v2583
    %v2585 = vsel %vm2582, %v2584, %v2580
    %v2586 = vmul.f32 1.0, %v2585
    %v2587 = vmul.f32 %v2566, %v2288
    %v2588 = vmul.f32 %v2547, %v2567
    %v2589 = vadd.f32 %v2587, %v2588
    %v2590 = vtanh.pop %v2589
    %v2591 = vmul.f32 %v2586, %v2590
    %v2592 = vsel %vm2417, %v2589, %v2288
    %v2593 = vsel %vm2417, %v2591, %v2289
    %v2594 = vpack.c.bf16 %v2593, %v2593
    %s2595 = scalar_lea.vmem [#allocation11], 16
    %2596 = vst [vmem:[%s2595] sm:$0xf] %v2594
    %vm2597 = vcmp.gt.s32.totalorder %v239, 5
    %2598 = vmatpush.bf16.msra.mxu0 %v714
    %2599 = vmatpush.bf16.msra.mxu0 %v710
    %2600 = vmatpush.bf16.msra.mxu0 %v706
    %2601 = vmatpush.bf16.msra.mxu0 %v702
    %2602 = vmatpush.bf16.msra.mxu0 %v698
    %2603 = vmatpush.bf16.msra.mxu0 %v694
    %2604 = vmatpush.bf16.msra.mxu0 %v690
    %2605 = vmatpush.bf16.msra.mxu0 %v686
    %2606 = vmatmul.bf16.gmra.mxu0 %v2420
    %v2607 = vpop.f32.mrf.mxu0
    %v2608 = vadd.f32 0.0, %v2607
    %v2609 = vpop.f32.mrf.mxu0
    %2610 = vdwg.mxu0
    %2611 = vmatpush.bf16.msra.mxu0 %v715
    %2612 = vmatpush.bf16.msra.mxu0 %v711
    %2613 = vmatpush.bf16.msra.mxu0 %v707
    %2614 = vmatpush.bf16.msra.mxu0 %v703
    %2615 = vmatpush.bf16.msra.mxu0 %v699
    %2616 = vmatpush.bf16.msra.mxu0 %v695
    %2617 = vmatpush.bf16.msra.mxu0 %v691
    %2618 = vmatpush.bf16.msra.mxu0 %v687
    %2619 = vmatmul.bf16.gmra.mxu0 %v2420
    %v2620 = vpop.f32.mrf.mxu0
    %v2621 = vadd.f32 0.0, %v2620
    %v2622 = vpop.f32.mrf.mxu0
    %2623 = vdwg.mxu0
    %2624 = vmatpush.bf16.msra.mxu0 %v716
    %2625 = vmatpush.bf16.msra.mxu0 %v712
    %2626 = vmatpush.bf16.msra.mxu0 %v708
    %2627 = vmatpush.bf16.msra.mxu0 %v704
    %2628 = vmatpush.bf16.msra.mxu0 %v700
    %2629 = vmatpush.bf16.msra.mxu0 %v696
    %2630 = vmatpush.bf16.msra.mxu0 %v692
    %2631 = vmatpush.bf16.msra.mxu0 %v688
    %2632 = vmatmul.bf16.gmra.mxu0 %v2420
    %v2633 = vpop.f32.mrf.mxu0
    %v2634 = vadd.f32 0.0, %v2633
    %v2635 = vpop.f32.mrf.mxu0
    %2636 = vdwg.mxu0
    %2637 = vmatpush.bf16.msra.mxu0 %v717
    %2638 = vmatpush.bf16.msra.mxu0 %v713
    %2639 = vmatpush.bf16.msra.mxu0 %v709
    %2640 = vmatpush.bf16.msra.mxu0 %v705
    %2641 = vmatpush.bf16.msra.mxu0 %v701
    %2642 = vmatpush.bf16.msra.mxu0 %v697
    %2643 = vmatpush.bf16.msra.mxu0 %v693
    %2644 = vmatpush.bf16.msra.mxu0 %v689
    %2645 = vmatmul.bf16.gmra.mxu0 %v2420
    %v2646 = vpop.f32.mrf.mxu0
    %v2647 = vadd.f32 0.0, %v2646
    %v2648 = vpop.f32.mrf.mxu0
    %2649 = vdwg.mxu0
    %v2650 = vadd.f32 %v577, %v2608
    %v2651 = vadd.f32 %v578, %v2621
    %v2652 = vadd.f32 %v579, %v2634
    %v2653 = vadd.f32 %v580, %v2647
    %v2654 = vxor.u32 %v2650, 2147483648
    %v2655 = vmul.f32 %v2654, 1.442695
    %v2656 = vpow.pop %v2655
    %v2657 = vadd.f32 %v2656, 1.0
    %v2658 = vrcp.pop %v2657
    %v2659 = vmul.f32 %v2657, %v2658
    %v2660 = vsub.f32 1.0, %v2659
    %v2661 = vmul.f32 %v2658, %v2660
    %v2662 = vadd.f32 %v2658, %v2661
    %vm2663 = vweird.f32 %v2657
    %vm2664 = vweird.f32 %v2658
    %vm2665 = vmor %vm2663, %vm2664
    %v2666 = vsel %vm2665, %v2658, %v2662
    %v2667 = vand.u32 2147483647, %v2657
    %vm2668 = vcmp.eq.f32.partialorder %v2667, 8.507059e+37
    %v2669 = vand.u32 %v2657, 2147483648
    %v2670 = vor.u32 1.1754944e-38, %v2669
    %v2671 = vsel %vm2668, %v2670, %v2666
    %v2672 = vmul.f32 1.0, %v2671
    %v2673 = vxor.u32 %v2651, 2147483648
    %v2674 = vmul.f32 %v2673, 1.442695
    %v2675 = vpow.pop %v2674
    %v2676 = vadd.f32 %v2675, 1.0
    %v2677 = vrcp.pop %v2676
    %v2678 = vmul.f32 %v2676, %v2677
    %v2679 = vsub.f32 1.0, %v2678
    %v2680 = vmul.f32 %v2677, %v2679
    %v2681 = vadd.f32 %v2677, %v2680
    %vm2682 = vweird.f32 %v2676
    %vm2683 = vweird.f32 %v2677
    %vm2684 = vmor %vm2682, %vm2683
    %v2685 = vsel %vm2684, %v2677, %v2681
    %v2686 = vand.u32 2147483647, %v2676
    %vm2687 = vcmp.eq.f32.partialorder %v2686, 8.507059e+37
    %v2688 = vand.u32 %v2676, 2147483648
    %v2689 = vor.u32 1.1754944e-38, %v2688
    %v2690 = vsel %vm2687, %v2689, %v2685
    %v2691 = vmul.f32 1.0, %v2690
    %v2692 = vtanh.pop %v2652
    %v2693 = vxor.u32 %v2653, 2147483648
    %v2694 = vmul.f32 %v2693, 1.442695
    %v2695 = vpow.pop %v2694
    %v2696 = vadd.f32 %v2695, 1.0
    %v2697 = vrcp.pop %v2696
    %v2698 = vmul.f32 %v2696, %v2697
    %v2699 = vsub.f32 1.0, %v2698
    %v2700 = vmul.f32 %v2697, %v2699
    %v2701 = vadd.f32 %v2697, %v2700
    %vm2702 = vweird.f32 %v2696
    %vm2703 = vweird.f32 %v2697
    %vm2704 = vmor %vm2702, %vm2703
    %v2705 = vsel %vm2704, %v2697, %v2701
    %v2706 = vand.u32 2147483647, %v2696
    %vm2707 = vcmp.eq.f32.partialorder %v2706, 8.507059e+37
    %v2708 = vand.u32 %v2696, 2147483648
    %v2709 = vor.u32 1.1754944e-38, %v2708
    %v2710 = vsel %vm2707, %v2709, %v2705
    %v2711 = vmul.f32 1.0, %v2710
    %v2712 = vmul.f32 %v2691, %v2418
    %v2713 = vmul.f32 %v2672, %v2692
    %v2714 = vadd.f32 %v2712, %v2713
    %v2715 = vtanh.pop %v2714
    %v2716 = vmul.f32 %v2711, %v2715
    %v2717 = vsel %vm2597, 1, 0
    %2718 = vset.pattern.permute.xlu0 0
    %2719 = vperm.xlu0 %2718, %v2717
    %v2720 = vpop.permute.xlu0 %2719
    %vm2721 = vcmp.eq.s32.totalorder %v2720, 1
    %v2722 = vsel %vm2721, %v2714, %v2418
    %v2723 = vsel %vm2721, %v2716, %v2419
    %v2724 = vpack.c.bf16 %v2723, %v2723
    %2725 = vmatpush.bf16.msra.mxu0 %v1001
    %2726 = vmatpush.bf16.msra.mxu0 %v997
    %2727 = vmatpush.bf16.msra.mxu0 %v993
    %2728 = vmatpush.bf16.msra.mxu0 %v989
    %2729 = vmatpush.bf16.msra.mxu0 %v985
    %2730 = vmatpush.bf16.msra.mxu0 %v981
    %2731 = vmatpush.bf16.msra.mxu0 %v977
    %2732 = vmatpush.bf16.msra.mxu0 %v973
    %2733 = vmatmul.bf16.gmra.mxu0 %v2594
    %v2734 = vpop.f32.mrf.mxu0
    %v2735 = vadd.f32 0.0, %v2734
    %v2736 = vpop.f32.mrf.mxu0
    %2737 = vdwg.mxu0
    %2738 = vmatpush.bf16.msra.mxu0 %v1002
    %2739 = vmatpush.bf16.msra.mxu0 %v998
    %2740 = vmatpush.bf16.msra.mxu0 %v994
    %2741 = vmatpush.bf16.msra.mxu0 %v990
    %2742 = vmatpush.bf16.msra.mxu0 %v986
    %2743 = vmatpush.bf16.msra.mxu0 %v982
    %2744 = vmatpush.bf16.msra.mxu0 %v978
    %2745 = vmatpush.bf16.msra.mxu0 %v974
    %2746 = vmatmul.bf16.gmra.mxu0 %v2594
    %v2747 = vpop.f32.mrf.mxu0
    %v2748 = vadd.f32 0.0, %v2747
    %v2749 = vpop.f32.mrf.mxu0
    %2750 = vdwg.mxu0
    %2751 = vmatpush.bf16.msra.mxu0 %v1003
    %2752 = vmatpush.bf16.msra.mxu0 %v999
    %2753 = vmatpush.bf16.msra.mxu0 %v995
    %2754 = vmatpush.bf16.msra.mxu0 %v991
    %2755 = vmatpush.bf16.msra.mxu0 %v987
    %2756 = vmatpush.bf16.msra.mxu0 %v983
    %2757 = vmatpush.bf16.msra.mxu0 %v979
    %2758 = vmatpush.bf16.msra.mxu0 %v975
    %2759 = vmatmul.bf16.gmra.mxu0 %v2594
    %v2760 = vpop.f32.mrf.mxu0
    %v2761 = vadd.f32 0.0, %v2760
    %v2762 = vpop.f32.mrf.mxu0
    %2763 = vdwg.mxu0
    %2764 = vmatpush.bf16.msra.mxu0 %v1004
    %2765 = vmatpush.bf16.msra.mxu0 %v1000
    %2766 = vmatpush.bf16.msra.mxu0 %v996
    %2767 = vmatpush.bf16.msra.mxu0 %v992
    %2768 = vmatpush.bf16.msra.mxu0 %v988
    %2769 = vmatpush.bf16.msra.mxu0 %v984
    %2770 = vmatpush.bf16.msra.mxu0 %v980
    %2771 = vmatpush.bf16.msra.mxu0 %v976
    %2772 = vmatmul.bf16.gmra.mxu0 %v2594
    %v2773 = vpop.f32.mrf.mxu0
    %v2774 = vadd.f32 0.0, %v2773
    %v2775 = vpop.f32.mrf.mxu0
    %2776 = vdwg.mxu0
    %2777 = vmatpush.bf16.msra.mxu0 %v1213
    %2778 = vmatpush.bf16.msra.mxu0 %v1209
    %2779 = vmatpush.bf16.msra.mxu0 %v1205
    %2780 = vmatpush.bf16.msra.mxu0 %v1201
    %2781 = vmatpush.bf16.msra.mxu0 %v1197
    %2782 = vmatpush.bf16.msra.mxu0 %v1193
    %2783 = vmatpush.bf16.msra.mxu0 %v1189
    %2784 = vmatpush.bf16.msra.mxu0 %v1185
    %2785 = vmatmul.bf16.gmra.mxu0 %v2724
    %v2786 = vpop.f32.mrf.mxu0
    %v2787 = vadd.f32 %v2735, %v2786
    %v2788 = vpop.f32.mrf.mxu0
    %2789 = vdwg.mxu0
    %2790 = vmatpush.bf16.msra.mxu0 %v1214
    %2791 = vmatpush.bf16.msra.mxu0 %v1210
    %2792 = vmatpush.bf16.msra.mxu0 %v1206
    %2793 = vmatpush.bf16.msra.mxu0 %v1202
    %2794 = vmatpush.bf16.msra.mxu0 %v1198
    %2795 = vmatpush.bf16.msra.mxu0 %v1194
    %2796 = vmatpush.bf16.msra.mxu0 %v1190
    %2797 = vmatpush.bf16.msra.mxu0 %v1186
    %2798 = vmatmul.bf16.gmra.mxu0 %v2724
    %v2799 = vpop.f32.mrf.mxu0
    %v2800 = vadd.f32 %v2748, %v2799
    %v2801 = vpop.f32.mrf.mxu0
    %2802 = vdwg.mxu0
    %2803 = vmatpush.bf16.msra.mxu0 %v1215
    %2804 = vmatpush.bf16.msra.mxu0 %v1211
    %2805 = vmatpush.bf16.msra.mxu0 %v1207
    %2806 = vmatpush.bf16.msra.mxu0 %v1203
    %2807 = vmatpush.bf16.msra.mxu0 %v1199
    %2808 = vmatpush.bf16.msra.mxu0 %v1195
    %2809 = vmatpush.bf16.msra.mxu0 %v1191
    %2810 = vmatpush.bf16.msra.mxu0 %v1187
    %2811 = vmatmul.bf16.gmra.mxu0 %v2724
    %v2812 = vpop.f32.mrf.mxu0
    %v2813 = vadd.f32 %v2761, %v2812
    %v2814 = vpop.f32.mrf.mxu0
    %2815 = vdwg.mxu0
    %2816 = vmatpush.bf16.msra.mxu0 %v1216
    %2817 = vmatpush.bf16.msra.mxu0 %v1212
    %2818 = vmatpush.bf16.msra.mxu0 %v1208
    %2819 = vmatpush.bf16.msra.mxu0 %v1204
    %2820 = vmatpush.bf16.msra.mxu0 %v1200
    %2821 = vmatpush.bf16.msra.mxu0 %v1196
    %2822 = vmatpush.bf16.msra.mxu0 %v1192
    %2823 = vmatpush.bf16.msra.mxu0 %v1188
    %2824 = vmatmul.bf16.gmra.mxu0 %v2724
    %v2825 = vpop.f32.mrf.mxu0
    %v2826 = vadd.f32 %v2774, %v2825
    %v2827 = vpop.f32.mrf.mxu0
    %2828 = vdwg.mxu0
    %v2829 = vadd.f32 %v2787, %v1302
    %v2830 = vadd.f32 %v2800, %v1303
    %v2831 = vadd.f32 %v2813, %v1304
    %v2832 = vadd.f32 %v2826, %v1305
    %v2833 = vxor.u32 %v2829, 2147483648
    %v2834 = vmul.f32 %v2833, 1.442695
    %v2835 = vpow.pop %v2834
    %v2836 = vadd.f32 %v2835, 1.0
    %v2837 = vrcp.pop %v2836
    %v2838 = vmul.f32 %v2836, %v2837
    %v2839 = vsub.f32 1.0, %v2838
    %v2840 = vmul.f32 %v2837, %v2839
    %v2841 = vadd.f32 %v2837, %v2840
    %vm2842 = vweird.f32 %v2836
    %vm2843 = vweird.f32 %v2837
    %vm2844 = vmor %vm2842, %vm2843
    %v2845 = vsel %vm2844, %v2837, %v2841
    %v2846 = vand.u32 2147483647, %v2836
    %vm2847 = vcmp.eq.f32.partialorder %v2846, 8.507059e+37
    %v2848 = vand.u32 %v2836, 2147483648
    %v2849 = vor.u32 1.1754944e-38, %v2848
    %v2850 = vsel %vm2847, %v2849, %v2845
    %v2851 = vmul.f32 1.0, %v2850
    %v2852 = vxor.u32 %v2830, 2147483648
    %v2853 = vmul.f32 %v2852, 1.442695
    %v2854 = vpow.pop %v2853
    %v2855 = vadd.f32 %v2854, 1.0
    %v2856 = vrcp.pop %v2855
    %v2857 = vmul.f32 %v2855, %v2856
    %v2858 = vsub.f32 1.0, %v2857
    %v2859 = vmul.f32 %v2856, %v2858
    %v2860 = vadd.f32 %v2856, %v2859
    %vm2861 = vweird.f32 %v2855
    %vm2862 = vweird.f32 %v2856
    %vm2863 = vmor %vm2861, %vm2862
    %v2864 = vsel %vm2863, %v2856, %v2860
    %v2865 = vand.u32 2147483647, %v2855
    %vm2866 = vcmp.eq.f32.partialorder %v2865, 8.507059e+37
    %v2867 = vand.u32 %v2855, 2147483648
    %v2868 = vor.u32 1.1754944e-38, %v2867
    %v2869 = vsel %vm2866, %v2868, %v2864
    %v2870 = vmul.f32 1.0, %v2869
    %v2871 = vtanh.pop %v2831
    %v2872 = vxor.u32 %v2832, 2147483648
    %v2873 = vmul.f32 %v2872, 1.442695
    %v2874 = vpow.pop %v2873
    %v2875 = vadd.f32 %v2874, 1.0
    %v2876 = vrcp.pop %v2875
    %v2877 = vmul.f32 %v2875, %v2876
    %v2878 = vsub.f32 1.0, %v2877
    %v2879 = vmul.f32 %v2876, %v2878
    %v2880 = vadd.f32 %v2876, %v2879
    %vm2881 = vweird.f32 %v2875
    %vm2882 = vweird.f32 %v2876
    %vm2883 = vmor %vm2881, %vm2882
    %v2884 = vsel %vm2883, %v2876, %v2880
    %v2885 = vand.u32 2147483647, %v2875
    %vm2886 = vcmp.eq.f32.partialorder %v2885, 8.507059e+37
    %v2887 = vand.u32 %v2875, 2147483648
    %v2888 = vor.u32 1.1754944e-38, %v2887
    %v2889 = vsel %vm2886, %v2888, %v2884
    %v2890 = vmul.f32 1.0, %v2889
    %v2891 = vmul.f32 %v2870, %v2592
    %v2892 = vmul.f32 %v2851, %v2871
    %v2893 = vadd.f32 %v2891, %v2892
    %v2894 = vtanh.pop %v2893
    %v2895 = vmul.f32 %v2890, %v2894
    %v2896 = vsel %vm2721, %v2893, %v2592
    %v2897 = vsel %vm2721, %v2895, %v2593
    %v2898 = vpack.c.bf16 %v2897, %v2897
    %s2899 = scalar_lea.vmem [#allocation11], 20
    %2900 = vst [vmem:[%s2899] sm:$0xf] %v2898
    %vm2901 = vcmp.gt.s32.totalorder %v239, 6
    %2902 = vmatpush.bf16.msra.mxu0 %v714
    %2903 = vmatpush.bf16.msra.mxu0 %v710
    %2904 = vmatpush.bf16.msra.mxu0 %v706
    %2905 = vmatpush.bf16.msra.mxu0 %v702
    %2906 = vmatpush.bf16.msra.mxu0 %v698
    %2907 = vmatpush.bf16.msra.mxu0 %v694
    %2908 = vmatpush.bf16.msra.mxu0 %v690
    %2909 = vmatpush.bf16.msra.mxu0 %v686
    %2910 = vmatmul.bf16.gmra.mxu0 %v2724
    %v2911 = vpop.f32.mrf.mxu0
    %v2912 = vadd.f32 0.0, %v2911
    %v2913 = vpop.f32.mrf.mxu0
    %2914 = vdwg.mxu0
    %2915 = vmatpush.bf16.msra.mxu0 %v715
    %2916 = vmatpush.bf16.msra.mxu0 %v711
    %2917 = vmatpush.bf16.msra.mxu0 %v707
    %2918 = vmatpush.bf16.msra.mxu0 %v703
    %2919 = vmatpush.bf16.msra.mxu0 %v699
    %2920 = vmatpush.bf16.msra.mxu0 %v695
    %2921 = vmatpush.bf16.msra.mxu0 %v691
    %2922 = vmatpush.bf16.msra.mxu0 %v687
    %2923 = vmatmul.bf16.gmra.mxu0 %v2724
    %v2924 = vpop.f32.mrf.mxu0
    %v2925 = vadd.f32 0.0, %v2924
    %v2926 = vpop.f32.mrf.mxu0
    %2927 = vdwg.mxu0
    %2928 = vmatpush.bf16.msra.mxu0 %v716
    %2929 = vmatpush.bf16.msra.mxu0 %v712
    %2930 = vmatpush.bf16.msra.mxu0 %v708
    %2931 = vmatpush.bf16.msra.mxu0 %v704
    %2932 = vmatpush.bf16.msra.mxu0 %v700
    %2933 = vmatpush.bf16.msra.mxu0 %v696
    %2934 = vmatpush.bf16.msra.mxu0 %v692
    %2935 = vmatpush.bf16.msra.mxu0 %v688
    %2936 = vmatmul.bf16.gmra.mxu0 %v2724
    %v2937 = vpop.f32.mrf.mxu0
    %v2938 = vadd.f32 0.0, %v2937
    %v2939 = vpop.f32.mrf.mxu0
    %2940 = vdwg.mxu0
    %2941 = vmatpush.bf16.msra.mxu0 %v717
    %2942 = vmatpush.bf16.msra.mxu0 %v713
    %2943 = vmatpush.bf16.msra.mxu0 %v709
    %2944 = vmatpush.bf16.msra.mxu0 %v705
    %2945 = vmatpush.bf16.msra.mxu0 %v701
    %2946 = vmatpush.bf16.msra.mxu0 %v697
    %2947 = vmatpush.bf16.msra.mxu0 %v693
    %2948 = vmatpush.bf16.msra.mxu0 %v689
    %2949 = vmatmul.bf16.gmra.mxu0 %v2724
    %v2950 = vpop.f32.mrf.mxu0
    %v2951 = vadd.f32 0.0, %v2950
    %v2952 = vpop.f32.mrf.mxu0
    %2953 = vdwg.mxu0
    %v2954 = vadd.f32 %v581, %v2912
    %v2955 = vadd.f32 %v582, %v2925
    %v2956 = vadd.f32 %v583, %v2938
    %v2957 = vadd.f32 %v584, %v2951
    %v2958 = vxor.u32 %v2954, 2147483648
    %v2959 = vmul.f32 %v2958, 1.442695
    %v2960 = vpow.pop %v2959
    %v2961 = vadd.f32 %v2960, 1.0
    %v2962 = vrcp.pop %v2961
    %v2963 = vmul.f32 %v2961, %v2962
    %v2964 = vsub.f32 1.0, %v2963
    %v2965 = vmul.f32 %v2962, %v2964
    %v2966 = vadd.f32 %v2962, %v2965
    %vm2967 = vweird.f32 %v2961
    %vm2968 = vweird.f32 %v2962
    %vm2969 = vmor %vm2967, %vm2968
    %v2970 = vsel %vm2969, %v2962, %v2966
    %v2971 = vand.u32 2147483647, %v2961
    %vm2972 = vcmp.eq.f32.partialorder %v2971, 8.507059e+37
    %v2973 = vand.u32 %v2961, 2147483648
    %v2974 = vor.u32 1.1754944e-38, %v2973
    %v2975 = vsel %vm2972, %v2974, %v2970
    %v2976 = vmul.f32 1.0, %v2975
    %v2977 = vxor.u32 %v2955, 2147483648
    %v2978 = vmul.f32 %v2977, 1.442695
    %v2979 = vpow.pop %v2978
    %v2980 = vadd.f32 %v2979, 1.0
    %v2981 = vrcp.pop %v2980
    %v2982 = vmul.f32 %v2980, %v2981
    %v2983 = vsub.f32 1.0, %v2982
    %v2984 = vmul.f32 %v2981, %v2983
    %v2985 = vadd.f32 %v2981, %v2984
    %vm2986 = vweird.f32 %v2980
    %vm2987 = vweird.f32 %v2981
    %vm2988 = vmor %vm2986, %vm2987
    %v2989 = vsel %vm2988, %v2981, %v2985
    %v2990 = vand.u32 2147483647, %v2980
    %vm2991 = vcmp.eq.f32.partialorder %v2990, 8.507059e+37
    %v2992 = vand.u32 %v2980, 2147483648
    %v2993 = vor.u32 1.1754944e-38, %v2992
    %v2994 = vsel %vm2991, %v2993, %v2989
    %v2995 = vmul.f32 1.0, %v2994
    %v2996 = vtanh.pop %v2956
    %v2997 = vxor.u32 %v2957, 2147483648
    %v2998 = vmul.f32 %v2997, 1.442695
    %v2999 = vpow.pop %v2998
    %v3000 = vadd.f32 %v2999, 1.0
    %v3001 = vrcp.pop %v3000
    %v3002 = vmul.f32 %v3000, %v3001
    %v3003 = vsub.f32 1.0, %v3002
    %v3004 = vmul.f32 %v3001, %v3003
    %v3005 = vadd.f32 %v3001, %v3004
    %vm3006 = vweird.f32 %v3000
    %vm3007 = vweird.f32 %v3001
    %vm3008 = vmor %vm3006, %vm3007
    %v3009 = vsel %vm3008, %v3001, %v3005
    %v3010 = vand.u32 2147483647, %v3000
    %vm3011 = vcmp.eq.f32.partialorder %v3010, 8.507059e+37
    %v3012 = vand.u32 %v3000, 2147483648
    %v3013 = vor.u32 1.1754944e-38, %v3012
    %v3014 = vsel %vm3011, %v3013, %v3009
    %v3015 = vmul.f32 1.0, %v3014
    %v3016 = vmul.f32 %v2995, %v2722
    %v3017 = vmul.f32 %v2976, %v2996
    %v3018 = vadd.f32 %v3016, %v3017
    %v3019 = vtanh.pop %v3018
    %v3020 = vmul.f32 %v3015, %v3019
    %v3021 = vsel %vm2901, 1, 0
    %3022 = vset.pattern.permute.xlu0 0
    %3023 = vperm.xlu0 %3022, %v3021
    %v3024 = vpop.permute.xlu0 %3023
    %vm3025 = vcmp.eq.s32.totalorder %v3024, 1
    %v3026 = vsel %vm3025, %v3018, %v2722
    %v3027 = vsel %vm3025, %v3020, %v2723
    %v3028 = vpack.c.bf16 %v3027, %v3027
    %3029 = vmatpush.bf16.msra.mxu0 %v1001
    %3030 = vmatpush.bf16.msra.mxu0 %v997
    %3031 = vmatpush.bf16.msra.mxu0 %v993
    %3032 = vmatpush.bf16.msra.mxu0 %v989
    %3033 = vmatpush.bf16.msra.mxu0 %v985
    %3034 = vmatpush.bf16.msra.mxu0 %v981
    %3035 = vmatpush.bf16.msra.mxu0 %v977
    %3036 = vmatpush.bf16.msra.mxu0 %v973
    %3037 = vmatmul.bf16.gmra.mxu0 %v2898
    %v3038 = vpop.f32.mrf.mxu0
    %v3039 = vadd.f32 0.0, %v3038
    %v3040 = vpop.f32.mrf.mxu0
    %3041 = vdwg.mxu0
    %3042 = vmatpush.bf16.msra.mxu0 %v1002
    %3043 = vmatpush.bf16.msra.mxu0 %v998
    %3044 = vmatpush.bf16.msra.mxu0 %v994
    %3045 = vmatpush.bf16.msra.mxu0 %v990
    %3046 = vmatpush.bf16.msra.mxu0 %v986
    %3047 = vmatpush.bf16.msra.mxu0 %v982
    %3048 = vmatpush.bf16.msra.mxu0 %v978
    %3049 = vmatpush.bf16.msra.mxu0 %v974
    %3050 = vmatmul.bf16.gmra.mxu0 %v2898
    %v3051 = vpop.f32.mrf.mxu0
    %v3052 = vadd.f32 0.0, %v3051
    %v3053 = vpop.f32.mrf.mxu0
    %3054 = vdwg.mxu0
    %3055 = vmatpush.bf16.msra.mxu0 %v1003
    %3056 = vmatpush.bf16.msra.mxu0 %v999
    %3057 = vmatpush.bf16.msra.mxu0 %v995
    %3058 = vmatpush.bf16.msra.mxu0 %v991
    %3059 = vmatpush.bf16.msra.mxu0 %v987
    %3060 = vmatpush.bf16.msra.mxu0 %v983
    %3061 = vmatpush.bf16.msra.mxu0 %v979
    %3062 = vmatpush.bf16.msra.mxu0 %v975
    %3063 = vmatmul.bf16.gmra.mxu0 %v2898
    %v3064 = vpop.f32.mrf.mxu0
    %v3065 = vadd.f32 0.0, %v3064
    %v3066 = vpop.f32.mrf.mxu0
    %3067 = vdwg.mxu0
    %3068 = vmatpush.bf16.msra.mxu0 %v1004
    %3069 = vmatpush.bf16.msra.mxu0 %v1000
    %3070 = vmatpush.bf16.msra.mxu0 %v996
    %3071 = vmatpush.bf16.msra.mxu0 %v992
    %3072 = vmatpush.bf16.msra.mxu0 %v988
    %3073 = vmatpush.bf16.msra.mxu0 %v984
    %3074 = vmatpush.bf16.msra.mxu0 %v980
    %3075 = vmatpush.bf16.msra.mxu0 %v976
    %3076 = vmatmul.bf16.gmra.mxu0 %v2898
    %v3077 = vpop.f32.mrf.mxu0
    %v3078 = vadd.f32 0.0, %v3077
    %v3079 = vpop.f32.mrf.mxu0
    %3080 = vdwg.mxu0
    %3081 = vmatpush.bf16.msra.mxu0 %v1213
    %3082 = vmatpush.bf16.msra.mxu0 %v1209
    %3083 = vmatpush.bf16.msra.mxu0 %v1205
    %3084 = vmatpush.bf16.msra.mxu0 %v1201
    %3085 = vmatpush.bf16.msra.mxu0 %v1197
    %3086 = vmatpush.bf16.msra.mxu0 %v1193
    %3087 = vmatpush.bf16.msra.mxu0 %v1189
    %3088 = vmatpush.bf16.msra.mxu0 %v1185
    %3089 = vmatmul.bf16.gmra.mxu0 %v3028
    %v3090 = vpop.f32.mrf.mxu0
    %v3091 = vadd.f32 %v3039, %v3090
    %v3092 = vpop.f32.mrf.mxu0
    %3093 = vdwg.mxu0
    %3094 = vmatpush.bf16.msra.mxu0 %v1214
    %3095 = vmatpush.bf16.msra.mxu0 %v1210
    %3096 = vmatpush.bf16.msra.mxu0 %v1206
    %3097 = vmatpush.bf16.msra.mxu0 %v1202
    %3098 = vmatpush.bf16.msra.mxu0 %v1198
    %3099 = vmatpush.bf16.msra.mxu0 %v1194
    %3100 = vmatpush.bf16.msra.mxu0 %v1190
    %3101 = vmatpush.bf16.msra.mxu0 %v1186
    %3102 = vmatmul.bf16.gmra.mxu0 %v3028
    %v3103 = vpop.f32.mrf.mxu0
    %v3104 = vadd.f32 %v3052, %v3103
    %v3105 = vpop.f32.mrf.mxu0
    %3106 = vdwg.mxu0
    %3107 = vmatpush.bf16.msra.mxu0 %v1215
    %3108 = vmatpush.bf16.msra.mxu0 %v1211
    %3109 = vmatpush.bf16.msra.mxu0 %v1207
    %3110 = vmatpush.bf16.msra.mxu0 %v1203
    %3111 = vmatpush.bf16.msra.mxu0 %v1199
    %3112 = vmatpush.bf16.msra.mxu0 %v1195
    %3113 = vmatpush.bf16.msra.mxu0 %v1191
    %3114 = vmatpush.bf16.msra.mxu0 %v1187
    %3115 = vmatmul.bf16.gmra.mxu0 %v3028
    %v3116 = vpop.f32.mrf.mxu0
    %v3117 = vadd.f32 %v3065, %v3116
    %v3118 = vpop.f32.mrf.mxu0
    %3119 = vdwg.mxu0
    %3120 = vmatpush.bf16.msra.mxu0 %v1216
    %3121 = vmatpush.bf16.msra.mxu0 %v1212
    %3122 = vmatpush.bf16.msra.mxu0 %v1208
    %3123 = vmatpush.bf16.msra.mxu0 %v1204
    %3124 = vmatpush.bf16.msra.mxu0 %v1200
    %3125 = vmatpush.bf16.msra.mxu0 %v1196
    %3126 = vmatpush.bf16.msra.mxu0 %v1192
    %3127 = vmatpush.bf16.msra.mxu0 %v1188
    %3128 = vmatmul.bf16.gmra.mxu0 %v3028
    %v3129 = vpop.f32.mrf.mxu0
    %v3130 = vadd.f32 %v3078, %v3129
    %v3131 = vpop.f32.mrf.mxu0
    %3132 = vdwg.mxu0
    %v3133 = vadd.f32 %v3091, %v1302
    %v3134 = vadd.f32 %v3104, %v1303
    %v3135 = vadd.f32 %v3117, %v1304
    %v3136 = vadd.f32 %v3130, %v1305
    %v3137 = vxor.u32 %v3133, 2147483648
    %v3138 = vmul.f32 %v3137, 1.442695
    %v3139 = vpow.pop %v3138
    %v3140 = vadd.f32 %v3139, 1.0
    %v3141 = vrcp.pop %v3140
    %v3142 = vmul.f32 %v3140, %v3141
    %v3143 = vsub.f32 1.0, %v3142
    %v3144 = vmul.f32 %v3141, %v3143
    %v3145 = vadd.f32 %v3141, %v3144
    %vm3146 = vweird.f32 %v3140
    %vm3147 = vweird.f32 %v3141
    %vm3148 = vmor %vm3146, %vm3147
    %v3149 = vsel %vm3148, %v3141, %v3145
    %v3150 = vand.u32 2147483647, %v3140
    %vm3151 = vcmp.eq.f32.partialorder %v3150, 8.507059e+37
    %v3152 = vand.u32 %v3140, 2147483648
    %v3153 = vor.u32 1.1754944e-38, %v3152
    %v3154 = vsel %vm3151, %v3153, %v3149
    %v3155 = vmul.f32 1.0, %v3154
    %v3156 = vxor.u32 %v3134, 2147483648
    %v3157 = vmul.f32 %v3156, 1.442695
    %v3158 = vpow.pop %v3157
    %v3159 = vadd.f32 %v3158, 1.0
    %v3160 = vrcp.pop %v3159
    %v3161 = vmul.f32 %v3159, %v3160
    %v3162 = vsub.f32 1.0, %v3161
    %v3163 = vmul.f32 %v3160, %v3162
    %v3164 = vadd.f32 %v3160, %v3163
    %vm3165 = vweird.f32 %v3159
    %vm3166 = vweird.f32 %v3160
    %vm3167 = vmor %vm3165, %vm3166
    %v3168 = vsel %vm3167, %v3160, %v3164
    %v3169 = vand.u32 2147483647, %v3159
    %vm3170 = vcmp.eq.f32.partialorder %v3169, 8.507059e+37
    %v3171 = vand.u32 %v3159, 2147483648
    %v3172 = vor.u32 1.1754944e-38, %v3171
    %v3173 = vsel %vm3170, %v3172, %v3168
    %v3174 = vmul.f32 1.0, %v3173
    %v3175 = vtanh.pop %v3135
    %v3176 = vxor.u32 %v3136, 2147483648
    %v3177 = vmul.f32 %v3176, 1.442695
    %v3178 = vpow.pop %v3177
    %v3179 = vadd.f32 %v3178, 1.0
    %v3180 = vrcp.pop %v3179
    %v3181 = vmul.f32 %v3179, %v3180
    %v3182 = vsub.f32 1.0, %v3181
    %v3183 = vmul.f32 %v3180, %v3182
    %v3184 = vadd.f32 %v3180, %v3183
    %vm3185 = vweird.f32 %v3179
    %vm3186 = vweird.f32 %v3180
    %vm3187 = vmor %vm3185, %vm3186
    %v3188 = vsel %vm3187, %v3180, %v3184
    %v3189 = vand.u32 2147483647, %v3179
    %vm3190 = vcmp.eq.f32.partialorder %v3189, 8.507059e+37
    %v3191 = vand.u32 %v3179, 2147483648
    %v3192 = vor.u32 1.1754944e-38, %v3191
    %v3193 = vsel %vm3190, %v3192, %v3188
    %v3194 = vmul.f32 1.0, %v3193
    %v3195 = vmul.f32 %v3174, %v2896
    %v3196 = vmul.f32 %v3155, %v3175
    %v3197 = vadd.f32 %v3195, %v3196
    %v3198 = vtanh.pop %v3197
    %v3199 = vmul.f32 %v3194, %v3198
    %v3200 = vsel %vm3025, %v3197, %v2896
    %v3201 = vsel %vm3025, %v3199, %v2897
    %v3202 = vpack.c.bf16 %v3201, %v3201
    %s3203 = scalar_lea.vmem [#allocation11], 24
    %3204 = vst [vmem:[%s3203] sm:$0xf] %v3202
    %vm3205 = vcmp.gt.s32.totalorder %v239, 7
    %3206 = vmatpush.bf16.msra.mxu0 %v714
    %3207 = vmatpush.bf16.msra.mxu0 %v710
    %3208 = vmatpush.bf16.msra.mxu0 %v706
    %3209 = vmatpush.bf16.msra.mxu0 %v702
    %3210 = vmatpush.bf16.msra.mxu0 %v698
    %3211 = vmatpush.bf16.msra.mxu0 %v694
    %3212 = vmatpush.bf16.msra.mxu0 %v690
    %3213 = vmatpush.bf16.msra.mxu0 %v686
    %3214 = vmatmul.bf16.gmra.mxu0 %v3028
    %v3215 = vpop.f32.mrf.mxu0
    %v3216 = vadd.f32 0.0, %v3215
    %v3217 = vpop.f32.mrf.mxu0
    %3218 = vdwg.mxu0
    %3219 = vmatpush.bf16.msra.mxu0 %v715
    %3220 = vmatpush.bf16.msra.mxu0 %v711
    %3221 = vmatpush.bf16.msra.mxu0 %v707
    %3222 = vmatpush.bf16.msra.mxu0 %v703
    %3223 = vmatpush.bf16.msra.mxu0 %v699
    %3224 = vmatpush.bf16.msra.mxu0 %v695
    %3225 = vmatpush.bf16.msra.mxu0 %v691
    %3226 = vmatpush.bf16.msra.mxu0 %v687
    %3227 = vmatmul.bf16.gmra.mxu0 %v3028
    %v3228 = vpop.f32.mrf.mxu0
    %v3229 = vadd.f32 0.0, %v3228
    %v3230 = vpop.f32.mrf.mxu0
    %3231 = vdwg.mxu0
    %3232 = vmatpush.bf16.msra.mxu0 %v716
    %3233 = vmatpush.bf16.msra.mxu0 %v712
    %3234 = vmatpush.bf16.msra.mxu0 %v708
    %3235 = vmatpush.bf16.msra.mxu0 %v704
    %3236 = vmatpush.bf16.msra.mxu0 %v700
    %3237 = vmatpush.bf16.msra.mxu0 %v696
    %3238 = vmatpush.bf16.msra.mxu0 %v692
    %3239 = vmatpush.bf16.msra.mxu0 %v688
    %3240 = vmatmul.bf16.gmra.mxu0 %v3028
    %v3241 = vpop.f32.mrf.mxu0
    %v3242 = vadd.f32 0.0, %v3241
    %v3243 = vpop.f32.mrf.mxu0
    %3244 = vdwg.mxu0
    %3245 = vmatpush.bf16.msra.mxu0 %v717
    %3246 = vmatpush.bf16.msra.mxu0 %v713
    %3247 = vmatpush.bf16.msra.mxu0 %v709
    %3248 = vmatpush.bf16.msra.mxu0 %v705
    %3249 = vmatpush.bf16.msra.mxu0 %v701
    %3250 = vmatpush.bf16.msra.mxu0 %v697
    %3251 = vmatpush.bf16.msra.mxu0 %v693
    %3252 = vmatpush.bf16.msra.mxu0 %v689
    %3253 = vmatmul.bf16.gmra.mxu0 %v3028
    %v3254 = vpop.f32.mrf.mxu0
    %v3255 = vadd.f32 0.0, %v3254
    %v3256 = vpop.f32.mrf.mxu0
    %3257 = vdwg.mxu0
    %v3258 = vadd.f32 %v585, %v3216
    %v3259 = vadd.f32 %v586, %v3229
    %v3260 = vadd.f32 %v587, %v3242
    %v3261 = vadd.f32 %v588, %v3255
    %v3262 = vxor.u32 %v3258, 2147483648
    %v3263 = vmul.f32 %v3262, 1.442695
    %v3264 = vpow.pop %v3263
    %v3265 = vadd.f32 %v3264, 1.0
    %v3266 = vrcp.pop %v3265
    %v3267 = vmul.f32 %v3265, %v3266
    %v3268 = vsub.f32 1.0, %v3267
    %v3269 = vmul.f32 %v3266, %v3268
    %v3270 = vadd.f32 %v3266, %v3269
    %vm3271 = vweird.f32 %v3265
    %vm3272 = vweird.f32 %v3266
    %vm3273 = vmor %vm3271, %vm3272
    %v3274 = vsel %vm3273, %v3266, %v3270
    %v3275 = vand.u32 2147483647, %v3265
    %vm3276 = vcmp.eq.f32.partialorder %v3275, 8.507059e+37
    %v3277 = vand.u32 %v3265, 2147483648
    %v3278 = vor.u32 1.1754944e-38, %v3277
    %v3279 = vsel %vm3276, %v3278, %v3274
    %v3280 = vmul.f32 1.0, %v3279
    %v3281 = vxor.u32 %v3259, 2147483648
    %v3282 = vmul.f32 %v3281, 1.442695
    %v3283 = vpow.pop %v3282
    %v3284 = vadd.f32 %v3283, 1.0
    %v3285 = vrcp.pop %v3284
    %v3286 = vmul.f32 %v3284, %v3285
    %v3287 = vsub.f32 1.0, %v3286
    %v3288 = vmul.f32 %v3285, %v3287
    %v3289 = vadd.f32 %v3285, %v3288
    %vm3290 = vweird.f32 %v3284
    %vm3291 = vweird.f32 %v3285
    %vm3292 = vmor %vm3290, %vm3291
    %v3293 = vsel %vm3292, %v3285, %v3289
    %v3294 = vand.u32 2147483647, %v3284
    %vm3295 = vcmp.eq.f32.partialorder %v3294, 8.507059e+37
    %v3296 = vand.u32 %v3284, 2147483648
    %v3297 = vor.u32 1.1754944e-38, %v3296
    %v3298 = vsel %vm3295, %v3297, %v3293
    %v3299 = vmul.f32 1.0, %v3298
    %v3300 = vtanh.pop %v3260
    %v3301 = vxor.u32 %v3261, 2147483648
    %v3302 = vmul.f32 %v3301, 1.442695
    %v3303 = vpow.pop %v3302
    %v3304 = vadd.f32 %v3303, 1.0
    %v3305 = vrcp.pop %v3304
    %v3306 = vmul.f32 %v3304, %v3305
    %v3307 = vsub.f32 1.0, %v3306
    %v3308 = vmul.f32 %v3305, %v3307
    %v3309 = vadd.f32 %v3305, %v3308
    %vm3310 = vweird.f32 %v3304
    %vm3311 = vweird.f32 %v3305
    %vm3312 = vmor %vm3310, %vm3311
    %v3313 = vsel %vm3312, %v3305, %v3309
    %v3314 = vand.u32 2147483647, %v3304
    %vm3315 = vcmp.eq.f32.partialorder %v3314, 8.507059e+37
    %v3316 = vand.u32 %v3304, 2147483648
    %v3317 = vor.u32 1.1754944e-38, %v3316
    %v3318 = vsel %vm3315, %v3317, %v3313
    %v3319 = vmul.f32 1.0, %v3318
    %v3320 = vmul.f32 %v3299, %v3026
    %v3321 = vmul.f32 %v3280, %v3300
    %v3322 = vadd.f32 %v3320, %v3321
    %v3323 = vtanh.pop %v3322
    %v3324 = vmul.f32 %v3319, %v3323
    %v3325 = vsel %vm3205, 1, 0
    %3326 = vset.pattern.permute.xlu0 0
    %3327 = vperm.xlu0 %3326, %v3325
    %v3328 = vpop.permute.xlu0 %3327
    %vm3329 = vcmp.eq.s32.totalorder %v3328, 1
    %v3330 = vsel %vm3329, %v3324, %v3027
    %v3331 = vpack.c.bf16 %v3330, %v3330
    %3332 = vmatpush.bf16.msra.mxu0 %v1001
    %3333 = vmatpush.bf16.msra.mxu0 %v997
    %3334 = vmatpush.bf16.msra.mxu0 %v993
    %3335 = vmatpush.bf16.msra.mxu0 %v989
    %3336 = vmatpush.bf16.msra.mxu0 %v985
    %3337 = vmatpush.bf16.msra.mxu0 %v981
    %3338 = vmatpush.bf16.msra.mxu0 %v977
    %3339 = vmatpush.bf16.msra.mxu0 %v973
    %3340 = vmatmul.bf16.gmra.mxu0 %v3202
    %v3341 = vpop.f32.mrf.mxu0
    %v3342 = vadd.f32 0.0, %v3341
    %v3343 = vpop.f32.mrf.mxu0
    %3344 = vdwg.mxu0
    %3345 = vmatpush.bf16.msra.mxu0 %v1002
    %3346 = vmatpush.bf16.msra.mxu0 %v998
    %3347 = vmatpush.bf16.msra.mxu0 %v994
    %3348 = vmatpush.bf16.msra.mxu0 %v990
    %3349 = vmatpush.bf16.msra.mxu0 %v986
    %3350 = vmatpush.bf16.msra.mxu0 %v982
    %3351 = vmatpush.bf16.msra.mxu0 %v978
    %3352 = vmatpush.bf16.msra.mxu0 %v974
    %3353 = vmatmul.bf16.gmra.mxu0 %v3202
    %v3354 = vpop.f32.mrf.mxu0
    %v3355 = vadd.f32 0.0, %v3354
    %v3356 = vpop.f32.mrf.mxu0
    %3357 = vdwg.mxu0
    %3358 = vmatpush.bf16.msra.mxu0 %v1003
    %3359 = vmatpush.bf16.msra.mxu0 %v999
    %3360 = vmatpush.bf16.msra.mxu0 %v995
    %3361 = vmatpush.bf16.msra.mxu0 %v991
    %3362 = vmatpush.bf16.msra.mxu0 %v987
    %3363 = vmatpush.bf16.msra.mxu0 %v983
    %3364 = vmatpush.bf16.msra.mxu0 %v979
    %3365 = vmatpush.bf16.msra.mxu0 %v975
    %3366 = vmatmul.bf16.gmra.mxu0 %v3202
    %v3367 = vpop.f32.mrf.mxu0
    %v3368 = vadd.f32 0.0, %v3367
    %v3369 = vpop.f32.mrf.mxu0
    %3370 = vdwg.mxu0
    %3371 = vmatpush.bf16.msra.mxu0 %v1004
    %3372 = vmatpush.bf16.msra.mxu0 %v1000
    %3373 = vmatpush.bf16.msra.mxu0 %v996
    %3374 = vmatpush.bf16.msra.mxu0 %v992
    %3375 = vmatpush.bf16.msra.mxu0 %v988
    %3376 = vmatpush.bf16.msra.mxu0 %v984
    %3377 = vmatpush.bf16.msra.mxu0 %v980
    %3378 = vmatpush.bf16.msra.mxu0 %v976
    %3379 = vmatmul.bf16.gmra.mxu0 %v3202
    %v3380 = vpop.f32.mrf.mxu0
    %v3381 = vadd.f32 0.0, %v3380
    %v3382 = vpop.f32.mrf.mxu0
    %3383 = vdwg.mxu0
    %3384 = vmatpush.bf16.msra.mxu0 %v1213
    %3385 = vmatpush.bf16.msra.mxu0 %v1209
    %3386 = vmatpush.bf16.msra.mxu0 %v1205
    %3387 = vmatpush.bf16.msra.mxu0 %v1201
    %3388 = vmatpush.bf16.msra.mxu0 %v1197
    %3389 = vmatpush.bf16.msra.mxu0 %v1193
    %3390 = vmatpush.bf16.msra.mxu0 %v1189
    %3391 = vmatpush.bf16.msra.mxu0 %v1185
    %3392 = vmatmul.bf16.gmra.mxu0 %v3331
    %v3393 = vpop.f32.mrf.mxu0
    %v3394 = vadd.f32 %v3342, %v3393
    %v3395 = vpop.f32.mrf.mxu0
    %3396 = vdwg.mxu0
    %3397 = vmatpush.bf16.msra.mxu0 %v1214
    %3398 = vmatpush.bf16.msra.mxu0 %v1210
    %3399 = vmatpush.bf16.msra.mxu0 %v1206
    %3400 = vmatpush.bf16.msra.mxu0 %v1202
    %3401 = vmatpush.bf16.msra.mxu0 %v1198
    %3402 = vmatpush.bf16.msra.mxu0 %v1194
    %3403 = vmatpush.bf16.msra.mxu0 %v1190
    %3404 = vmatpush.bf16.msra.mxu0 %v1186
    %3405 = vmatmul.bf16.gmra.mxu0 %v3331
    %v3406 = vpop.f32.mrf.mxu0
    %v3407 = vadd.f32 %v3355, %v3406
    %v3408 = vpop.f32.mrf.mxu0
    %3409 = vdwg.mxu0
    %3410 = vmatpush.bf16.msra.mxu0 %v1215
    %3411 = vmatpush.bf16.msra.mxu0 %v1211
    %3412 = vmatpush.bf16.msra.mxu0 %v1207
    %3413 = vmatpush.bf16.msra.mxu0 %v1203
    %3414 = vmatpush.bf16.msra.mxu0 %v1199
    %3415 = vmatpush.bf16.msra.mxu0 %v1195
    %3416 = vmatpush.bf16.msra.mxu0 %v1191
    %3417 = vmatpush.bf16.msra.mxu0 %v1187
    %3418 = vmatmul.bf16.gmra.mxu0 %v3331
    %v3419 = vpop.f32.mrf.mxu0
    %v3420 = vadd.f32 %v3368, %v3419
    %v3421 = vpop.f32.mrf.mxu0
    %3422 = vdwg.mxu0
    %3423 = vmatpush.bf16.msra.mxu0 %v1216
    %3424 = vmatpush.bf16.msra.mxu0 %v1212
    %3425 = vmatpush.bf16.msra.mxu0 %v1208
    %3426 = vmatpush.bf16.msra.mxu0 %v1204
    %3427 = vmatpush.bf16.msra.mxu0 %v1200
    %3428 = vmatpush.bf16.msra.mxu0 %v1196
    %3429 = vmatpush.bf16.msra.mxu0 %v1192
    %3430 = vmatpush.bf16.msra.mxu0 %v1188
    %3431 = vmatmul.bf16.gmra.mxu0 %v3331
    %v3432 = vpop.f32.mrf.mxu0
    %v3433 = vadd.f32 %v3381, %v3432
    %v3434 = vpop.f32.mrf.mxu0
    %3435 = vdwg.mxu0
    %v3436 = vadd.f32 %v3394, %v1302
    %v3437 = vadd.f32 %v3407, %v1303
    %v3438 = vadd.f32 %v3420, %v1304
    %v3439 = vadd.f32 %v3433, %v1305
    %v3440 = vxor.u32 %v3436, 2147483648
    %v3441 = vmul.f32 %v3440, 1.442695
    %v3442 = vpow.pop %v3441
    %v3443 = vadd.f32 %v3442, 1.0
    %v3444 = vrcp.pop %v3443
    %v3445 = vmul.f32 %v3443, %v3444
    %v3446 = vsub.f32 1.0, %v3445
    %v3447 = vmul.f32 %v3444, %v3446
    %v3448 = vadd.f32 %v3444, %v3447
    %vm3449 = vweird.f32 %v3443
    %vm3450 = vweird.f32 %v3444
    %vm3451 = vmor %vm3449, %vm3450
    %v3452 = vsel %vm3451, %v3444, %v3448
    %v3453 = vand.u32 2147483647, %v3443
    %vm3454 = vcmp.eq.f32.partialorder %v3453, 8.507059e+37
    %v3455 = vand.u32 %v3443, 2147483648
    %v3456 = vor.u32 1.1754944e-38, %v3455
    %v3457 = vsel %vm3454, %v3456, %v3452
    %v3458 = vmul.f32 1.0, %v3457
    %v3459 = vxor.u32 %v3437, 2147483648
    %v3460 = vmul.f32 %v3459, 1.442695
    %v3461 = vpow.pop %v3460
    %v3462 = vadd.f32 %v3461, 1.0
    %v3463 = vrcp.pop %v3462
    %v3464 = vmul.f32 %v3462, %v3463
    %v3465 = vsub.f32 1.0, %v3464
    %v3466 = vmul.f32 %v3463, %v3465
    %v3467 = vadd.f32 %v3463, %v3466
    %vm3468 = vweird.f32 %v3462
    %vm3469 = vweird.f32 %v3463
    %vm3470 = vmor %vm3468, %vm3469
    %v3471 = vsel %vm3470, %v3463, %v3467
    %v3472 = vand.u32 2147483647, %v3462
    %vm3473 = vcmp.eq.f32.partialorder %v3472, 8.507059e+37
    %v3474 = vand.u32 %v3462, 2147483648
    %v3475 = vor.u32 1.1754944e-38, %v3474
    %v3476 = vsel %vm3473, %v3475, %v3471
    %v3477 = vmul.f32 1.0, %v3476
    %v3478 = vtanh.pop %v3438
    %v3479 = vxor.u32 %v3439, 2147483648
    %v3480 = vmul.f32 %v3479, 1.442695
    %v3481 = vpow.pop %v3480
    %v3482 = vadd.f32 %v3481, 1.0
    %v3483 = vrcp.pop %v3482
    %v3484 = vmul.f32 %v3482, %v3483
    %v3485 = vsub.f32 1.0, %v3484
    %v3486 = vmul.f32 %v3483, %v3485
    %v3487 = vadd.f32 %v3483, %v3486
    %vm3488 = vweird.f32 %v3482
    %vm3489 = vweird.f32 %v3483
    %vm3490 = vmor %vm3488, %vm3489
    %v3491 = vsel %vm3490, %v3483, %v3487
    %v3492 = vand.u32 2147483647, %v3482
    %vm3493 = vcmp.eq.f32.partialorder %v3492, 8.507059e+37
    %v3494 = vand.u32 %v3482, 2147483648
    %v3495 = vor.u32 1.1754944e-38, %v3494
    %v3496 = vsel %vm3493, %v3495, %v3491
    %v3497 = vmul.f32 1.0, %v3496
    %v3498 = vmul.f32 %v3477, %v3200
    %v3499 = vmul.f32 %v3458, %v3478
    %v3500 = vadd.f32 %v3498, %v3499
    %v3501 = vtanh.pop %v3500
    %v3502 = vmul.f32 %v3497, %v3501
    %v3503 = vsel %vm3329, %v3502, %v3201
    %v3504 = vpack.c.bf16 %v3503, %v3503
    %s3505 = scalar_lea.vmem [#allocation11], 28
    %3506 = vst [vmem:[%s3505] sm:$0xf] %v3504
    // Predicated region
    $region54: #{tpu_custom_call.1} parent=1 // pred_check
      _
    $region55: #{tpu_custom_call.1} parent=1 // pred_check_branch
      %3508 = sbr.rel (0) target = $region57
    $region56: #{tpu_custom_call.1} parent=1 // pred_region
      %3510 = vsyncadd [#allocation4], 0
      %s3511 = sshll.u32 [#allocation11], 4
      %s3512 = int_to_ptr.vmem [resolvable:$true] %s3511
      %s3513 = sshll.u32 %s8, 4
      %s3514 = int_to_ptr.hbm [resolvable:$true] %s3513
      %3519 = dma.vmem_to_hbm [thread:$0]  %s3512, 512, %s3514, [#allocation4], 64, 64, 4
    $region57: #{tpu_custom_call.1} parent=1 // pred_fallthru
      _
    // Predicated region
    $region58: #{tpu_custom_call.1} parent=1 // pred_check
      _
    $region59: #{tpu_custom_call.1} parent=1 // pred_check_branch
      %3521 = sbr.rel (0) target = $region61
    $region60: #{tpu_custom_call.1} parent=1 // pred_region
      %3523 = dma.done [#allocation4], 512
    $region61: #{tpu_custom_call.1} parent=1 // pred_fallthru
      _
    %3524 = vsyncpa [#allocation3], 1
    %3525 = vsyncpa [#allocation6], 1
    %3526 = vsyncpa [#allocation9], 1
    %3527 = vsyncpa [#allocation4], 1

</llo_original>
